<compile_context>
chip_gen: v6e
topology: v6e:2x2x1
jax: 0.10.0
libtpu: 0.0.40
codegen_flags: <defaults>
</compile_context>

<pallas_src>
import functools

import jax
import jax.numpy as jnp
import numpy as np
from jax.experimental import pallas as pl
from jax.experimental.pallas import tpu as pltpu

EPS = 1e-5
LANE = 128          # lane-pad width for the final output slab
C1, C2 = 12, 4      # out_channels / out_linear of the conv feature path
F32 = jnp.float32
BF16 = jnp.bfloat16


# ---------------------------------------------------------------------------
# In-kernel helpers (pure jnp; lower to VPU/EUP/XLU/MXU ops)
# ---------------------------------------------------------------------------
def _sigmoid(x):
    # tanh-form sigmoid: identical math, runs on the EUP, no VPU divide.
    return 0.5 * (jnp.tanh(0.5 * x) + 1.0)


def _elu(x):
    # min() keeps exp() finite on the (unselected) positive branch.
    return jnp.where(x > 0, x, jnp.exp(jnp.minimum(x, 0.0)) - 1.0)


def _bn_elu_masked(y, mask, gamma, beta, inv_n):
    # Per-column BatchNorm over the REAL rows only (mask excludes batch pads).
    m = jnp.sum(mask * y, axis=0, keepdims=True) * inv_n
    d = y - m
    v = jnp.sum(mask * (d * d), axis=0, keepdims=True) * inv_n
    return _elu(gamma * d * jax.lax.rsqrt(v + EPS) + beta)


def _bn_elu_grouped(y, mask, fold_n, unfold, gamma_cols, beta_cols):
    # BatchNorm where each physical channel occupies every C-th column:
    #   y          : (rows, H*C)   columns ordered (height, channel)
    #   mask       : (rows, 1)     1.0 for real rows, 0.0 for batch padding
    #   fold_n     : (H*C, C)      sums a channel's columns together, / n
    #   unfold     : (C, H*C)      broadcasts per-channel stats back to columns
    #   gamma/beta : (1, H*C)      channel affine pre-tiled to columns
    mean_c = jnp.dot(jnp.sum(mask * y, axis=0, keepdims=True), fold_n,
                     preferred_element_type=F32)
    d = y - jnp.dot(mean_c, unfold, preferred_element_type=F32)
    var_c = jnp.dot(jnp.sum(mask * (d * d), axis=0, keepdims=True), fold_n,
                    preferred_element_type=F32)
    inv_cols = jnp.dot(jax.lax.rsqrt(var_c + EPS), unfold,
                       preferred_element_type=F32)
    return _elu(gamma_cols * d * inv_cols + beta_cols)


# ---------------------------------------------------------------------------
# The single fused kernel: feat paths -> gridConv -> 2-layer LSTM -> Linear+Sig
# ---------------------------------------------------------------------------
def _fused_kernel(
        # inputs -----------------------------------------------------------
        mask_ref, xb_ref, xl_ref,
        wb1_ref, bb1_ref, gb1_ref, beb1_ref, fob1_ref, unb1_ref,
        wb2_ref, bb2_ref, gb2_ref, beb2_ref, fob2_ref, unb2_ref,
        wl1_ref, bl1_ref, gl1_ref, bel1_ref, fol1_ref, unl1_ref,
        wl2_ref, bl2_ref, gl2_ref, bel2_ref, fol2_ref, unl2_ref,
        wgb_ref, wgl_ref, bg_ref, gg_ref, beg_ref,
        wih1_ref, whh1_ref, b1_ref,
        w2_ref, b2_ref,
        wlin_ref, blin_ref,
        # output -----------------------------------------------------------
        out_ref,
        # static config (bound via functools.partial) -----------------------
        *, Bp, T, H1, H2, inv_n_grid):
    mask = mask_ref[...]

    # ---- bus / line per-height feature extractor (block-diag bf16 matmuls) -
    yb = jnp.dot(xb_ref[...], wb1_ref[...], preferred_element_type=F32) + bb1_ref[...]
    yb = _bn_elu_grouped(yb, mask, fob1_ref[...], unb1_ref[...], gb1_ref[...], beb1_ref[...])
    yb = jnp.dot(yb.astype(BF16), wb2_ref[...], preferred_element_type=F32) + bb2_ref[...]
    yb = _bn_elu_grouped(yb, mask, fob2_ref[...], unb2_ref[...], gb2_ref[...], beb2_ref[...])

    yl = jnp.dot(xl_ref[...], wl1_ref[...], preferred_element_type=F32) + bl1_ref[...]
    yl = _bn_elu_grouped(yl, mask, fol1_ref[...], unl1_ref[...], gl1_ref[...], bel1_ref[...])
    yl = jnp.dot(yl.astype(BF16), wl2_ref[...], preferred_element_type=F32) + bl2_ref[...]
    yl = _bn_elu_grouped(yl, mask, fol2_ref[...], unl2_ref[...], gl2_ref[...], bel2_ref[...])

    # ---- gridConv: "concat along height then matmul" via split weights ------
    gpre = (jnp.dot(yb.astype(BF16), wgb_ref[...], preferred_element_type=F32)
            + jnp.dot(yl.astype(BF16), wgl_ref[...], preferred_element_type=F32)
            + bg_ref[...])
    g = _bn_elu_masked(gpre, mask, gg_ref[...], beg_ref[...], inv_n_grid)  # (T*Bp, 2S)

    # ---- 2-layer LSTM head, fully unrolled over time ------------------------
    whh1 = whh1_ref[...]           # (H1, 4H1)  bf16, gate order [i|f|o|n]
    w2 = w2_ref[...]               # (H1+H2, 4H2) bf16, [wih2; whh2] stacked
    b2row = b2_ref[...]

    # Hoist layer-1's input->hidden matmul out of the serial recurrence.
    xw1 = jnp.dot(g.astype(BF16), wih1_ref[...],
                  preferred_element_type=F32) + b1_ref[...]   # (T*Bp, 4H1)

    h1 = jnp.zeros((Bp, H1), F32)
    c1 = jnp.zeros((Bp, H1), F32)
    h2 = jnp.zeros((Bp, H2), F32)
    c2 = jnp.zeros((Bp, H2), F32)

    for t in range(T):  # static unroll; Bp is a multiple of 8 so slices align
        # ----- layer 1: one recurrence dot + 1 sigmoid + 2 tanh --------------
        g1 = xw1[t * Bp:(t + 1) * Bp, :] + jnp.dot(
            h1.astype(BF16), whh1, preferred_element_type=F32)
        s1 = _sigmoid(g1[:, :3 * H1])
        i1, f1, o1 = s1[:, :H1], s1[:, H1:2 * H1], s1[:, 2 * H1:]
        n1 = jnp.tanh(g1[:, 3 * H1:])
        c1 = f1 * c1 + i1 * n1
        h1 = o1 * jnp.tanh(c1)

        # ----- layer 2: single fused dot on the lane-packed [h1|h2] state ----
        hcat = jnp.concatenate([h1, h2], axis=-1)          # (Bp, H1+H2)
        g2 = jnp.dot(hcat.astype(BF16), w2, preferred_element_type=F32) + b2row
        s2 = _sigmoid(g2[:, :3 * H2])
        i2, f2, o2 = s2[:, :H2], s2[:, H2:2 * H2], s2[:, 2 * H2:]
        n2 = jnp.tanh(g2[:, 3 * H2:])
        c2 = f2 * c2 + i2 * n2
        h2 = o2 * jnp.tanh(c2)

    # ---- last-timestep Linear + Sigmoid, lane-dense (Bp, 128) store ---------
    logit = jnp.dot(h2.astype(BF16), wlin_ref[...],
                    preferred_element_type=F32) + blin_ref[...]
    out_ref[...] = _sigmoid(logit)


# ---------------------------------------------------------------------------
# Wrapper: builds block-diagonal / reordered / bf16 weights, pads the batch,
# derives the VMEM budget and calls the fused kernel once.
# ---------------------------------------------------------------------------
def powerfd_forward(x_bus, x_line, p, seq_size):
    B = x_bus.shape[0]
    Hb, Wb = x_bus.shape[2], x_bus.shape[3]
    Hl, Wl = x_line.shape[2], x_line.shape[3]
    T = int(seq_size)
    Bs = B // T
    twoS = p['wg'].shape[1]
    H1 = twoS
    H2 = p['whh2'].shape[0]

    # Sublane-align the sequence-batch: pad Bs -> Bp (multiple of 8).
    Bp = max(8, ((Bs + 7) // 8) * 8)
    rows = T * Bp

    # Time-major rows with Bp entries per time block (zero-padded), bf16 feed.
    def to_time_major_padded(x, H, W):
        x3 = x.astype(F32).reshape(Bs, T, H * W).transpose(1, 0, 2)   # (T,Bs,F)
        x3 = jnp.pad(x3, ((0, 0), (0, Bp - Bs), (0, 0)))              # (T,Bp,F)
        return x3.reshape(rows, H * W).astype(BF16)

    xb2 = to_time_major_padded(x_bus, Hb, Wb)
    xl2 = to_time_major_padded(x_line, Hl, Wl)

    # Row mask: 1.0 for real rows, 0.0 for the batch padding (keeps BN exact).
    mask = jnp.tile((jnp.arange(Bp) < Bs).astype(F32), (T,)).reshape(rows, 1)

    def blockify(w1, b1, g1, be1, w2, b2, g2, be2, H, n):
        # Per-height (1,K) convs as one block-diagonal matmul; channel affine
        # params tiled to column layout; 1/n folded into the fold matrices.
        eye = jnp.eye(H, dtype=F32)
        fold1 = jnp.tile(jnp.eye(C1, dtype=F32), (H, 1))
        fold2 = jnp.tile(jnp.eye(C2, dtype=F32), (H, 1))
        return (jnp.kron(eye, w1).astype(BF16), jnp.tile(b1, (1, H)),
                jnp.tile(g1, (1, H)), jnp.tile(be1, (1, H)),
                fold1 / n, fold1.T,
                jnp.kron(eye, w2).astype(BF16), jnp.tile(b2, (1, H)),
                jnp.tile(g2, (1, H)), jnp.tile(be2, (1, H)),
                fold2 / n, fold2.T)

    bus_args = blockify(p['wb1'], p['bb1'], p['gb1'], p['beb1'],
                        p['wb2'], p['bb2'], p['gb2'], p['beb2'],
                        Hb, float(B * Hb))
    line_args = blockify(p['wl1'], p['bl1'], p['gl1'], p['bel1'],
                         p['wl2'], p['bl2'], p['gl2'], p['bel2'],
                         Hl, float(B * Hl))

    # Split the gridConv weight so "concat then matmul" becomes two matmuls.
    wg_bus = p['wg'][:Hb * C2, :].astype(BF16)
    wg_line = p['wg'][Hb * C2:, :].astype(BF16)

    # Gate reorder [i|f|n|o] -> [i|f|o|n] (applied consistently to w_ih, w_hh, b).
    def reorder(w, H):
        return jnp.concatenate([w[:, :2 * H], w[:, 3 * H:], w[:, 2 * H:3 * H]],
                               axis=1)

    wih1 = reorder(p['wih1'], H1).astype(BF16)
    whh1 = reorder(p['whh1'], H1).astype(BF16)
    b1 = reorder(p['b1'], H1)
    # Layer 2: stack [wih2; whh2] so the kernel does one MXU push per step.
    w2cat = jnp.concatenate([reorder(p['wih2'], H2),
                             reorder(p['whh2'], H2)], axis=0).astype(BF16)
    b2 = reorder(p['b2'], H2)

    # Lane-pad the output Linear so the final store is a dense 128-wide slab.
    wlin_pad = jnp.pad(p['wlin'],
                       ((0, 0), (0, LANE - p['wlin'].shape[1]))).astype(BF16)
    blin_pad = jnp.pad(p['blin'], ((0, 0), (0, LANE - p['blin'].shape[1])))

    args = (mask, xb2, xl2,
            *bus_args, *line_args,
            wg_bus, wg_line, p['bg'], p['gg'], p['beg'],
            wih1, whh1, b1,
            w2cat, b2,
            wlin_pad, blin_pad)

    # Deliberate VMEM budget: inputs + output + live f32 intermediates,
    # with headroom for tile padding / compiler temps; clamped to [16, 64] MiB.
    io_bytes = sum(int(a.size) * a.dtype.itemsize for a in args) + Bp * LANE * 4
    inter_bytes = 4 * rows * (Hb * C1 + Hb * C2 + Hl * C1 + Hl * C2
                              + 2 * twoS + 4 * H1)
    vmem_limit = int(max(16 << 20,
                         min(4 * (io_bytes + inter_bytes) + (2 << 20), 64 << 20)))

    kernel = functools.partial(_fused_kernel, Bp=Bp, T=T, H1=H1, H2=H2,
                               inv_n_grid=1.0 / float(B))

    out_pad = pl.pallas_call(
        kernel,
        out_shape=jax.ShapeDtypeStruct((Bp, LANE), jnp.float32),
        in_specs=[pl.BlockSpec(memory_space=pltpu.MemorySpace.VMEM)
                  for _ in args],
        out_specs=pl.BlockSpec(memory_space=pltpu.MemorySpace.VMEM),
        compiler_params=pltpu.CompilerParams(vmem_limit_bytes=vmem_limit),
    )(*args)

    return out_pad[:Bs, :1]


# ---------------------------------------------------------------------------
# Deterministic parameter init (mirrors shapes of the PyTorch module;
# conv weights ~ N(0, 0.02), BN gamma ~ N(1, 0.02), BN beta = 0).
# Gate order as stored here is [i, f, n, o] (candidate n at slot 2).
# ---------------------------------------------------------------------------
def init_params(key, bus_col, line_col, s_tot, out_ch=12, out_lin=4):
    ks = jax.random.split(key, 24)
    twoS, fourS = 2 * s_tot, 4 * s_tot

    def n(k, shape, std, mean=0.0):
        return mean + std * jax.random.normal(k, shape, jnp.float32)

    return {
        'wb1': n(ks[0], (bus_col, out_ch), 0.02),
        'bb1': n(ks[1], (1, out_ch), 0.05),
        'gb1': n(ks[2], (1, out_ch), 0.02, 1.0),
        'beb1': jnp.zeros((1, out_ch), jnp.float32),
        'wb2': n(ks[3], (out_ch, out_lin), 0.02),
        'bb2': n(ks[4], (1, out_lin), 0.05),
        'gb2': n(ks[5], (1, out_lin), 0.02, 1.0),
        'beb2': jnp.zeros((1, out_lin), jnp.float32),
        'wl1': n(ks[6], (line_col, out_ch), 0.02),
        'bl1': n(ks[7], (1, out_ch), 0.05),
        'gl1': n(ks[8], (1, out_ch), 0.02, 1.0),
        'bel1': jnp.zeros((1, out_ch), jnp.float32),
        'wl2': n(ks[9], (out_ch, out_lin), 0.02),
        'bl2': n(ks[10], (1, out_lin), 0.05),
        'gl2': n(ks[11], (1, out_lin), 0.02, 1.0),
        'bel2': jnp.zeros((1, out_lin), jnp.float32),
        'wg': n(ks[12], (s_tot * out_lin, twoS), 0.02),
        'bg': n(ks[13], (1, twoS), 0.05),
        'gg': n(ks[14], (1, twoS), 0.02, 1.0),
        'beg': jnp.zeros((1, twoS), jnp.float32),
        # LSTM / Linear params stored pre-transposed: (in, 4*hidden)
        'wih1': n(ks[15], (twoS, 4 * twoS), 0.1),
        'whh1': n(ks[16], (twoS, 4 * twoS), 0.1),
        'b1': n(ks[17], (1, 4 * twoS), 0.1),
        'wih2': n(ks[18], (twoS, 4 * fourS), 0.1),
        'whh2': n(ks[19], (fourS, 4 * fourS), 0.1),
        'b2': n(ks[20], (1, 4 * fourS), 0.1),
        'wlin': n(ks[21], (fourS, 1), 0.1),
        'blin': n(ks[22], (1, 1), 0.1),
    }


# ---------------------------------------------------------------------------
# Pure-JAX f32 reference (same math, original row layout / gate order).
# ---------------------------------------------------------------------------
def reference_forward(x_bus, x_line, p, seq_size):
    def bn_elu(y, g, b):
        m = y.mean(0, keepdims=True)
        d = y - m
        v = (d * d).mean(0, keepdims=True)
        yn = g * d / jnp.sqrt(v + EPS) + b
        return jnp.where(yn > 0, yn, jnp.exp(jnp.minimum(yn, 0.0)) - 1.0)

    B, _, Hb, Wb = x_bus.shape
    _, _, Hl, Wl = x_line.shape
    xb = x_bus.reshape(B * Hb, Wb)
    xl = x_line.reshape(B * Hl, Wl)
    yb = bn_elu(xb @ p['wb1'] + p['bb1'], p['gb1'], p['beb1'])
    yb = bn_elu(yb @ p['wb2'] + p['bb2'], p['gb2'], p['beb2'])
    yl = bn_elu(xl @ p['wl1'] + p['bl1'], p['gl1'], p['bel1'])
    yl = bn_elu(yl @ p['wl2'] + p['bl2'], p['gl2'], p['bel2'])
    h = jnp.concatenate([yb.reshape(B, Hb * 4), yl.reshape(B, Hl * 4)], axis=1)
    g = bn_elu(h @ p['wg'] + p['bg'], p['gg'], p['beg'])
    twoS = g.shape[1]
    fourS = 2 * twoS
    seq = g.reshape(B // seq_size, seq_size, twoS)
    Bs = seq.shape[0]
    h1 = jnp.zeros((Bs, twoS)); c1 = jnp.zeros((Bs, twoS))
    h2 = jnp.zeros((Bs, fourS)); c2 = jnp.zeros((Bs, fourS))
    for t in range(seq_size):
        xt = seq[:, t, :]
        g1 = xt @ p['wih1'] + h1 @ p['whh1'] + p['b1']
        i1, f1 = jax.nn.sigmoid(g1[:, :twoS]), jax.nn.sigmoid(g1[:, twoS:2 * twoS])
        n1, o1 = jnp.tanh(g1[:, 2 * twoS:3 * twoS]), jax.nn.sigmoid(g1[:, 3 * twoS:])
        c1 = f1 * c1 + i1 * n1
        h1 = o1 * jnp.tanh(c1)
        g2 = h1 @ p['wih2'] + h2 @ p['whh2'] + p['b2']
        i2, f2 = jax.nn.sigmoid(g2[:, :fourS]), jax.nn.sigmoid(g2[:, fourS:2 * fourS])
        n2, o2 = jnp.tanh(g2[:, 2 * fourS:3 * fourS]), jax.nn.sigmoid(g2[:, 3 * fourS:])
        c2 = f2 * c2 + i2 * n2
        h2 = o2 * jnp.tanh(c2)
    return jax.nn.sigmoid(h2 @ p['wlin'] + p['blin'])


if __name__ == "__main__":
    # Shapes consistent with the module's forward contract:
    #   x_bus: (B, 1, bus_num, bus_col), x_line: (B, 1, line_num, line_col),
    #   with B = batch * seq_size so view(-1, seq, 2S) is valid.
    bus_num, line_num = 8, 8
    bus_col, line_col = 2, 3
    seq_size, batch = 8, 2
    B = batch * seq_size
    s_tot = bus_num + line_num

    key = jax.random.PRNGKey(0)
    kp, kb, kl = jax.random.split(key, 3)
    params = init_params(kp, bus_col, line_col, s_tot)
    x_bus = jax.random.normal(kb, (B, 1, bus_num, bus_col), jnp.float32)
    x_line = jax.random.normal(kl, (B, 1, line_num, line_col), jnp.float32)

    out = powerfd_forward(x_bus, x_line, params, seq_size)
    out = jax.block_until_ready(out)

    ref = reference_forward(x_bus, x_line, params, seq_size)
    # Kernel feeds the MXU bf16 operands (f32 accumulation); compare against
    # the pure-f32 reference with a correspondingly loosened tolerance.
    np.testing.assert_allclose(np.asarray(out), np.asarray(ref),
                               rtol=1e-2, atol=1e-2)
    assert out.shape == (batch, 1)
    print("KERNEL_OK")
</pallas_src>

<mosaic_0001>
module attributes {stable_mosaic.version = 11 : i64} {
  func.func @_fused_kernel(%arg0: memref<64x1xf32, #tpu.memory_space<vmem>>, %arg1: memref<64x16xbf16, #tpu.memory_space<vmem>>, %arg2: memref<64x24xbf16, #tpu.memory_space<vmem>>, %arg3: memref<16x96xbf16, #tpu.memory_space<vmem>>, %arg4: memref<1x96xf32, #tpu.memory_space<vmem>>, %arg5: memref<1x96xf32, #tpu.memory_space<vmem>>, %arg6: memref<1x96xf32, #tpu.memory_space<vmem>>, %arg7: memref<96x12xf32, #tpu.memory_space<vmem>>, %arg8: memref<12x96xf32, #tpu.memory_space<vmem>>, %arg9: memref<96x32xbf16, #tpu.memory_space<vmem>>, %arg10: memref<1x32xf32, #tpu.memory_space<vmem>>, %arg11: memref<1x32xf32, #tpu.memory_space<vmem>>, %arg12: memref<1x32xf32, #tpu.memory_space<vmem>>, %arg13: memref<32x4xf32, #tpu.memory_space<vmem>>, %arg14: memref<4x32xf32, #tpu.memory_space<vmem>>, %arg15: memref<24x96xbf16, #tpu.memory_space<vmem>>, %arg16: memref<1x96xf32, #tpu.memory_space<vmem>>, %arg17: memref<1x96xf32, #tpu.memory_space<vmem>>, %arg18: memref<1x96xf32, #tpu.memory_space<vmem>>, %arg19: memref<96x12xf32, #tpu.memory_space<vmem>>, %arg20: memref<12x96xf32, #tpu.memory_space<vmem>>, %arg21: memref<96x32xbf16, #tpu.memory_space<vmem>>, %arg22: memref<1x32xf32, #tpu.memory_space<vmem>>, %arg23: memref<1x32xf32, #tpu.memory_space<vmem>>, %arg24: memref<1x32xf32, #tpu.memory_space<vmem>>, %arg25: memref<32x4xf32, #tpu.memory_space<vmem>>, %arg26: memref<4x32xf32, #tpu.memory_space<vmem>>, %arg27: memref<32x32xbf16, #tpu.memory_space<vmem>>, %arg28: memref<32x32xbf16, #tpu.memory_space<vmem>>, %arg29: memref<1x32xf32, #tpu.memory_space<vmem>>, %arg30: memref<1x32xf32, #tpu.memory_space<vmem>>, %arg31: memref<1x32xf32, #tpu.memory_space<vmem>>, %arg32: memref<32x128xbf16, #tpu.memory_space<vmem>>, %arg33: memref<32x128xbf16, #tpu.memory_space<vmem>>, %arg34: memref<1x128xf32, #tpu.memory_space<vmem>>, %arg35: memref<96x256xbf16, #tpu.memory_space<vmem>>, %arg36: memref<1x256xf32, #tpu.memory_space<vmem>>, %arg37: memref<64x128xbf16, #tpu.memory_space<vmem>>, %arg38: memref<1x128xf32, #tpu.memory_space<vmem>>, %arg39: memref<8x128xf32, #tpu.memory_space<vmem>>) attributes {dimension_semantics = [], scalar_prefetch = 0 : i64, scratch_operands = 0 : i64, tpu.core_type = #tpu.core_type<tc>} {
    %c0 = arith.constant 0 : index
    %c0_0 = arith.constant 0 : index
    %0 = vector.load %arg0[%c0, %c0_0] : memref<64x1xf32, #tpu.memory_space<vmem>>, vector<64x1xf32>
    %c0_1 = arith.constant 0 : index
    %c0_2 = arith.constant 0 : index
    %1 = vector.load %arg1[%c0_1, %c0_2] : memref<64x16xbf16, #tpu.memory_space<vmem>>, vector<64x16xbf16>
    %c0_3 = arith.constant 0 : index
    %c0_4 = arith.constant 0 : index
    %2 = vector.load %arg3[%c0_3, %c0_4] : memref<16x96xbf16, #tpu.memory_space<vmem>>, vector<16x96xbf16>
    %cst = arith.constant dense<0.000000e+00> : vector<64x96xf32>
    %3 = tpu.matmul %1, %2, %cst {dimension_numbers = #tpu.dot_dimension_numbers<[1], [0], [0], [1], [0, 0, 1, 1], [], []>} : vector<64x16xbf16>, vector<16x96xbf16>, vector<64x96xf32> -> vector<64x96xf32>
    %c0_5 = arith.constant 0 : index
    %c0_6 = arith.constant 0 : index
    %4 = vector.load %arg4[%c0_5, %c0_6] : memref<1x96xf32, #tpu.memory_space<vmem>>, vector<1x96xf32>
    %5 = vector.broadcast %4 : vector<1x96xf32> to vector<64x96xf32>
    %6 = arith.addf %3, %5 : vector<64x96xf32>
    %c0_7 = arith.constant 0 : index
    %c0_8 = arith.constant 0 : index
    %7 = vector.load %arg7[%c0_7, %c0_8] : memref<96x12xf32, #tpu.memory_space<vmem>>, vector<96x12xf32>
    %c0_9 = arith.constant 0 : index
    %c0_10 = arith.constant 0 : index
    %8 = vector.load %arg8[%c0_9, %c0_10] : memref<12x96xf32, #tpu.memory_space<vmem>>, vector<12x96xf32>
    %c0_11 = arith.constant 0 : index
    %c0_12 = arith.constant 0 : index
    %9 = vector.load %arg5[%c0_11, %c0_12] : memref<1x96xf32, #tpu.memory_space<vmem>>, vector<1x96xf32>
    %c0_13 = arith.constant 0 : index
    %c0_14 = arith.constant 0 : index
    %10 = vector.load %arg6[%c0_13, %c0_14] : memref<1x96xf32, #tpu.memory_space<vmem>>, vector<1x96xf32>
    %11 = vector.broadcast %0 : vector<64x1xf32> to vector<64x96xf32>
    %12 = arith.mulf %11, %6 : vector<64x96xf32>
    %cst_15 = arith.constant dense<0.000000e+00> : vector<96xf32>
    %13 = vector.multi_reduction <add>, %12, %cst_15 [0] : vector<64x96xf32> to vector<96xf32>
    %14 = vector.shape_cast %13 : vector<96xf32> to vector<1x96xf32>
    %cst_16 = arith.constant dense<0.000000e+00> : vector<1x12xf32>
    %15 = tpu.matmul %14, %7, %cst_16 {dimension_numbers = #tpu.dot_dimension_numbers<[1], [0], [0], [1], [0, 0, 1, 1], [], []>} : vector<1x96xf32>, vector<96x12xf32>, vector<1x12xf32> -> vector<1x12xf32>
    %cst_17 = arith.constant dense<0.000000e+00> : vector<1x96xf32>
    %16 = tpu.matmul %15, %8, %cst_17 {dimension_numbers = #tpu.dot_dimension_numbers<[1], [0], [0], [1], [0, 0, 1, 1], [], []>} : vector<1x12xf32>, vector<12x96xf32>, vector<1x96xf32> -> vector<1x96xf32>
    %17 = vector.broadcast %16 : vector<1x96xf32> to vector<64x96xf32>
    %18 = arith.subf %6, %17 : vector<64x96xf32>
    %19 = arith.mulf %18, %18 : vector<64x96xf32>
    %20 = vector.broadcast %0 : vector<64x1xf32> to vector<64x96xf32>
    %21 = arith.mulf %20, %19 : vector<64x96xf32>
    %cst_18 = arith.constant dense<0.000000e+00> : vector<96xf32>
    %22 = vector.multi_reduction <add>, %21, %cst_18 [0] : vector<64x96xf32> to vector<96xf32>
    %23 = vector.shape_cast %22 : vector<96xf32> to vector<1x96xf32>
    %cst_19 = arith.constant dense<0.000000e+00> : vector<1x12xf32>
    %24 = tpu.matmul %23, %7, %cst_19 {dimension_numbers = #tpu.dot_dimension_numbers<[1], [0], [0], [1], [0, 0, 1, 1], [], []>} : vector<1x96xf32>, vector<96x12xf32>, vector<1x12xf32> -> vector<1x12xf32>
    %cst_20 = arith.constant 9.99999974E-6 : f32
    %25 = vector.broadcast %cst_20 : f32 to vector<1x12xf32>
    %26 = arith.addf %24, %25 : vector<1x12xf32>
    %27 = math.rsqrt %26 : vector<1x12xf32>
    %cst_21 = arith.constant dense<0.000000e+00> : vector<1x96xf32>
    %28 = tpu.matmul %27, %8, %cst_21 {dimension_numbers = #tpu.dot_dimension_numbers<[1], [0], [0], [1], [0, 0, 1, 1], [], []>} : vector<1x12xf32>, vector<12x96xf32>, vector<1x96xf32> -> vector<1x96xf32>
    %29 = vector.broadcast %9 : vector<1x96xf32> to vector<64x96xf32>
    %30 = arith.mulf %29, %18 : vector<64x96xf32>
    %31 = vector.broadcast %28 : vector<1x96xf32> to vector<64x96xf32>
    %32 = arith.mulf %30, %31 : vector<64x96xf32>
    %33 = vector.broadcast %10 : vector<1x96xf32> to vector<64x96xf32>
    %34 = arith.addf %32, %33 : vector<64x96xf32>
    %cst_22 = arith.constant 0.000000e+00 : f32
    %35 = vector.broadcast %cst_22 : f32 to vector<64x96xf32>
    %36 = arith.cmpf ogt, %34, %35 : vector<64x96xf32>
    %cst_23 = arith.constant 0.000000e+00 : f32
    %37 = vector.broadcast %cst_23 : f32 to vector<64x96xf32>
    %38 = arith.minimumf %34, %37 : vector<64x96xf32>
    %39 = math.exp %38 : vector<64x96xf32>
    %cst_24 = arith.constant 1.000000e+00 : f32
    %40 = vector.broadcast %cst_24 : f32 to vector<64x96xf32>
    %41 = arith.subf %39, %40 : vector<64x96xf32>
    %42 = arith.select %36, %34, %41 : vector<64x96xi1>, vector<64x96xf32>
    %43 = arith.truncf %42 : vector<64x96xf32> to vector<64x96xbf16>
    %c0_25 = arith.constant 0 : index
    %c0_26 = arith.constant 0 : index
    %44 = vector.load %arg9[%c0_25, %c0_26] : memref<96x32xbf16, #tpu.memory_space<vmem>>, vector<96x32xbf16>
    %cst_27 = arith.constant dense<0.000000e+00> : vector<64x32xf32>
    %45 = tpu.matmul %43, %44, %cst_27 {dimension_numbers = #tpu.dot_dimension_numbers<[1], [0], [0], [1], [0, 0, 1, 1], [], []>} : vector<64x96xbf16>, vector<96x32xbf16>, vector<64x32xf32> -> vector<64x32xf32>
    %c0_28 = arith.constant 0 : index
    %c0_29 = arith.constant 0 : index
    %46 = vector.load %arg10[%c0_28, %c0_29] : memref<1x32xf32, #tpu.memory_space<vmem>>, vector<1x32xf32>
    %47 = vector.broadcast %46 : vector<1x32xf32> to vector<64x32xf32>
    %48 = arith.addf %45, %47 : vector<64x32xf32>
    %c0_30 = arith.constant 0 : index
    %c0_31 = arith.constant 0 : index
    %49 = vector.load %arg13[%c0_30, %c0_31] : memref<32x4xf32, #tpu.memory_space<vmem>>, vector<32x4xf32>
    %c0_32 = arith.constant 0 : index
    %c0_33 = arith.constant 0 : index
    %50 = vector.load %arg14[%c0_32, %c0_33] : memref<4x32xf32, #tpu.memory_space<vmem>>, vector<4x32xf32>
    %c0_34 = arith.constant 0 : index
    %c0_35 = arith.constant 0 : index
    %51 = vector.load %arg11[%c0_34, %c0_35] : memref<1x32xf32, #tpu.memory_space<vmem>>, vector<1x32xf32>
    %c0_36 = arith.constant 0 : index
    %c0_37 = arith.constant 0 : index
    %52 = vector.load %arg12[%c0_36, %c0_37] : memref<1x32xf32, #tpu.memory_space<vmem>>, vector<1x32xf32>
    %53 = vector.broadcast %0 : vector<64x1xf32> to vector<64x32xf32>
    %54 = arith.mulf %53, %48 : vector<64x32xf32>
    %cst_38 = arith.constant dense<0.000000e+00> : vector<32xf32>
    %55 = vector.multi_reduction <add>, %54, %cst_38 [0] : vector<64x32xf32> to vector<32xf32>
    %56 = vector.shape_cast %55 : vector<32xf32> to vector<1x32xf32>
    %cst_39 = arith.constant dense<0.000000e+00> : vector<1x4xf32>
    %57 = tpu.matmul %56, %49, %cst_39 {dimension_numbers = #tpu.dot_dimension_numbers<[1], [0], [0], [1], [0, 0, 1, 1], [], []>} : vector<1x32xf32>, vector<32x4xf32>, vector<1x4xf32> -> vector<1x4xf32>
    %cst_40 = arith.constant dense<0.000000e+00> : vector<1x32xf32>
    %58 = tpu.matmul %57, %50, %cst_40 {dimension_numbers = #tpu.dot_dimension_numbers<[1], [0], [0], [1], [0, 0, 1, 1], [], []>} : vector<1x4xf32>, vector<4x32xf32>, vector<1x32xf32> -> vector<1x32xf32>
    %59 = vector.broadcast %58 : vector<1x32xf32> to vector<64x32xf32>
    %60 = arith.subf %48, %59 : vector<64x32xf32>
    %61 = arith.mulf %60, %60 : vector<64x32xf32>
    %62 = vector.broadcast %0 : vector<64x1xf32> to vector<64x32xf32>
    %63 = arith.mulf %62, %61 : vector<64x32xf32>
    %cst_41 = arith.constant dense<0.000000e+00> : vector<32xf32>
    %64 = vector.multi_reduction <add>, %63, %cst_41 [0] : vector<64x32xf32> to vector<32xf32>
    %65 = vector.shape_cast %64 : vector<32xf32> to vector<1x32xf32>
    %cst_42 = arith.constant dense<0.000000e+00> : vector<1x4xf32>
    %66 = tpu.matmul %65, %49, %cst_42 {dimension_numbers = #tpu.dot_dimension_numbers<[1], [0], [0], [1], [0, 0, 1, 1], [], []>} : vector<1x32xf32>, vector<32x4xf32>, vector<1x4xf32> -> vector<1x4xf32>
    %cst_43 = arith.constant 9.99999974E-6 : f32
    %67 = vector.broadcast %cst_43 : f32 to vector<1x4xf32>
    %68 = arith.addf %66, %67 : vector<1x4xf32>
    %69 = math.rsqrt %68 : vector<1x4xf32>
    %cst_44 = arith.constant dense<0.000000e+00> : vector<1x32xf32>
    %70 = tpu.matmul %69, %50, %cst_44 {dimension_numbers = #tpu.dot_dimension_numbers<[1], [0], [0], [1], [0, 0, 1, 1], [], []>} : vector<1x4xf32>, vector<4x32xf32>, vector<1x32xf32> -> vector<1x32xf32>
    %71 = vector.broadcast %51 : vector<1x32xf32> to vector<64x32xf32>
    %72 = arith.mulf %71, %60 : vector<64x32xf32>
    %73 = vector.broadcast %70 : vector<1x32xf32> to vector<64x32xf32>
    %74 = arith.mulf %72, %73 : vector<64x32xf32>
    %75 = vector.broadcast %52 : vector<1x32xf32> to vector<64x32xf32>
    %76 = arith.addf %74, %75 : vector<64x32xf32>
    %cst_45 = arith.constant 0.000000e+00 : f32
    %77 = vector.broadcast %cst_45 : f32 to vector<64x32xf32>
    %78 = arith.cmpf ogt, %76, %77 : vector<64x32xf32>
    %cst_46 = arith.constant 0.000000e+00 : f32
    %79 = vector.broadcast %cst_46 : f32 to vector<64x32xf32>
    %80 = arith.minimumf %76, %79 : vector<64x32xf32>
    %81 = math.exp %80 : vector<64x32xf32>
    %cst_47 = arith.constant 1.000000e+00 : f32
    %82 = vector.broadcast %cst_47 : f32 to vector<64x32xf32>
    %83 = arith.subf %81, %82 : vector<64x32xf32>
    %84 = arith.select %78, %76, %83 : vector<64x32xi1>, vector<64x32xf32>
    %c0_48 = arith.constant 0 : index
    %c0_49 = arith.constant 0 : index
    %85 = vector.load %arg2[%c0_48, %c0_49] : memref<64x24xbf16, #tpu.memory_space<vmem>>, vector<64x24xbf16>
    %c0_50 = arith.constant 0 : index
    %c0_51 = arith.constant 0 : index
    %86 = vector.load %arg15[%c0_50, %c0_51] : memref<24x96xbf16, #tpu.memory_space<vmem>>, vector<24x96xbf16>
    %cst_52 = arith.constant dense<0.000000e+00> : vector<64x96xf32>
    %87 = tpu.matmul %85, %86, %cst_52 {dimension_numbers = #tpu.dot_dimension_numbers<[1], [0], [0], [1], [0, 0, 1, 1], [], []>} : vector<64x24xbf16>, vector<24x96xbf16>, vector<64x96xf32> -> vector<64x96xf32>
    %c0_53 = arith.constant 0 : index
    %c0_54 = arith.constant 0 : index
    %88 = vector.load %arg16[%c0_53, %c0_54] : memref<1x96xf32, #tpu.memory_space<vmem>>, vector<1x96xf32>
    %89 = vector.broadcast %88 : vector<1x96xf32> to vector<64x96xf32>
    %90 = arith.addf %87, %89 : vector<64x96xf32>
    %c0_55 = arith.constant 0 : index
    %c0_56 = arith.constant 0 : index
    %91 = vector.load %arg19[%c0_55, %c0_56] : memref<96x12xf32, #tpu.memory_space<vmem>>, vector<96x12xf32>
    %c0_57 = arith.constant 0 : index
    %c0_58 = arith.constant 0 : index
    %92 = vector.load %arg20[%c0_57, %c0_58] : memref<12x96xf32, #tpu.memory_space<vmem>>, vector<12x96xf32>
    %c0_59 = arith.constant 0 : index
    %c0_60 = arith.constant 0 : index
    %93 = vector.load %arg17[%c0_59, %c0_60] : memref<1x96xf32, #tpu.memory_space<vmem>>, vector<1x96xf32>
    %c0_61 = arith.constant 0 : index
    %c0_62 = arith.constant 0 : index
    %94 = vector.load %arg18[%c0_61, %c0_62] : memref<1x96xf32, #tpu.memory_space<vmem>>, vector<1x96xf32>
    %95 = vector.broadcast %0 : vector<64x1xf32> to vector<64x96xf32>
    %96 = arith.mulf %95, %90 : vector<64x96xf32>
    %cst_63 = arith.constant dense<0.000000e+00> : vector<96xf32>
    %97 = vector.multi_reduction <add>, %96, %cst_63 [0] : vector<64x96xf32> to vector<96xf32>
    %98 = vector.shape_cast %97 : vector<96xf32> to vector<1x96xf32>
    %cst_64 = arith.constant dense<0.000000e+00> : vector<1x12xf32>
    %99 = tpu.matmul %98, %91, %cst_64 {dimension_numbers = #tpu.dot_dimension_numbers<[1], [0], [0], [1], [0, 0, 1, 1], [], []>} : vector<1x96xf32>, vector<96x12xf32>, vector<1x12xf32> -> vector<1x12xf32>
    %cst_65 = arith.constant dense<0.000000e+00> : vector<1x96xf32>
    %100 = tpu.matmul %99, %92, %cst_65 {dimension_numbers = #tpu.dot_dimension_numbers<[1], [0], [0], [1], [0, 0, 1, 1], [], []>} : vector<1x12xf32>, vector<12x96xf32>, vector<1x96xf32> -> vector<1x96xf32>
    %101 = vector.broadcast %100 : vector<1x96xf32> to vector<64x96xf32>
    %102 = arith.subf %90, %101 : vector<64x96xf32>
    %103 = arith.mulf %102, %102 : vector<64x96xf32>
    %104 = vector.broadcast %0 : vector<64x1xf32> to vector<64x96xf32>
    %105 = arith.mulf %104, %103 : vector<64x96xf32>
    %cst_66 = arith.constant dense<0.000000e+00> : vector<96xf32>
    %106 = vector.multi_reduction <add>, %105, %cst_66 [0] : vector<64x96xf32> to vector<96xf32>
    %107 = vector.shape_cast %106 : vector<96xf32> to vector<1x96xf32>
    %cst_67 = arith.constant dense<0.000000e+00> : vector<1x12xf32>
    %108 = tpu.matmul %107, %91, %cst_67 {dimension_numbers = #tpu.dot_dimension_numbers<[1], [0], [0], [1], [0, 0, 1, 1], [], []>} : vector<1x96xf32>, vector<96x12xf32>, vector<1x12xf32> -> vector<1x12xf32>
    %cst_68 = arith.constant 9.99999974E-6 : f32
    %109 = vector.broadcast %cst_68 : f32 to vector<1x12xf32>
    %110 = arith.addf %108, %109 : vector<1x12xf32>
    %111 = math.rsqrt %110 : vector<1x12xf32>
    %cst_69 = arith.constant dense<0.000000e+00> : vector<1x96xf32>
    %112 = tpu.matmul %111, %92, %cst_69 {dimension_numbers = #tpu.dot_dimension_numbers<[1], [0], [0], [1], [0, 0, 1, 1], [], []>} : vector<1x12xf32>, vector<12x96xf32>, vector<1x96xf32> -> vector<1x96xf32>
    %113 = vector.broadcast %93 : vector<1x96xf32> to vector<64x96xf32>
    %114 = arith.mulf %113, %102 : vector<64x96xf32>
    %115 = vector.broadcast %112 : vector<1x96xf32> to vector<64x96xf32>
    %116 = arith.mulf %114, %115 : vector<64x96xf32>
    %117 = vector.broadcast %94 : vector<1x96xf32> to vector<64x96xf32>
    %118 = arith.addf %116, %117 : vector<64x96xf32>
    %cst_70 = arith.constant 0.000000e+00 : f32
    %119 = vector.broadcast %cst_70 : f32 to vector<64x96xf32>
    %120 = arith.cmpf ogt, %118, %119 : vector<64x96xf32>
    %cst_71 = arith.constant 0.000000e+00 : f32
    %121 = vector.broadcast %cst_71 : f32 to vector<64x96xf32>
    %122 = arith.minimumf %118, %121 : vector<64x96xf32>
    %123 = math.exp %122 : vector<64x96xf32>
    %cst_72 = arith.constant 1.000000e+00 : f32
    %124 = vector.broadcast %cst_72 : f32 to vector<64x96xf32>
    %125 = arith.subf %123, %124 : vector<64x96xf32>
    %126 = arith.select %120, %118, %125 : vector<64x96xi1>, vector<64x96xf32>
    %127 = arith.truncf %126 : vector<64x96xf32> to vector<64x96xbf16>
    %c0_73 = arith.constant 0 : index
    %c0_74 = arith.constant 0 : index
    %128 = vector.load %arg21[%c0_73, %c0_74] : memref<96x32xbf16, #tpu.memory_space<vmem>>, vector<96x32xbf16>
    %cst_75 = arith.constant dense<0.000000e+00> : vector<64x32xf32>
    %129 = tpu.matmul %127, %128, %cst_75 {dimension_numbers = #tpu.dot_dimension_numbers<[1], [0], [0], [1], [0, 0, 1, 1], [], []>} : vector<64x96xbf16>, vector<96x32xbf16>, vector<64x32xf32> -> vector<64x32xf32>
    %c0_76 = arith.constant 0 : index
    %c0_77 = arith.constant 0 : index
    %130 = vector.load %arg22[%c0_76, %c0_77] : memref<1x32xf32, #tpu.memory_space<vmem>>, vector<1x32xf32>
    %131 = vector.broadcast %130 : vector<1x32xf32> to vector<64x32xf32>
    %132 = arith.addf %129, %131 : vector<64x32xf32>
    %c0_78 = arith.constant 0 : index
    %c0_79 = arith.constant 0 : index
    %133 = vector.load %arg25[%c0_78, %c0_79] : memref<32x4xf32, #tpu.memory_space<vmem>>, vector<32x4xf32>
    %c0_80 = arith.constant 0 : index
    %c0_81 = arith.constant 0 : index
    %134 = vector.load %arg26[%c0_80, %c0_81] : memref<4x32xf32, #tpu.memory_space<vmem>>, vector<4x32xf32>
    %c0_82 = arith.constant 0 : index
    %c0_83 = arith.constant 0 : index
    %135 = vector.load %arg23[%c0_82, %c0_83] : memref<1x32xf32, #tpu.memory_space<vmem>>, vector<1x32xf32>
    %c0_84 = arith.constant 0 : index
    %c0_85 = arith.constant 0 : index
    %136 = vector.load %arg24[%c0_84, %c0_85] : memref<1x32xf32, #tpu.memory_space<vmem>>, vector<1x32xf32>
    %137 = vector.broadcast %0 : vector<64x1xf32> to vector<64x32xf32>
    %138 = arith.mulf %137, %132 : vector<64x32xf32>
    %cst_86 = arith.constant dense<0.000000e+00> : vector<32xf32>
    %139 = vector.multi_reduction <add>, %138, %cst_86 [0] : vector<64x32xf32> to vector<32xf32>
    %140 = vector.shape_cast %139 : vector<32xf32> to vector<1x32xf32>
    %cst_87 = arith.constant dense<0.000000e+00> : vector<1x4xf32>
    %141 = tpu.matmul %140, %133, %cst_87 {dimension_numbers = #tpu.dot_dimension_numbers<[1], [0], [0], [1], [0, 0, 1, 1], [], []>} : vector<1x32xf32>, vector<32x4xf32>, vector<1x4xf32> -> vector<1x4xf32>
    %cst_88 = arith.constant dense<0.000000e+00> : vector<1x32xf32>
    %142 = tpu.matmul %141, %134, %cst_88 {dimension_numbers = #tpu.dot_dimension_numbers<[1], [0], [0], [1], [0, 0, 1, 1], [], []>} : vector<1x4xf32>, vector<4x32xf32>, vector<1x32xf32> -> vector<1x32xf32>
    %143 = vector.broadcast %142 : vector<1x32xf32> to vector<64x32xf32>
    %144 = arith.subf %132, %143 : vector<64x32xf32>
    %145 = arith.mulf %144, %144 : vector<64x32xf32>
    %146 = vector.broadcast %0 : vector<64x1xf32> to vector<64x32xf32>
    %147 = arith.mulf %146, %145 : vector<64x32xf32>
    %cst_89 = arith.constant dense<0.000000e+00> : vector<32xf32>
    %148 = vector.multi_reduction <add>, %147, %cst_89 [0] : vector<64x32xf32> to vector<32xf32>
    %149 = vector.shape_cast %148 : vector<32xf32> to vector<1x32xf32>
    %cst_90 = arith.constant dense<0.000000e+00> : vector<1x4xf32>
    %150 = tpu.matmul %149, %133, %cst_90 {dimension_numbers = #tpu.dot_dimension_numbers<[1], [0], [0], [1], [0, 0, 1, 1], [], []>} : vector<1x32xf32>, vector<32x4xf32>, vector<1x4xf32> -> vector<1x4xf32>
    %cst_91 = arith.constant 9.99999974E-6 : f32
    %151 = vector.broadcast %cst_91 : f32 to vector<1x4xf32>
    %152 = arith.addf %150, %151 : vector<1x4xf32>
    %153 = math.rsqrt %152 : vector<1x4xf32>
    %cst_92 = arith.constant dense<0.000000e+00> : vector<1x32xf32>
    %154 = tpu.matmul %153, %134, %cst_92 {dimension_numbers = #tpu.dot_dimension_numbers<[1], [0], [0], [1], [0, 0, 1, 1], [], []>} : vector<1x4xf32>, vector<4x32xf32>, vector<1x32xf32> -> vector<1x32xf32>
    %155 = vector.broadcast %135 : vector<1x32xf32> to vector<64x32xf32>
    %156 = arith.mulf %155, %144 : vector<64x32xf32>
    %157 = vector.broadcast %154 : vector<1x32xf32> to vector<64x32xf32>
    %158 = arith.mulf %156, %157 : vector<64x32xf32>
    %159 = vector.broadcast %136 : vector<1x32xf32> to vector<64x32xf32>
    %160 = arith.addf %158, %159 : vector<64x32xf32>
    %cst_93 = arith.constant 0.000000e+00 : f32
    %161 = vector.broadcast %cst_93 : f32 to vector<64x32xf32>
    %162 = arith.cmpf ogt, %160, %161 : vector<64x32xf32>
    %cst_94 = arith.constant 0.000000e+00 : f32
    %163 = vector.broadcast %cst_94 : f32 to vector<64x32xf32>
    %164 = arith.minimumf %160, %163 : vector<64x32xf32>
    %165 = math.exp %164 : vector<64x32xf32>
    %cst_95 = arith.constant 1.000000e+00 : f32
    %166 = vector.broadcast %cst_95 : f32 to vector<64x32xf32>
    %167 = arith.subf %165, %166 : vector<64x32xf32>
    %168 = arith.select %162, %160, %167 : vector<64x32xi1>, vector<64x32xf32>
    %169 = arith.truncf %84 : vector<64x32xf32> to vector<64x32xbf16>
    %c0_96 = arith.constant 0 : index
    %c0_97 = arith.constant 0 : index
    %170 = vector.load %arg27[%c0_96, %c0_97] : memref<32x32xbf16, #tpu.memory_space<vmem>>, vector<32x32xbf16>
    %cst_98 = arith.constant dense<0.000000e+00> : vector<64x32xf32>
    %171 = tpu.matmul %169, %170, %cst_98 {dimension_numbers = #tpu.dot_dimension_numbers<[1], [0], [0], [1], [0, 0, 1, 1], [], []>} : vector<64x32xbf16>, vector<32x32xbf16>, vector<64x32xf32> -> vector<64x32xf32>
    %172 = arith.truncf %168 : vector<64x32xf32> to vector<64x32xbf16>
    %c0_99 = arith.constant 0 : index
    %c0_100 = arith.constant 0 : index
    %173 = vector.load %arg28[%c0_99, %c0_100] : memref<32x32xbf16, #tpu.memory_space<vmem>>, vector<32x32xbf16>
    %cst_101 = arith.constant dense<0.000000e+00> : vector<64x32xf32>
    %174 = tpu.matmul %172, %173, %cst_101 {dimension_numbers = #tpu.dot_dimension_numbers<[1], [0], [0], [1], [0, 0, 1, 1], [], []>} : vector<64x32xbf16>, vector<32x32xbf16>, vector<64x32xf32> -> vector<64x32xf32>
    %175 = arith.addf %171, %174 : vector<64x32xf32>
    %c0_102 = arith.constant 0 : index
    %c0_103 = arith.constant 0 : index
    %176 = vector.load %arg29[%c0_102, %c0_103] : memref<1x32xf32, #tpu.memory_space<vmem>>, vector<1x32xf32>
    %177 = vector.broadcast %176 : vector<1x32xf32> to vector<64x32xf32>
    %178 = arith.addf %175, %177 : vector<64x32xf32>
    %c0_104 = arith.constant 0 : index
    %c0_105 = arith.constant 0 : index
    %179 = vector.load %arg30[%c0_104, %c0_105] : memref<1x32xf32, #tpu.memory_space<vmem>>, vector<1x32xf32>
    %c0_106 = arith.constant 0 : index
    %c0_107 = arith.constant 0 : index
    %180 = vector.load %arg31[%c0_106, %c0_107] : memref<1x32xf32, #tpu.memory_space<vmem>>, vector<1x32xf32>
    %181 = vector.broadcast %0 : vector<64x1xf32> to vector<64x32xf32>
    %182 = arith.mulf %181, %178 : vector<64x32xf32>
    %cst_108 = arith.constant dense<0.000000e+00> : vector<32xf32>
    %183 = vector.multi_reduction <add>, %182, %cst_108 [0] : vector<64x32xf32> to vector<32xf32>
    %184 = vector.shape_cast %183 : vector<32xf32> to vector<1x32xf32>
    %cst_109 = arith.constant 6.250000e-02 : f32
    %185 = vector.broadcast %cst_109 : f32 to vector<1x32xf32>
    %186 = arith.mulf %184, %185 : vector<1x32xf32>
    %187 = vector.broadcast %186 : vector<1x32xf32> to vector<64x32xf32>
    %188 = arith.subf %178, %187 : vector<64x32xf32>
    %189 = arith.mulf %188, %188 : vector<64x32xf32>
    %190 = vector.broadcast %0 : vector<64x1xf32> to vector<64x32xf32>
    %191 = arith.mulf %190, %189 : vector<64x32xf32>
    %cst_110 = arith.constant dense<0.000000e+00> : vector<32xf32>
    %192 = vector.multi_reduction <add>, %191, %cst_110 [0] : vector<64x32xf32> to vector<32xf32>
    %193 = vector.shape_cast %192 : vector<32xf32> to vector<1x32xf32>
    %cst_111 = arith.constant 6.250000e-02 : f32
    %194 = vector.broadcast %cst_111 : f32 to vector<1x32xf32>
    %195 = arith.mulf %193, %194 : vector<1x32xf32>
    %196 = vector.broadcast %179 : vector<1x32xf32> to vector<64x32xf32>
    %197 = arith.mulf %196, %188 : vector<64x32xf32>
    %cst_112 = arith.constant 9.99999974E-6 : f32
    %198 = vector.broadcast %cst_112 : f32 to vector<1x32xf32>
    %199 = arith.addf %195, %198 : vector<1x32xf32>
    %200 = math.rsqrt %199 : vector<1x32xf32>
    %201 = vector.broadcast %200 : vector<1x32xf32> to vector<64x32xf32>
    %202 = arith.mulf %197, %201 : vector<64x32xf32>
    %203 = vector.broadcast %180 : vector<1x32xf32> to vector<64x32xf32>
    %204 = arith.addf %202, %203 : vector<64x32xf32>
    %cst_113 = arith.constant 0.000000e+00 : f32
    %205 = vector.broadcast %cst_113 : f32 to vector<64x32xf32>
    %206 = arith.cmpf ogt, %204, %205 : vector<64x32xf32>
    %cst_114 = arith.constant 0.000000e+00 : f32
    %207 = vector.broadcast %cst_114 : f32 to vector<64x32xf32>
    %208 = arith.minimumf %204, %207 : vector<64x32xf32>
    %209 = math.exp %208 : vector<64x32xf32>
    %cst_115 = arith.constant 1.000000e+00 : f32
    %210 = vector.broadcast %cst_115 : f32 to vector<64x32xf32>
    %211 = arith.subf %209, %210 : vector<64x32xf32>
    %212 = arith.select %206, %204, %211 : vector<64x32xi1>, vector<64x32xf32>
    %c0_116 = arith.constant 0 : index
    %c0_117 = arith.constant 0 : index
    %213 = vector.load %arg33[%c0_116, %c0_117] : memref<32x128xbf16, #tpu.memory_space<vmem>>, vector<32x128xbf16>
    %c0_118 = arith.constant 0 : index
    %c0_119 = arith.constant 0 : index
    %214 = vector.load %arg35[%c0_118, %c0_119] : memref<96x256xbf16, #tpu.memory_space<vmem>>, vector<96x256xbf16>
    %c0_120 = arith.constant 0 : index
    %c0_121 = arith.constant 0 : index
    %215 = vector.load %arg36[%c0_120, %c0_121] : memref<1x256xf32, #tpu.memory_space<vmem>>, vector<1x256xf32>
    %216 = arith.truncf %212 : vector<64x32xf32> to vector<64x32xbf16>
    %c0_122 = arith.constant 0 : index
    %c0_123 = arith.constant 0 : index
    %217 = vector.load %arg32[%c0_122, %c0_123] : memref<32x128xbf16, #tpu.memory_space<vmem>>, vector<32x128xbf16>
    %cst_124 = arith.constant dense<0.000000e+00> : vector<64x128xf32>
    %218 = tpu.matmul %216, %217, %cst_124 {dimension_numbers = #tpu.dot_dimension_numbers<[1], [0], [0], [1], [0, 0, 1, 1], [], []>} : vector<64x32xbf16>, vector<32x128xbf16>, vector<64x128xf32> -> vector<64x128xf32>
    %c0_125 = arith.constant 0 : index
    %c0_126 = arith.constant 0 : index
    %219 = vector.load %arg34[%c0_125, %c0_126] : memref<1x128xf32, #tpu.memory_space<vmem>>, vector<1x128xf32>
    %220 = vector.broadcast %219 : vector<1x128xf32> to vector<64x128xf32>
    %221 = arith.addf %218, %220 : vector<64x128xf32>
    %cst_127 = arith.constant 0.000000e+00 : f32
    %222 = vector.broadcast %cst_127 : f32 to vector<8x32xf32>
    %cst_128 = arith.constant 0.000000e+00 : f32
    %223 = vector.broadcast %cst_128 : f32 to vector<8x32xf32>
    %cst_129 = arith.constant 0.000000e+00 : f32
    %224 = vector.broadcast %cst_129 : f32 to vector<8x64xf32>
    %cst_130 = arith.constant 0.000000e+00 : f32
    %225 = vector.broadcast %cst_130 : f32 to vector<8x64xf32>
    %226 = vector.extract_strided_slice %221 {offsets = [0, 0], sizes = [8, 128], strides = [1, 1]} : vector<64x128xf32> to vector<8x128xf32>
    %227 = arith.truncf %222 : vector<8x32xf32> to vector<8x32xbf16>
    %cst_131 = arith.constant dense<0.000000e+00> : vector<8x128xf32>
    %228 = tpu.matmul %227, %213, %cst_131 {dimension_numbers = #tpu.dot_dimension_numbers<[1], [0], [0], [1], [0, 0, 1, 1], [], []>} : vector<8x32xbf16>, vector<32x128xbf16>, vector<8x128xf32> -> vector<8x128xf32>
    %229 = arith.addf %226, %228 : vector<8x128xf32>
    %230 = vector.extract_strided_slice %229 {offsets = [0, 0], sizes = [8, 96], strides = [1, 1]} : vector<8x128xf32> to vector<8x96xf32>
    %cst_132 = arith.constant 5.000000e-01 : f32
    %231 = vector.broadcast %cst_132 : f32 to vector<8x96xf32>
    %232 = arith.mulf %231, %230 : vector<8x96xf32>
    %233 = math.tanh %232 : vector<8x96xf32>
    %cst_133 = arith.constant 1.000000e+00 : f32
    %234 = vector.broadcast %cst_133 : f32 to vector<8x96xf32>
    %235 = arith.addf %233, %234 : vector<8x96xf32>
    %cst_134 = arith.constant 5.000000e-01 : f32
    %236 = vector.broadcast %cst_134 : f32 to vector<8x96xf32>
    %237 = arith.mulf %236, %235 : vector<8x96xf32>
    %238 = vector.extract_strided_slice %237 {offsets = [0, 0], sizes = [8, 32], strides = [1, 1]} : vector<8x96xf32> to vector<8x32xf32>
    %239 = vector.extract_strided_slice %237 {offsets = [0, 32], sizes = [8, 32], strides = [1, 1]} : vector<8x96xf32> to vector<8x32xf32>
    %240 = vector.extract_strided_slice %237 {offsets = [0, 64], sizes = [8, 32], strides = [1, 1]} : vector<8x96xf32> to vector<8x32xf32>
    %241 = vector.extract_strided_slice %229 {offsets = [0, 96], sizes = [8, 32], strides = [1, 1]} : vector<8x128xf32> to vector<8x32xf32>
    %242 = math.tanh %241 : vector<8x32xf32>
    %243 = arith.mulf %239, %223 : vector<8x32xf32>
    %244 = arith.mulf %238, %242 : vector<8x32xf32>
    %245 = arith.addf %243, %244 : vector<8x32xf32>
    %246 = math.tanh %245 : vector<8x32xf32>
    %247 = arith.mulf %240, %246 : vector<8x32xf32>
    %248 = tpu.concatenate %247, %224 in 1 : vector<8x32xf32>, vector<8x64xf32> -> vector<8x96xf32>
    %249 = arith.truncf %248 : vector<8x96xf32> to vector<8x96xbf16>
    %cst_135 = arith.constant dense<0.000000e+00> : vector<8x256xf32>
    %250 = tpu.matmul %249, %214, %cst_135 {dimension_numbers = #tpu.dot_dimension_numbers<[1], [0], [0], [1], [0, 0, 1, 1], [], []>} : vector<8x96xbf16>, vector<96x256xbf16>, vector<8x256xf32> -> vector<8x256xf32>
    %251 = vector.broadcast %215 : vector<1x256xf32> to vector<8x256xf32>
    %252 = arith.addf %250, %251 : vector<8x256xf32>
    %253 = vector.extract_strided_slice %252 {offsets = [0, 0], sizes = [8, 192], strides = [1, 1]} : vector<8x256xf32> to vector<8x192xf32>
    %cst_136 = arith.constant 5.000000e-01 : f32
    %254 = vector.broadcast %cst_136 : f32 to vector<8x192xf32>
    %255 = arith.mulf %254, %253 : vector<8x192xf32>
    %256 = math.tanh %255 : vector<8x192xf32>
    %cst_137 = arith.constant 1.000000e+00 : f32
    %257 = vector.broadcast %cst_137 : f32 to vector<8x192xf32>
    %258 = arith.addf %256, %257 : vector<8x192xf32>
    %cst_138 = arith.constant 5.000000e-01 : f32
    %259 = vector.broadcast %cst_138 : f32 to vector<8x192xf32>
    %260 = arith.mulf %259, %258 : vector<8x192xf32>
    %261 = vector.extract_strided_slice %260 {offsets = [0, 0], sizes = [8, 64], strides = [1, 1]} : vector<8x192xf32> to vector<8x64xf32>
    %262 = vector.extract_strided_slice %260 {offsets = [0, 64], sizes = [8, 64], strides = [1, 1]} : vector<8x192xf32> to vector<8x64xf32>
    %263 = vector.extract_strided_slice %260 {offsets = [0, 128], sizes = [8, 64], strides = [1, 1]} : vector<8x192xf32> to vector<8x64xf32>
    %264 = vector.extract_strided_slice %252 {offsets = [0, 192], sizes = [8, 64], strides = [1, 1]} : vector<8x256xf32> to vector<8x64xf32>
    %265 = math.tanh %264 : vector<8x64xf32>
    %266 = arith.mulf %262, %225 : vector<8x64xf32>
    %267 = arith.mulf %261, %265 : vector<8x64xf32>
    %268 = arith.addf %266, %267 : vector<8x64xf32>
    %269 = math.tanh %268 : vector<8x64xf32>
    %270 = arith.mulf %263, %269 : vector<8x64xf32>
    %271 = vector.extract_strided_slice %221 {offsets = [8, 0], sizes = [8, 128], strides = [1, 1]} : vector<64x128xf32> to vector<8x128xf32>
    %272 = arith.truncf %247 : vector<8x32xf32> to vector<8x32xbf16>
    %cst_139 = arith.constant dense<0.000000e+00> : vector<8x128xf32>
    %273 = tpu.matmul %272, %213, %cst_139 {dimension_numbers = #tpu.dot_dimension_numbers<[1], [0], [0], [1], [0, 0, 1, 1], [], []>} : vector<8x32xbf16>, vector<32x128xbf16>, vector<8x128xf32> -> vector<8x128xf32>
    %274 = arith.addf %271, %273 : vector<8x128xf32>
    %275 = vector.extract_strided_slice %274 {offsets = [0, 0], sizes = [8, 96], strides = [1, 1]} : vector<8x128xf32> to vector<8x96xf32>
    %cst_140 = arith.constant 5.000000e-01 : f32
    %276 = vector.broadcast %cst_140 : f32 to vector<8x96xf32>
    %277 = arith.mulf %276, %275 : vector<8x96xf32>
    %278 = math.tanh %277 : vector<8x96xf32>
    %cst_141 = arith.constant 1.000000e+00 : f32
    %279 = vector.broadcast %cst_141 : f32 to vector<8x96xf32>
    %280 = arith.addf %278, %279 : vector<8x96xf32>
    %cst_142 = arith.constant 5.000000e-01 : f32
    %281 = vector.broadcast %cst_142 : f32 to vector<8x96xf32>
    %282 = arith.mulf %281, %280 : vector<8x96xf32>
    %283 = vector.extract_strided_slice %282 {offsets = [0, 0], sizes = [8, 32], strides = [1, 1]} : vector<8x96xf32> to vector<8x32xf32>
    %284 = vector.extract_strided_slice %282 {offsets = [0, 32], sizes = [8, 32], strides = [1, 1]} : vector<8x96xf32> to vector<8x32xf32>
    %285 = vector.extract_strided_slice %282 {offsets = [0, 64], sizes = [8, 32], strides = [1, 1]} : vector<8x96xf32> to vector<8x32xf32>
    %286 = vector.extract_strided_slice %274 {offsets = [0, 96], sizes = [8, 32], strides = [1, 1]} : vector<8x128xf32> to vector<8x32xf32>
    %287 = math.tanh %286 : vector<8x32xf32>
    %288 = arith.mulf %284, %245 : vector<8x32xf32>
    %289 = arith.mulf %283, %287 : vector<8x32xf32>
    %290 = arith.addf %288, %289 : vector<8x32xf32>
    %291 = math.tanh %290 : vector<8x32xf32>
    %292 = arith.mulf %285, %291 : vector<8x32xf32>
    %293 = tpu.concatenate %292, %270 in 1 : vector<8x32xf32>, vector<8x64xf32> -> vector<8x96xf32>
    %294 = arith.truncf %293 : vector<8x96xf32> to vector<8x96xbf16>
    %cst_143 = arith.constant dense<0.000000e+00> : vector<8x256xf32>
    %295 = tpu.matmul %294, %214, %cst_143 {dimension_numbers = #tpu.dot_dimension_numbers<[1], [0], [0], [1], [0, 0, 1, 1], [], []>} : vector<8x96xbf16>, vector<96x256xbf16>, vector<8x256xf32> -> vector<8x256xf32>
    %296 = vector.broadcast %215 : vector<1x256xf32> to vector<8x256xf32>
    %297 = arith.addf %295, %296 : vector<8x256xf32>
    %298 = vector.extract_strided_slice %297 {offsets = [0, 0], sizes = [8, 192], strides = [1, 1]} : vector<8x256xf32> to vector<8x192xf32>
    %cst_144 = arith.constant 5.000000e-01 : f32
    %299 = vector.broadcast %cst_144 : f32 to vector<8x192xf32>
    %300 = arith.mulf %299, %298 : vector<8x192xf32>
    %301 = math.tanh %300 : vector<8x192xf32>
    %cst_145 = arith.constant 1.000000e+00 : f32
    %302 = vector.broadcast %cst_145 : f32 to vector<8x192xf32>
    %303 = arith.addf %301, %302 : vector<8x192xf32>
    %cst_146 = arith.constant 5.000000e-01 : f32
    %304 = vector.broadcast %cst_146 : f32 to vector<8x192xf32>
    %305 = arith.mulf %304, %303 : vector<8x192xf32>
    %306 = vector.extract_strided_slice %305 {offsets = [0, 0], sizes = [8, 64], strides = [1, 1]} : vector<8x192xf32> to vector<8x64xf32>
    %307 = vector.extract_strided_slice %305 {offsets = [0, 64], sizes = [8, 64], strides = [1, 1]} : vector<8x192xf32> to vector<8x64xf32>
    %308 = vector.extract_strided_slice %305 {offsets = [0, 128], sizes = [8, 64], strides = [1, 1]} : vector<8x192xf32> to vector<8x64xf32>
    %309 = vector.extract_strided_slice %297 {offsets = [0, 192], sizes = [8, 64], strides = [1, 1]} : vector<8x256xf32> to vector<8x64xf32>
    %310 = math.tanh %309 : vector<8x64xf32>
    %311 = arith.mulf %307, %268 : vector<8x64xf32>
    %312 = arith.mulf %306, %310 : vector<8x64xf32>
    %313 = arith.addf %311, %312 : vector<8x64xf32>
    %314 = math.tanh %313 : vector<8x64xf32>
    %315 = arith.mulf %308, %314 : vector<8x64xf32>
    %316 = vector.extract_strided_slice %221 {offsets = [16, 0], sizes = [8, 128], strides = [1, 1]} : vector<64x128xf32> to vector<8x128xf32>
    %317 = arith.truncf %292 : vector<8x32xf32> to vector<8x32xbf16>
    %cst_147 = arith.constant dense<0.000000e+00> : vector<8x128xf32>
    %318 = tpu.matmul %317, %213, %cst_147 {dimension_numbers = #tpu.dot_dimension_numbers<[1], [0], [0], [1], [0, 0, 1, 1], [], []>} : vector<8x32xbf16>, vector<32x128xbf16>, vector<8x128xf32> -> vector<8x128xf32>
    %319 = arith.addf %316, %318 : vector<8x128xf32>
    %320 = vector.extract_strided_slice %319 {offsets = [0, 0], sizes = [8, 96], strides = [1, 1]} : vector<8x128xf32> to vector<8x96xf32>
    %cst_148 = arith.constant 5.000000e-01 : f32
    %321 = vector.broadcast %cst_148 : f32 to vector<8x96xf32>
    %322 = arith.mulf %321, %320 : vector<8x96xf32>
    %323 = math.tanh %322 : vector<8x96xf32>
    %cst_149 = arith.constant 1.000000e+00 : f32
    %324 = vector.broadcast %cst_149 : f32 to vector<8x96xf32>
    %325 = arith.addf %323, %324 : vector<8x96xf32>
    %cst_150 = arith.constant 5.000000e-01 : f32
    %326 = vector.broadcast %cst_150 : f32 to vector<8x96xf32>
    %327 = arith.mulf %326, %325 : vector<8x96xf32>
    %328 = vector.extract_strided_slice %327 {offsets = [0, 0], sizes = [8, 32], strides = [1, 1]} : vector<8x96xf32> to vector<8x32xf32>
    %329 = vector.extract_strided_slice %327 {offsets = [0, 32], sizes = [8, 32], strides = [1, 1]} : vector<8x96xf32> to vector<8x32xf32>
    %330 = vector.extract_strided_slice %327 {offsets = [0, 64], sizes = [8, 32], strides = [1, 1]} : vector<8x96xf32> to vector<8x32xf32>
    %331 = vector.extract_strided_slice %319 {offsets = [0, 96], sizes = [8, 32], strides = [1, 1]} : vector<8x128xf32> to vector<8x32xf32>
    %332 = math.tanh %331 : vector<8x32xf32>
    %333 = arith.mulf %329, %290 : vector<8x32xf32>
    %334 = arith.mulf %328, %332 : vector<8x32xf32>
    %335 = arith.addf %333, %334 : vector<8x32xf32>
    %336 = math.tanh %335 : vector<8x32xf32>
    %337 = arith.mulf %330, %336 : vector<8x32xf32>
    %338 = tpu.concatenate %337, %315 in 1 : vector<8x32xf32>, vector<8x64xf32> -> vector<8x96xf32>
    %339 = arith.truncf %338 : vector<8x96xf32> to vector<8x96xbf16>
    %cst_151 = arith.constant dense<0.000000e+00> : vector<8x256xf32>
    %340 = tpu.matmul %339, %214, %cst_151 {dimension_numbers = #tpu.dot_dimension_numbers<[1], [0], [0], [1], [0, 0, 1, 1], [], []>} : vector<8x96xbf16>, vector<96x256xbf16>, vector<8x256xf32> -> vector<8x256xf32>
    %341 = vector.broadcast %215 : vector<1x256xf32> to vector<8x256xf32>
    %342 = arith.addf %340, %341 : vector<8x256xf32>
    %343 = vector.extract_strided_slice %342 {offsets = [0, 0], sizes = [8, 192], strides = [1, 1]} : vector<8x256xf32> to vector<8x192xf32>
    %cst_152 = arith.constant 5.000000e-01 : f32
    %344 = vector.broadcast %cst_152 : f32 to vector<8x192xf32>
    %345 = arith.mulf %344, %343 : vector<8x192xf32>
    %346 = math.tanh %345 : vector<8x192xf32>
    %cst_153 = arith.constant 1.000000e+00 : f32
    %347 = vector.broadcast %cst_153 : f32 to vector<8x192xf32>
    %348 = arith.addf %346, %347 : vector<8x192xf32>
    %cst_154 = arith.constant 5.000000e-01 : f32
    %349 = vector.broadcast %cst_154 : f32 to vector<8x192xf32>
    %350 = arith.mulf %349, %348 : vector<8x192xf32>
    %351 = vector.extract_strided_slice %350 {offsets = [0, 0], sizes = [8, 64], strides = [1, 1]} : vector<8x192xf32> to vector<8x64xf32>
    %352 = vector.extract_strided_slice %350 {offsets = [0, 64], sizes = [8, 64], strides = [1, 1]} : vector<8x192xf32> to vector<8x64xf32>
    %353 = vector.extract_strided_slice %350 {offsets = [0, 128], sizes = [8, 64], strides = [1, 1]} : vector<8x192xf32> to vector<8x64xf32>
    %354 = vector.extract_strided_slice %342 {offsets = [0, 192], sizes = [8, 64], strides = [1, 1]} : vector<8x256xf32> to vector<8x64xf32>
    %355 = math.tanh %354 : vector<8x64xf32>
    %356 = arith.mulf %352, %313 : vector<8x64xf32>
    %357 = arith.mulf %351, %355 : vector<8x64xf32>
    %358 = arith.addf %356, %357 : vector<8x64xf32>
    %359 = math.tanh %358 : vector<8x64xf32>
    %360 = arith.mulf %353, %359 : vector<8x64xf32>
    %361 = vector.extract_strided_slice %221 {offsets = [24, 0], sizes = [8, 128], strides = [1, 1]} : vector<64x128xf32> to vector<8x128xf32>
    %362 = arith.truncf %337 : vector<8x32xf32> to vector<8x32xbf16>
    %cst_155 = arith.constant dense<0.000000e+00> : vector<8x128xf32>
    %363 = tpu.matmul %362, %213, %cst_155 {dimension_numbers = #tpu.dot_dimension_numbers<[1], [0], [0], [1], [0, 0, 1, 1], [], []>} : vector<8x32xbf16>, vector<32x128xbf16>, vector<8x128xf32> -> vector<8x128xf32>
    %364 = arith.addf %361, %363 : vector<8x128xf32>
    %365 = vector.extract_strided_slice %364 {offsets = [0, 0], sizes = [8, 96], strides = [1, 1]} : vector<8x128xf32> to vector<8x96xf32>
    %cst_156 = arith.constant 5.000000e-01 : f32
    %366 = vector.broadcast %cst_156 : f32 to vector<8x96xf32>
    %367 = arith.mulf %366, %365 : vector<8x96xf32>
    %368 = math.tanh %367 : vector<8x96xf32>
    %cst_157 = arith.constant 1.000000e+00 : f32
    %369 = vector.broadcast %cst_157 : f32 to vector<8x96xf32>
    %370 = arith.addf %368, %369 : vector<8x96xf32>
    %cst_158 = arith.constant 5.000000e-01 : f32
    %371 = vector.broadcast %cst_158 : f32 to vector<8x96xf32>
    %372 = arith.mulf %371, %370 : vector<8x96xf32>
    %373 = vector.extract_strided_slice %372 {offsets = [0, 0], sizes = [8, 32], strides = [1, 1]} : vector<8x96xf32> to vector<8x32xf32>
    %374 = vector.extract_strided_slice %372 {offsets = [0, 32], sizes = [8, 32], strides = [1, 1]} : vector<8x96xf32> to vector<8x32xf32>
    %375 = vector.extract_strided_slice %372 {offsets = [0, 64], sizes = [8, 32], strides = [1, 1]} : vector<8x96xf32> to vector<8x32xf32>
    %376 = vector.extract_strided_slice %364 {offsets = [0, 96], sizes = [8, 32], strides = [1, 1]} : vector<8x128xf32> to vector<8x32xf32>
    %377 = math.tanh %376 : vector<8x32xf32>
    %378 = arith.mulf %374, %335 : vector<8x32xf32>
    %379 = arith.mulf %373, %377 : vector<8x32xf32>
    %380 = arith.addf %378, %379 : vector<8x32xf32>
    %381 = math.tanh %380 : vector<8x32xf32>
    %382 = arith.mulf %375, %381 : vector<8x32xf32>
    %383 = tpu.concatenate %382, %360 in 1 : vector<8x32xf32>, vector<8x64xf32> -> vector<8x96xf32>
    %384 = arith.truncf %383 : vector<8x96xf32> to vector<8x96xbf16>
    %cst_159 = arith.constant dense<0.000000e+00> : vector<8x256xf32>
    %385 = tpu.matmul %384, %214, %cst_159 {dimension_numbers = #tpu.dot_dimension_numbers<[1], [0], [0], [1], [0, 0, 1, 1], [], []>} : vector<8x96xbf16>, vector<96x256xbf16>, vector<8x256xf32> -> vector<8x256xf32>
    %386 = vector.broadcast %215 : vector<1x256xf32> to vector<8x256xf32>
    %387 = arith.addf %385, %386 : vector<8x256xf32>
    %388 = vector.extract_strided_slice %387 {offsets = [0, 0], sizes = [8, 192], strides = [1, 1]} : vector<8x256xf32> to vector<8x192xf32>
    %cst_160 = arith.constant 5.000000e-01 : f32
    %389 = vector.broadcast %cst_160 : f32 to vector<8x192xf32>
    %390 = arith.mulf %389, %388 : vector<8x192xf32>
    %391 = math.tanh %390 : vector<8x192xf32>
    %cst_161 = arith.constant 1.000000e+00 : f32
    %392 = vector.broadcast %cst_161 : f32 to vector<8x192xf32>
    %393 = arith.addf %391, %392 : vector<8x192xf32>
    %cst_162 = arith.constant 5.000000e-01 : f32
    %394 = vector.broadcast %cst_162 : f32 to vector<8x192xf32>
    %395 = arith.mulf %394, %393 : vector<8x192xf32>
    %396 = vector.extract_strided_slice %395 {offsets = [0, 0], sizes = [8, 64], strides = [1, 1]} : vector<8x192xf32> to vector<8x64xf32>
    %397 = vector.extract_strided_slice %395 {offsets = [0, 64], sizes = [8, 64], strides = [1, 1]} : vector<8x192xf32> to vector<8x64xf32>
    %398 = vector.extract_strided_slice %395 {offsets = [0, 128], sizes = [8, 64], strides = [1, 1]} : vector<8x192xf32> to vector<8x64xf32>
    %399 = vector.extract_strided_slice %387 {offsets = [0, 192], sizes = [8, 64], strides = [1, 1]} : vector<8x256xf32> to vector<8x64xf32>
    %400 = math.tanh %399 : vector<8x64xf32>
    %401 = arith.mulf %397, %358 : vector<8x64xf32>
    %402 = arith.mulf %396, %400 : vector<8x64xf32>
    %403 = arith.addf %401, %402 : vector<8x64xf32>
    %404 = math.tanh %403 : vector<8x64xf32>
    %405 = arith.mulf %398, %404 : vector<8x64xf32>
    %406 = vector.extract_strided_slice %221 {offsets = [32, 0], sizes = [8, 128], strides = [1, 1]} : vector<64x128xf32> to vector<8x128xf32>
    %407 = arith.truncf %382 : vector<8x32xf32> to vector<8x32xbf16>
    %cst_163 = arith.constant dense<0.000000e+00> : vector<8x128xf32>
    %408 = tpu.matmul %407, %213, %cst_163 {dimension_numbers = #tpu.dot_dimension_numbers<[1], [0], [0], [1], [0, 0, 1, 1], [], []>} : vector<8x32xbf16>, vector<32x128xbf16>, vector<8x128xf32> -> vector<8x128xf32>
    %409 = arith.addf %406, %408 : vector<8x128xf32>
    %410 = vector.extract_strided_slice %409 {offsets = [0, 0], sizes = [8, 96], strides = [1, 1]} : vector<8x128xf32> to vector<8x96xf32>
    %cst_164 = arith.constant 5.000000e-01 : f32
    %411 = vector.broadcast %cst_164 : f32 to vector<8x96xf32>
    %412 = arith.mulf %411, %410 : vector<8x96xf32>
    %413 = math.tanh %412 : vector<8x96xf32>
    %cst_165 = arith.constant 1.000000e+00 : f32
    %414 = vector.broadcast %cst_165 : f32 to vector<8x96xf32>
    %415 = arith.addf %413, %414 : vector<8x96xf32>
    %cst_166 = arith.constant 5.000000e-01 : f32
    %416 = vector.broadcast %cst_166 : f32 to vector<8x96xf32>
    %417 = arith.mulf %416, %415 : vector<8x96xf32>
    %418 = vector.extract_strided_slice %417 {offsets = [0, 0], sizes = [8, 32], strides = [1, 1]} : vector<8x96xf32> to vector<8x32xf32>
    %419 = vector.extract_strided_slice %417 {offsets = [0, 32], sizes = [8, 32], strides = [1, 1]} : vector<8x96xf32> to vector<8x32xf32>
    %420 = vector.extract_strided_slice %417 {offsets = [0, 64], sizes = [8, 32], strides = [1, 1]} : vector<8x96xf32> to vector<8x32xf32>
    %421 = vector.extract_strided_slice %409 {offsets = [0, 96], sizes = [8, 32], strides = [1, 1]} : vector<8x128xf32> to vector<8x32xf32>
    %422 = math.tanh %421 : vector<8x32xf32>
    %423 = arith.mulf %419, %380 : vector<8x32xf32>
    %424 = arith.mulf %418, %422 : vector<8x32xf32>
    %425 = arith.addf %423, %424 : vector<8x32xf32>
    %426 = math.tanh %425 : vector<8x32xf32>
    %427 = arith.mulf %420, %426 : vector<8x32xf32>
    %428 = tpu.concatenate %427, %405 in 1 : vector<8x32xf32>, vector<8x64xf32> -> vector<8x96xf32>
    %429 = arith.truncf %428 : vector<8x96xf32> to vector<8x96xbf16>
    %cst_167 = arith.constant dense<0.000000e+00> : vector<8x256xf32>
    %430 = tpu.matmul %429, %214, %cst_167 {dimension_numbers = #tpu.dot_dimension_numbers<[1], [0], [0], [1], [0, 0, 1, 1], [], []>} : vector<8x96xbf16>, vector<96x256xbf16>, vector<8x256xf32> -> vector<8x256xf32>
    %431 = vector.broadcast %215 : vector<1x256xf32> to vector<8x256xf32>
    %432 = arith.addf %430, %431 : vector<8x256xf32>
    %433 = vector.extract_strided_slice %432 {offsets = [0, 0], sizes = [8, 192], strides = [1, 1]} : vector<8x256xf32> to vector<8x192xf32>
    %cst_168 = arith.constant 5.000000e-01 : f32
    %434 = vector.broadcast %cst_168 : f32 to vector<8x192xf32>
    %435 = arith.mulf %434, %433 : vector<8x192xf32>
    %436 = math.tanh %435 : vector<8x192xf32>
    %cst_169 = arith.constant 1.000000e+00 : f32
    %437 = vector.broadcast %cst_169 : f32 to vector<8x192xf32>
    %438 = arith.addf %436, %437 : vector<8x192xf32>
    %cst_170 = arith.constant 5.000000e-01 : f32
    %439 = vector.broadcast %cst_170 : f32 to vector<8x192xf32>
    %440 = arith.mulf %439, %438 : vector<8x192xf32>
    %441 = vector.extract_strided_slice %440 {offsets = [0, 0], sizes = [8, 64], strides = [1, 1]} : vector<8x192xf32> to vector<8x64xf32>
    %442 = vector.extract_strided_slice %440 {offsets = [0, 64], sizes = [8, 64], strides = [1, 1]} : vector<8x192xf32> to vector<8x64xf32>
    %443 = vector.extract_strided_slice %440 {offsets = [0, 128], sizes = [8, 64], strides = [1, 1]} : vector<8x192xf32> to vector<8x64xf32>
    %444 = vector.extract_strided_slice %432 {offsets = [0, 192], sizes = [8, 64], strides = [1, 1]} : vector<8x256xf32> to vector<8x64xf32>
    %445 = math.tanh %444 : vector<8x64xf32>
    %446 = arith.mulf %442, %403 : vector<8x64xf32>
    %447 = arith.mulf %441, %445 : vector<8x64xf32>
    %448 = arith.addf %446, %447 : vector<8x64xf32>
    %449 = math.tanh %448 : vector<8x64xf32>
    %450 = arith.mulf %443, %449 : vector<8x64xf32>
    %451 = vector.extract_strided_slice %221 {offsets = [40, 0], sizes = [8, 128], strides = [1, 1]} : vector<64x128xf32> to vector<8x128xf32>
    %452 = arith.truncf %427 : vector<8x32xf32> to vector<8x32xbf16>
    %cst_171 = arith.constant dense<0.000000e+00> : vector<8x128xf32>
    %453 = tpu.matmul %452, %213, %cst_171 {dimension_numbers = #tpu.dot_dimension_numbers<[1], [0], [0], [1], [0, 0, 1, 1], [], []>} : vector<8x32xbf16>, vector<32x128xbf16>, vector<8x128xf32> -> vector<8x128xf32>
    %454 = arith.addf %451, %453 : vector<8x128xf32>
    %455 = vector.extract_strided_slice %454 {offsets = [0, 0], sizes = [8, 96], strides = [1, 1]} : vector<8x128xf32> to vector<8x96xf32>
    %cst_172 = arith.constant 5.000000e-01 : f32
    %456 = vector.broadcast %cst_172 : f32 to vector<8x96xf32>
    %457 = arith.mulf %456, %455 : vector<8x96xf32>
    %458 = math.tanh %457 : vector<8x96xf32>
    %cst_173 = arith.constant 1.000000e+00 : f32
    %459 = vector.broadcast %cst_173 : f32 to vector<8x96xf32>
    %460 = arith.addf %458, %459 : vector<8x96xf32>
    %cst_174 = arith.constant 5.000000e-01 : f32
    %461 = vector.broadcast %cst_174 : f32 to vector<8x96xf32>
    %462 = arith.mulf %461, %460 : vector<8x96xf32>
    %463 = vector.extract_strided_slice %462 {offsets = [0, 0], sizes = [8, 32], strides = [1, 1]} : vector<8x96xf32> to vector<8x32xf32>
    %464 = vector.extract_strided_slice %462 {offsets = [0, 32], sizes = [8, 32], strides = [1, 1]} : vector<8x96xf32> to vector<8x32xf32>
    %465 = vector.extract_strided_slice %462 {offsets = [0, 64], sizes = [8, 32], strides = [1, 1]} : vector<8x96xf32> to vector<8x32xf32>
    %466 = vector.extract_strided_slice %454 {offsets = [0, 96], sizes = [8, 32], strides = [1, 1]} : vector<8x128xf32> to vector<8x32xf32>
    %467 = math.tanh %466 : vector<8x32xf32>
    %468 = arith.mulf %464, %425 : vector<8x32xf32>
    %469 = arith.mulf %463, %467 : vector<8x32xf32>
    %470 = arith.addf %468, %469 : vector<8x32xf32>
    %471 = math.tanh %470 : vector<8x32xf32>
    %472 = arith.mulf %465, %471 : vector<8x32xf32>
    %473 = tpu.concatenate %472, %450 in 1 : vector<8x32xf32>, vector<8x64xf32> -> vector<8x96xf32>
    %474 = arith.truncf %473 : vector<8x96xf32> to vector<8x96xbf16>
    %cst_175 = arith.constant dense<0.000000e+00> : vector<8x256xf32>
    %475 = tpu.matmul %474, %214, %cst_175 {dimension_numbers = #tpu.dot_dimension_numbers<[1], [0], [0], [1], [0, 0, 1, 1], [], []>} : vector<8x96xbf16>, vector<96x256xbf16>, vector<8x256xf32> -> vector<8x256xf32>
    %476 = vector.broadcast %215 : vector<1x256xf32> to vector<8x256xf32>
    %477 = arith.addf %475, %476 : vector<8x256xf32>
    %478 = vector.extract_strided_slice %477 {offsets = [0, 0], sizes = [8, 192], strides = [1, 1]} : vector<8x256xf32> to vector<8x192xf32>
    %cst_176 = arith.constant 5.000000e-01 : f32
    %479 = vector.broadcast %cst_176 : f32 to vector<8x192xf32>
    %480 = arith.mulf %479, %478 : vector<8x192xf32>
    %481 = math.tanh %480 : vector<8x192xf32>
    %cst_177 = arith.constant 1.000000e+00 : f32
    %482 = vector.broadcast %cst_177 : f32 to vector<8x192xf32>
    %483 = arith.addf %481, %482 : vector<8x192xf32>
    %cst_178 = arith.constant 5.000000e-01 : f32
    %484 = vector.broadcast %cst_178 : f32 to vector<8x192xf32>
    %485 = arith.mulf %484, %483 : vector<8x192xf32>
    %486 = vector.extract_strided_slice %485 {offsets = [0, 0], sizes = [8, 64], strides = [1, 1]} : vector<8x192xf32> to vector<8x64xf32>
    %487 = vector.extract_strided_slice %485 {offsets = [0, 64], sizes = [8, 64], strides = [1, 1]} : vector<8x192xf32> to vector<8x64xf32>
    %488 = vector.extract_strided_slice %485 {offsets = [0, 128], sizes = [8, 64], strides = [1, 1]} : vector<8x192xf32> to vector<8x64xf32>
    %489 = vector.extract_strided_slice %477 {offsets = [0, 192], sizes = [8, 64], strides = [1, 1]} : vector<8x256xf32> to vector<8x64xf32>
    %490 = math.tanh %489 : vector<8x64xf32>
    %491 = arith.mulf %487, %448 : vector<8x64xf32>
    %492 = arith.mulf %486, %490 : vector<8x64xf32>
    %493 = arith.addf %491, %492 : vector<8x64xf32>
    %494 = math.tanh %493 : vector<8x64xf32>
    %495 = arith.mulf %488, %494 : vector<8x64xf32>
    %496 = vector.extract_strided_slice %221 {offsets = [48, 0], sizes = [8, 128], strides = [1, 1]} : vector<64x128xf32> to vector<8x128xf32>
    %497 = arith.truncf %472 : vector<8x32xf32> to vector<8x32xbf16>
    %cst_179 = arith.constant dense<0.000000e+00> : vector<8x128xf32>
    %498 = tpu.matmul %497, %213, %cst_179 {dimension_numbers = #tpu.dot_dimension_numbers<[1], [0], [0], [1], [0, 0, 1, 1], [], []>} : vector<8x32xbf16>, vector<32x128xbf16>, vector<8x128xf32> -> vector<8x128xf32>
    %499 = arith.addf %496, %498 : vector<8x128xf32>
    %500 = vector.extract_strided_slice %499 {offsets = [0, 0], sizes = [8, 96], strides = [1, 1]} : vector<8x128xf32> to vector<8x96xf32>
    %cst_180 = arith.constant 5.000000e-01 : f32
    %501 = vector.broadcast %cst_180 : f32 to vector<8x96xf32>
    %502 = arith.mulf %501, %500 : vector<8x96xf32>
    %503 = math.tanh %502 : vector<8x96xf32>
    %cst_181 = arith.constant 1.000000e+00 : f32
    %504 = vector.broadcast %cst_181 : f32 to vector<8x96xf32>
    %505 = arith.addf %503, %504 : vector<8x96xf32>
    %cst_182 = arith.constant 5.000000e-01 : f32
    %506 = vector.broadcast %cst_182 : f32 to vector<8x96xf32>
    %507 = arith.mulf %506, %505 : vector<8x96xf32>
    %508 = vector.extract_strided_slice %507 {offsets = [0, 0], sizes = [8, 32], strides = [1, 1]} : vector<8x96xf32> to vector<8x32xf32>
    %509 = vector.extract_strided_slice %507 {offsets = [0, 32], sizes = [8, 32], strides = [1, 1]} : vector<8x96xf32> to vector<8x32xf32>
    %510 = vector.extract_strided_slice %507 {offsets = [0, 64], sizes = [8, 32], strides = [1, 1]} : vector<8x96xf32> to vector<8x32xf32>
    %511 = vector.extract_strided_slice %499 {offsets = [0, 96], sizes = [8, 32], strides = [1, 1]} : vector<8x128xf32> to vector<8x32xf32>
    %512 = math.tanh %511 : vector<8x32xf32>
    %513 = arith.mulf %509, %470 : vector<8x32xf32>
    %514 = arith.mulf %508, %512 : vector<8x32xf32>
    %515 = arith.addf %513, %514 : vector<8x32xf32>
    %516 = math.tanh %515 : vector<8x32xf32>
    %517 = arith.mulf %510, %516 : vector<8x32xf32>
    %518 = tpu.concatenate %517, %495 in 1 : vector<8x32xf32>, vector<8x64xf32> -> vector<8x96xf32>
    %519 = arith.truncf %518 : vector<8x96xf32> to vector<8x96xbf16>
    %cst_183 = arith.constant dense<0.000000e+00> : vector<8x256xf32>
    %520 = tpu.matmul %519, %214, %cst_183 {dimension_numbers = #tpu.dot_dimension_numbers<[1], [0], [0], [1], [0, 0, 1, 1], [], []>} : vector<8x96xbf16>, vector<96x256xbf16>, vector<8x256xf32> -> vector<8x256xf32>
    %521 = vector.broadcast %215 : vector<1x256xf32> to vector<8x256xf32>
    %522 = arith.addf %520, %521 : vector<8x256xf32>
    %523 = vector.extract_strided_slice %522 {offsets = [0, 0], sizes = [8, 192], strides = [1, 1]} : vector<8x256xf32> to vector<8x192xf32>
    %cst_184 = arith.constant 5.000000e-01 : f32
    %524 = vector.broadcast %cst_184 : f32 to vector<8x192xf32>
    %525 = arith.mulf %524, %523 : vector<8x192xf32>
    %526 = math.tanh %525 : vector<8x192xf32>
    %cst_185 = arith.constant 1.000000e+00 : f32
    %527 = vector.broadcast %cst_185 : f32 to vector<8x192xf32>
    %528 = arith.addf %526, %527 : vector<8x192xf32>
    %cst_186 = arith.constant 5.000000e-01 : f32
    %529 = vector.broadcast %cst_186 : f32 to vector<8x192xf32>
    %530 = arith.mulf %529, %528 : vector<8x192xf32>
    %531 = vector.extract_strided_slice %530 {offsets = [0, 0], sizes = [8, 64], strides = [1, 1]} : vector<8x192xf32> to vector<8x64xf32>
    %532 = vector.extract_strided_slice %530 {offsets = [0, 64], sizes = [8, 64], strides = [1, 1]} : vector<8x192xf32> to vector<8x64xf32>
    %533 = vector.extract_strided_slice %530 {offsets = [0, 128], sizes = [8, 64], strides = [1, 1]} : vector<8x192xf32> to vector<8x64xf32>
    %534 = vector.extract_strided_slice %522 {offsets = [0, 192], sizes = [8, 64], strides = [1, 1]} : vector<8x256xf32> to vector<8x64xf32>
    %535 = math.tanh %534 : vector<8x64xf32>
    %536 = arith.mulf %532, %493 : vector<8x64xf32>
    %537 = arith.mulf %531, %535 : vector<8x64xf32>
    %538 = arith.addf %536, %537 : vector<8x64xf32>
    %539 = math.tanh %538 : vector<8x64xf32>
    %540 = arith.mulf %533, %539 : vector<8x64xf32>
    %541 = vector.extract_strided_slice %221 {offsets = [56, 0], sizes = [8, 128], strides = [1, 1]} : vector<64x128xf32> to vector<8x128xf32>
    %542 = arith.truncf %517 : vector<8x32xf32> to vector<8x32xbf16>
    %cst_187 = arith.constant dense<0.000000e+00> : vector<8x128xf32>
    %543 = tpu.matmul %542, %213, %cst_187 {dimension_numbers = #tpu.dot_dimension_numbers<[1], [0], [0], [1], [0, 0, 1, 1], [], []>} : vector<8x32xbf16>, vector<32x128xbf16>, vector<8x128xf32> -> vector<8x128xf32>
    %544 = arith.addf %541, %543 : vector<8x128xf32>
    %545 = vector.extract_strided_slice %544 {offsets = [0, 0], sizes = [8, 96], strides = [1, 1]} : vector<8x128xf32> to vector<8x96xf32>
    %cst_188 = arith.constant 5.000000e-01 : f32
    %546 = vector.broadcast %cst_188 : f32 to vector<8x96xf32>
    %547 = arith.mulf %546, %545 : vector<8x96xf32>
    %548 = math.tanh %547 : vector<8x96xf32>
    %cst_189 = arith.constant 1.000000e+00 : f32
    %549 = vector.broadcast %cst_189 : f32 to vector<8x96xf32>
    %550 = arith.addf %548, %549 : vector<8x96xf32>
    %cst_190 = arith.constant 5.000000e-01 : f32
    %551 = vector.broadcast %cst_190 : f32 to vector<8x96xf32>
    %552 = arith.mulf %551, %550 : vector<8x96xf32>
    %553 = vector.extract_strided_slice %552 {offsets = [0, 0], sizes = [8, 32], strides = [1, 1]} : vector<8x96xf32> to vector<8x32xf32>
    %554 = vector.extract_strided_slice %552 {offsets = [0, 32], sizes = [8, 32], strides = [1, 1]} : vector<8x96xf32> to vector<8x32xf32>
    %555 = vector.extract_strided_slice %552 {offsets = [0, 64], sizes = [8, 32], strides = [1, 1]} : vector<8x96xf32> to vector<8x32xf32>
    %556 = vector.extract_strided_slice %544 {offsets = [0, 96], sizes = [8, 32], strides = [1, 1]} : vector<8x128xf32> to vector<8x32xf32>
    %557 = math.tanh %556 : vector<8x32xf32>
    %558 = arith.mulf %554, %515 : vector<8x32xf32>
    %559 = arith.mulf %553, %557 : vector<8x32xf32>
    %560 = arith.addf %558, %559 : vector<8x32xf32>
    %561 = math.tanh %560 : vector<8x32xf32>
    %562 = arith.mulf %555, %561 : vector<8x32xf32>
    %563 = tpu.concatenate %562, %540 in 1 : vector<8x32xf32>, vector<8x64xf32> -> vector<8x96xf32>
    %564 = arith.truncf %563 : vector<8x96xf32> to vector<8x96xbf16>
    %cst_191 = arith.constant dense<0.000000e+00> : vector<8x256xf32>
    %565 = tpu.matmul %564, %214, %cst_191 {dimension_numbers = #tpu.dot_dimension_numbers<[1], [0], [0], [1], [0, 0, 1, 1], [], []>} : vector<8x96xbf16>, vector<96x256xbf16>, vector<8x256xf32> -> vector<8x256xf32>
    %566 = vector.broadcast %215 : vector<1x256xf32> to vector<8x256xf32>
    %567 = arith.addf %565, %566 : vector<8x256xf32>
    %568 = vector.extract_strided_slice %567 {offsets = [0, 0], sizes = [8, 192], strides = [1, 1]} : vector<8x256xf32> to vector<8x192xf32>
    %cst_192 = arith.constant 5.000000e-01 : f32
    %569 = vector.broadcast %cst_192 : f32 to vector<8x192xf32>
    %570 = arith.mulf %569, %568 : vector<8x192xf32>
    %571 = math.tanh %570 : vector<8x192xf32>
    %cst_193 = arith.constant 1.000000e+00 : f32
    %572 = vector.broadcast %cst_193 : f32 to vector<8x192xf32>
    %573 = arith.addf %571, %572 : vector<8x192xf32>
    %cst_194 = arith.constant 5.000000e-01 : f32
    %574 = vector.broadcast %cst_194 : f32 to vector<8x192xf32>
    %575 = arith.mulf %574, %573 : vector<8x192xf32>
    %576 = vector.extract_strided_slice %575 {offsets = [0, 0], sizes = [8, 64], strides = [1, 1]} : vector<8x192xf32> to vector<8x64xf32>
    %577 = vector.extract_strided_slice %575 {offsets = [0, 64], sizes = [8, 64], strides = [1, 1]} : vector<8x192xf32> to vector<8x64xf32>
    %578 = vector.extract_strided_slice %575 {offsets = [0, 128], sizes = [8, 64], strides = [1, 1]} : vector<8x192xf32> to vector<8x64xf32>
    %579 = vector.extract_strided_slice %567 {offsets = [0, 192], sizes = [8, 64], strides = [1, 1]} : vector<8x256xf32> to vector<8x64xf32>
    %580 = math.tanh %579 : vector<8x64xf32>
    %581 = arith.mulf %577, %538 : vector<8x64xf32>
    %582 = arith.mulf %576, %580 : vector<8x64xf32>
    %583 = arith.addf %581, %582 : vector<8x64xf32>
    %584 = math.tanh %583 : vector<8x64xf32>
    %585 = arith.mulf %578, %584 : vector<8x64xf32>
    %586 = arith.truncf %585 : vector<8x64xf32> to vector<8x64xbf16>
    %c0_195 = arith.constant 0 : index
    %c0_196 = arith.constant 0 : index
    %587 = vector.load %arg37[%c0_195, %c0_196] : memref<64x128xbf16, #tpu.memory_space<vmem>>, vector<64x128xbf16>
    %cst_197 = arith.constant dense<0.000000e+00> : vector<8x128xf32>
    %588 = tpu.matmul %586, %587, %cst_197 {dimension_numbers = #tpu.dot_dimension_numbers<[1], [0], [0], [1], [0, 0, 1, 1], [], []>} : vector<8x64xbf16>, vector<64x128xbf16>, vector<8x128xf32> -> vector<8x128xf32>
    %c0_198 = arith.constant 0 : index
    %c0_199 = arith.constant 0 : index
    %589 = vector.load %arg38[%c0_198, %c0_199] : memref<1x128xf32, #tpu.memory_space<vmem>>, vector<1x128xf32>
    %590 = vector.broadcast %589 : vector<1x128xf32> to vector<8x128xf32>
    %591 = arith.addf %588, %590 : vector<8x128xf32>
    %cst_200 = arith.constant 5.000000e-01 : f32
    %592 = vector.broadcast %cst_200 : f32 to vector<8x128xf32>
    %593 = arith.mulf %592, %591 : vector<8x128xf32>
    %594 = math.tanh %593 : vector<8x128xf32>
    %cst_201 = arith.constant 1.000000e+00 : f32
    %595 = vector.broadcast %cst_201 : f32 to vector<8x128xf32>
    %596 = arith.addf %594, %595 : vector<8x128xf32>
    %cst_202 = arith.constant 5.000000e-01 : f32
    %597 = vector.broadcast %cst_202 : f32 to vector<8x128xf32>
    %598 = arith.mulf %597, %596 : vector<8x128xf32>
    %c0_203 = arith.constant 0 : index
    %c0_204 = arith.constant 0 : index
    %599 = vector.load %arg39[%c0_203, %c0_204] : memref<8x128xf32, #tpu.memory_space<vmem>>, vector<8x128xf32>
    tpu.vector_store %arg39[%c0_203, %c0_204], %598 {strides = array<i32>} : memref<8x128xf32, #tpu.memory_space<vmem>>, vector<8x128xf32>,
    return
  }
}

</mosaic_0001>

<llo_original>
// kernel: tpu_custom_call.1
$region0: #{tpu_custom_call.1}
  #allocation0 [shape = 'u32[]', space=smem, size = 0x4, offset = 0x4, fixed_abs, tag = 'smem constant byte address 0x4 - core index']
  #allocation1 [shape = 'u32[144,128]{1,0:T(1,128)}', space=vmem, size = 0x12000, scoped, tag = 'internal scratch']
  %s0 = inlined_call_operand.smem [shape: u32[40], index: -1, kind: input, shape index: {}]
  %s1 = sld [smem:[%s0]]
  %s2 = scalar_lea.smem %s0, 1
  %s3 = sld [smem:[%s2]]
  %s4 = scalar_lea.smem %s0, 2
  %s5 = sld [smem:[%s4]]
  %s6 = scalar_lea.smem %s0, 3
  %s7 = sld [smem:[%s6]]
  %s8 = scalar_lea.smem %s0, 4
  %s9 = sld [smem:[%s8]]
  %s10 = scalar_lea.smem %s0, 5
  %s11 = sld [smem:[%s10]]
  %s12 = scalar_lea.smem %s0, 6
  %s13 = sld [smem:[%s12]]
  %s14 = scalar_lea.smem %s0, 7
  %s15 = sld [smem:[%s14]]
  %s16 = scalar_lea.smem %s0, 8
  %s17 = sld [smem:[%s16]]
  %s18 = scalar_lea.smem %s0, 9
  %s19 = sld [smem:[%s18]]
  %s20 = scalar_lea.smem %s0, 10
  %s21 = sld [smem:[%s20]]
  %s22 = scalar_lea.smem %s0, 11
  %s23 = sld [smem:[%s22]]
  %s24 = scalar_lea.smem %s0, 12
  %s25 = sld [smem:[%s24]]
  %s26 = scalar_lea.smem %s0, 13
  %s27 = sld [smem:[%s26]]
  %s28 = scalar_lea.smem %s0, 14
  %s29 = sld [smem:[%s28]]
  %s30 = scalar_lea.smem %s0, 15
  %s31 = sld [smem:[%s30]]
  %s32 = scalar_lea.smem %s0, 16
  %s33 = sld [smem:[%s32]]
  %s34 = scalar_lea.smem %s0, 17
  %s35 = sld [smem:[%s34]]
  %s36 = scalar_lea.smem %s0, 18
  %s37 = sld [smem:[%s36]]
  %s38 = scalar_lea.smem %s0, 19
  %s39 = sld [smem:[%s38]]
  %s40 = scalar_lea.smem %s0, 20
  %s41 = sld [smem:[%s40]]
  %s42 = scalar_lea.smem %s0, 21
  %s43 = sld [smem:[%s42]]
  %s44 = scalar_lea.smem %s0, 22
  %s45 = sld [smem:[%s44]]
  %s46 = scalar_lea.smem %s0, 23
  %s47 = sld [smem:[%s46]]
  %s48 = scalar_lea.smem %s0, 24
  %s49 = sld [smem:[%s48]]
  %s50 = scalar_lea.smem %s0, 25
  %s51 = sld [smem:[%s50]]
  %s52 = scalar_lea.smem %s0, 26
  %s53 = sld [smem:[%s52]]
  %s54 = scalar_lea.smem %s0, 27
  %s55 = sld [smem:[%s54]]
  %s56 = scalar_lea.smem %s0, 28
  %s57 = sld [smem:[%s56]]
  %s58 = scalar_lea.smem %s0, 29
  %s59 = sld [smem:[%s58]]
  %s60 = scalar_lea.smem %s0, 30
  %s61 = sld [smem:[%s60]]
  %s62 = scalar_lea.smem %s0, 31
  %s63 = sld [smem:[%s62]]
  %s64 = scalar_lea.smem %s0, 32
  %s65 = sld [smem:[%s64]]
  %s66 = scalar_lea.smem %s0, 33
  %s67 = sld [smem:[%s66]]
  %s68 = scalar_lea.smem %s0, 34
  %s69 = sld [smem:[%s68]]
  %s70 = scalar_lea.smem %s0, 35
  %s71 = sld [smem:[%s70]]
  %s72 = scalar_lea.smem %s0, 36
  %s73 = sld [smem:[%s72]]
  %s74 = scalar_lea.smem %s0, 37
  %s75 = sld [smem:[%s74]]
  %s76 = scalar_lea.smem %s0, 38
  %s77 = sld [smem:[%s76]]
  %s78 = scalar_lea.smem %s0, 39
  %s79 = sld [smem:[%s78]]
  %s80 = sld [smem:[#allocation0]]
  $region166: #{tpu_custom_call.1} parent=0
    _
  %s82 = ssub.s32 1, %s80
  %s83 = scalar_select 0, %s82, %s80
  $region1: #{tpu_custom_call.1} parent=0
    #allocation2 [shape = 'u8[4096]{0}', space=vmem, size = 0x1000, scoped, tag = 'output window, operand 0, single buffered']
    #allocation3 [shape = 's32[1]{0}', space=sflag, size = 0x4, scoped, tag = 'scoped memory for tpu_custom_call.1']
    %84 = vsyncpa [#allocation3], 0
    // Predicated region
    $region2: #{tpu_custom_call.1} parent=1 // pred_check
      _
    $region3: #{tpu_custom_call.1} parent=1 // pred_check_branch
      %86 = sbr.rel (0) target = $region5
    $region4: #{tpu_custom_call.1} parent=1 // pred_region
      _
    $region5: #{tpu_custom_call.1} parent=1 // pred_fallthru
      _
    // Predicated region
    $region6: #{tpu_custom_call.1} parent=1 // pred_check
      _
    $region7: #{tpu_custom_call.1} parent=1 // pred_check_branch
      %88 = sbr.rel (0) target = $region9
    $region8: #{tpu_custom_call.1} parent=1 // pred_region
      _
    $region9: #{tpu_custom_call.1} parent=1 // pred_fallthru
      _
    // Predicated region
    $region10: #{tpu_custom_call.1} parent=1 // pred_check
      _
    $region11: #{tpu_custom_call.1} parent=1 // pred_check_branch
      %90 = sbr.rel (0) target = $region13
    $region12: #{tpu_custom_call.1} parent=1 // pred_region
      _
    $region13: #{tpu_custom_call.1} parent=1 // pred_fallthru
      _
    // Predicated region
    $region14: #{tpu_custom_call.1} parent=1 // pred_check
      _
    $region15: #{tpu_custom_call.1} parent=1 // pred_check_branch
      %92 = sbr.rel (0) target = $region17
    $region16: #{tpu_custom_call.1} parent=1 // pred_region
      _
    $region17: #{tpu_custom_call.1} parent=1 // pred_fallthru
      _
    // Predicated region
    $region18: #{tpu_custom_call.1} parent=1 // pred_check
      _
    $region19: #{tpu_custom_call.1} parent=1 // pred_check_branch
      %94 = sbr.rel (0) target = $region21
    $region20: #{tpu_custom_call.1} parent=1 // pred_region
      _
    $region21: #{tpu_custom_call.1} parent=1 // pred_fallthru
      _
    // Predicated region
    $region22: #{tpu_custom_call.1} parent=1 // pred_check
      _
    $region23: #{tpu_custom_call.1} parent=1 // pred_check_branch
      %96 = sbr.rel (0) target = $region25
    $region24: #{tpu_custom_call.1} parent=1 // pred_region
      _
    $region25: #{tpu_custom_call.1} parent=1 // pred_fallthru
      _
    // Predicated region
    $region26: #{tpu_custom_call.1} parent=1 // pred_check
      _
    $region27: #{tpu_custom_call.1} parent=1 // pred_check_branch
      %98 = sbr.rel (0) target = $region29
    $region28: #{tpu_custom_call.1} parent=1 // pred_region
      _
    $region29: #{tpu_custom_call.1} parent=1 // pred_fallthru
      _
    // Predicated region
    $region30: #{tpu_custom_call.1} parent=1 // pred_check
      _
    $region31: #{tpu_custom_call.1} parent=1 // pred_check_branch
      %100 = sbr.rel (0) target = $region33
    $region32: #{tpu_custom_call.1} parent=1 // pred_region
      _
    $region33: #{tpu_custom_call.1} parent=1 // pred_fallthru
      _
    // Predicated region
    $region34: #{tpu_custom_call.1} parent=1 // pred_check
      _
    $region35: #{tpu_custom_call.1} parent=1 // pred_check_branch
      %102 = sbr.rel (0) target = $region37
    $region36: #{tpu_custom_call.1} parent=1 // pred_region
      _
    $region37: #{tpu_custom_call.1} parent=1 // pred_fallthru
      _
    // Predicated region
    $region38: #{tpu_custom_call.1} parent=1 // pred_check
      _
    $region39: #{tpu_custom_call.1} parent=1 // pred_check_branch
      %104 = sbr.rel (0) target = $region41
    $region40: #{tpu_custom_call.1} parent=1 // pred_region
      _
    $region41: #{tpu_custom_call.1} parent=1 // pred_fallthru
      _
    // Predicated region
    $region42: #{tpu_custom_call.1} parent=1 // pred_check
      _
    $region43: #{tpu_custom_call.1} parent=1 // pred_check_branch
      %106 = sbr.rel (0) target = $region45
    $region44: #{tpu_custom_call.1} parent=1 // pred_region
      _
    $region45: #{tpu_custom_call.1} parent=1 // pred_fallthru
      _
    // Predicated region
    $region46: #{tpu_custom_call.1} parent=1 // pred_check
      _
    $region47: #{tpu_custom_call.1} parent=1 // pred_check_branch
      %108 = sbr.rel (0) target = $region49
    $region48: #{tpu_custom_call.1} parent=1 // pred_region
      _
    $region49: #{tpu_custom_call.1} parent=1 // pred_fallthru
      _
    // Predicated region
    $region50: #{tpu_custom_call.1} parent=1 // pred_check
      _
    $region51: #{tpu_custom_call.1} parent=1 // pred_check_branch
      %110 = sbr.rel (0) target = $region53
    $region52: #{tpu_custom_call.1} parent=1 // pred_region
      _
    $region53: #{tpu_custom_call.1} parent=1 // pred_fallthru
      _
    // Predicated region
    $region54: #{tpu_custom_call.1} parent=1 // pred_check
      _
    $region55: #{tpu_custom_call.1} parent=1 // pred_check_branch
      %112 = sbr.rel (0) target = $region57
    $region56: #{tpu_custom_call.1} parent=1 // pred_region
      _
    $region57: #{tpu_custom_call.1} parent=1 // pred_fallthru
      _
    // Predicated region
    $region58: #{tpu_custom_call.1} parent=1 // pred_check
      _
    $region59: #{tpu_custom_call.1} parent=1 // pred_check_branch
      %114 = sbr.rel (0) target = $region61
    $region60: #{tpu_custom_call.1} parent=1 // pred_region
      _
    $region61: #{tpu_custom_call.1} parent=1 // pred_fallthru
      _
    // Predicated region
    $region62: #{tpu_custom_call.1} parent=1 // pred_check
      _
    $region63: #{tpu_custom_call.1} parent=1 // pred_check_branch
      %116 = sbr.rel (0) target = $region65
    $region64: #{tpu_custom_call.1} parent=1 // pred_region
      _
    $region65: #{tpu_custom_call.1} parent=1 // pred_fallthru
      _
    // Predicated region
    $region66: #{tpu_custom_call.1} parent=1 // pred_check
      _
    $region67: #{tpu_custom_call.1} parent=1 // pred_check_branch
      %118 = sbr.rel (0) target = $region69
    $region68: #{tpu_custom_call.1} parent=1 // pred_region
      _
    $region69: #{tpu_custom_call.1} parent=1 // pred_fallthru
      _
    // Predicated region
    $region70: #{tpu_custom_call.1} parent=1 // pred_check
      _
    $region71: #{tpu_custom_call.1} parent=1 // pred_check_branch
      %120 = sbr.rel (0) target = $region73
    $region72: #{tpu_custom_call.1} parent=1 // pred_region
      _
    $region73: #{tpu_custom_call.1} parent=1 // pred_fallthru
      _
    // Predicated region
    $region74: #{tpu_custom_call.1} parent=1 // pred_check
      _
    $region75: #{tpu_custom_call.1} parent=1 // pred_check_branch
      %122 = sbr.rel (0) target = $region77
    $region76: #{tpu_custom_call.1} parent=1 // pred_region
      _
    $region77: #{tpu_custom_call.1} parent=1 // pred_fallthru
      _
    // Predicated region
    $region78: #{tpu_custom_call.1} parent=1 // pred_check
      _
    $region79: #{tpu_custom_call.1} parent=1 // pred_check_branch
      %124 = sbr.rel (0) target = $region81
    $region80: #{tpu_custom_call.1} parent=1 // pred_region
      _
    $region81: #{tpu_custom_call.1} parent=1 // pred_fallthru
      _
    // Predicated region
    $region82: #{tpu_custom_call.1} parent=1 // pred_check
      _
    $region83: #{tpu_custom_call.1} parent=1 // pred_check_branch
      %126 = sbr.rel (0) target = $region85
    $region84: #{tpu_custom_call.1} parent=1 // pred_region
      _
    $region85: #{tpu_custom_call.1} parent=1 // pred_fallthru
      _
    // Predicated region
    $region86: #{tpu_custom_call.1} parent=1 // pred_check
      _
    $region87: #{tpu_custom_call.1} parent=1 // pred_check_branch
      %128 = sbr.rel (0) target = $region89
    $region88: #{tpu_custom_call.1} parent=1 // pred_region
      _
    $region89: #{tpu_custom_call.1} parent=1 // pred_fallthru
      _
    // Predicated region
    $region90: #{tpu_custom_call.1} parent=1 // pred_check
      _
    $region91: #{tpu_custom_call.1} parent=1 // pred_check_branch
      %130 = sbr.rel (0) target = $region93
    $region92: #{tpu_custom_call.1} parent=1 // pred_region
      _
    $region93: #{tpu_custom_call.1} parent=1 // pred_fallthru
      _
    // Predicated region
    $region94: #{tpu_custom_call.1} parent=1 // pred_check
      _
    $region95: #{tpu_custom_call.1} parent=1 // pred_check_branch
      %132 = sbr.rel (0) target = $region97
    $region96: #{tpu_custom_call.1} parent=1 // pred_region
      _
    $region97: #{tpu_custom_call.1} parent=1 // pred_fallthru
      _
    // Predicated region
    $region98: #{tpu_custom_call.1} parent=1 // pred_check
      _
    $region99: #{tpu_custom_call.1} parent=1 // pred_check_branch
      %134 = sbr.rel (0) target = $region101
    $region100: #{tpu_custom_call.1} parent=1 // pred_region
      _
    $region101: #{tpu_custom_call.1} parent=1 // pred_fallthru
      _
    // Predicated region
    $region102: #{tpu_custom_call.1} parent=1 // pred_check
      _
    $region103: #{tpu_custom_call.1} parent=1 // pred_check_branch
      %136 = sbr.rel (0) target = $region105
    $region104: #{tpu_custom_call.1} parent=1 // pred_region
      _
    $region105: #{tpu_custom_call.1} parent=1 // pred_fallthru
      _
    // Predicated region
    $region106: #{tpu_custom_call.1} parent=1 // pred_check
      _
    $region107: #{tpu_custom_call.1} parent=1 // pred_check_branch
      %138 = sbr.rel (0) target = $region109
    $region108: #{tpu_custom_call.1} parent=1 // pred_region
      _
    $region109: #{tpu_custom_call.1} parent=1 // pred_fallthru
      _
    // Predicated region
    $region110: #{tpu_custom_call.1} parent=1 // pred_check
      _
    $region111: #{tpu_custom_call.1} parent=1 // pred_check_branch
      %140 = sbr.rel (0) target = $region113
    $region112: #{tpu_custom_call.1} parent=1 // pred_region
      _
    $region113: #{tpu_custom_call.1} parent=1 // pred_fallthru
      _
    // Predicated region
    $region114: #{tpu_custom_call.1} parent=1 // pred_check
      _
    $region115: #{tpu_custom_call.1} parent=1 // pred_check_branch
      %142 = sbr.rel (0) target = $region117
    $region116: #{tpu_custom_call.1} parent=1 // pred_region
      _
    $region117: #{tpu_custom_call.1} parent=1 // pred_fallthru
      _
    // Predicated region
    $region118: #{tpu_custom_call.1} parent=1 // pred_check
      _
    $region119: #{tpu_custom_call.1} parent=1 // pred_check_branch
      %144 = sbr.rel (0) target = $region121
    $region120: #{tpu_custom_call.1} parent=1 // pred_region
      _
    $region121: #{tpu_custom_call.1} parent=1 // pred_fallthru
      _
    // Predicated region
    $region122: #{tpu_custom_call.1} parent=1 // pred_check
      _
    $region123: #{tpu_custom_call.1} parent=1 // pred_check_branch
      %146 = sbr.rel (0) target = $region125
    $region124: #{tpu_custom_call.1} parent=1 // pred_region
      _
    $region125: #{tpu_custom_call.1} parent=1 // pred_fallthru
      _
    // Predicated region
    $region126: #{tpu_custom_call.1} parent=1 // pred_check
      _
    $region127: #{tpu_custom_call.1} parent=1 // pred_check_branch
      %148 = sbr.rel (0) target = $region129
    $region128: #{tpu_custom_call.1} parent=1 // pred_region
      _
    $region129: #{tpu_custom_call.1} parent=1 // pred_fallthru
      _
    // Predicated region
    $region130: #{tpu_custom_call.1} parent=1 // pred_check
      _
    $region131: #{tpu_custom_call.1} parent=1 // pred_check_branch
      %150 = sbr.rel (0) target = $region133
    $region132: #{tpu_custom_call.1} parent=1 // pred_region
      _
    $region133: #{tpu_custom_call.1} parent=1 // pred_fallthru
      _
    // Predicated region
    $region134: #{tpu_custom_call.1} parent=1 // pred_check
      _
    $region135: #{tpu_custom_call.1} parent=1 // pred_check_branch
      %152 = sbr.rel (0) target = $region137
    $region136: #{tpu_custom_call.1} parent=1 // pred_region
      _
    $region137: #{tpu_custom_call.1} parent=1 // pred_fallthru
      _
    // Predicated region
    $region138: #{tpu_custom_call.1} parent=1 // pred_check
      _
    $region139: #{tpu_custom_call.1} parent=1 // pred_check_branch
      %154 = sbr.rel (0) target = $region141
    $region140: #{tpu_custom_call.1} parent=1 // pred_region
      _
    $region141: #{tpu_custom_call.1} parent=1 // pred_fallthru
      _
    // Predicated region
    $region142: #{tpu_custom_call.1} parent=1 // pred_check
      _
    $region143: #{tpu_custom_call.1} parent=1 // pred_check_branch
      %156 = sbr.rel (0) target = $region145
    $region144: #{tpu_custom_call.1} parent=1 // pred_region
      _
    $region145: #{tpu_custom_call.1} parent=1 // pred_fallthru
      _
    // Predicated region
    $region146: #{tpu_custom_call.1} parent=1 // pred_check
      _
    $region147: #{tpu_custom_call.1} parent=1 // pred_check_branch
      %158 = sbr.rel (0) target = $region149
    $region148: #{tpu_custom_call.1} parent=1 // pred_region
      _
    $region149: #{tpu_custom_call.1} parent=1 // pred_fallthru
      _
    // Predicated region
    $region150: #{tpu_custom_call.1} parent=1 // pred_check
      _
    $region151: #{tpu_custom_call.1} parent=1 // pred_check_branch
      %160 = sbr.rel (0) target = $region153
    $region152: #{tpu_custom_call.1} parent=1 // pred_region
      _
    $region153: #{tpu_custom_call.1} parent=1 // pred_fallthru
      _
    // Predicated region
    $region154: #{tpu_custom_call.1} parent=1 // pred_check
      _
    $region155: #{tpu_custom_call.1} parent=1 // pred_check_branch
      %162 = sbr.rel (0) target = $region157
    $region156: #{tpu_custom_call.1} parent=1 // pred_region
      _
    $region157: #{tpu_custom_call.1} parent=1 // pred_fallthru
      _
    %v164 = vld [vmem:[%s1] sm:$0xff]
    %v165 = vld [vmem:[%s1 + $0x8] sm:$0xff]
    %v166 = vld [vmem:[%s1 + $0x10] sm:$0xff]
    %v167 = vld [vmem:[%s1 + $0x18] sm:$0xff]
    %v168 = vld [vmem:[%s1 + $0x20] sm:$0xff]
    %v169 = vld [vmem:[%s1 + $0x28] sm:$0xff]
    %v170 = vld [vmem:[%s1 + $0x30] sm:$0xff]
    %v171 = vld [vmem:[%s1 + $0x38] sm:$0xff]
    %v172 = vld [vmem:[%s3] sm:$0xf]
    %v173 = vld [vmem:[%s3 + $0x4] sm:$0xf]
    %v174 = vld [vmem:[%s3 + $0x8] sm:$0xf]
    %v175 = vld [vmem:[%s3 + $0xc] sm:$0xf]
    %v176 = vld [vmem:[%s3 + $0x10] sm:$0xf]
    %v177 = vld [vmem:[%s3 + $0x14] sm:$0xf]
    %v178 = vld [vmem:[%s3 + $0x18] sm:$0xf]
    %v179 = vld [vmem:[%s3 + $0x1c] sm:$0xf]
    %v180 = vld [vmem:[%s7] sm:$0xf]
    %v181 = vld [vmem:[%s7 + $0x4] sm:$0xf]
    %v182 = vld [vmem:[%s9] sm:$0x1]
    %v184 = vlaneseq
    %v185 = vshrl.u32 %v184, 7
    %v186 = vsub.s32 0, %v185
    %v187 = vrot.slane %v182, %v186
    %v197 = vunpack.c.l.b16 %v172
    %v198 = vunpack.c.l.b16 %v173
    %v199 = vunpack.c.l.b16 %v174
    %v200 = vunpack.c.l.b16 %v175
    %v201 = vunpack.c.l.b16 %v176
    %v202 = vunpack.c.l.b16 %v177
    %v203 = vunpack.c.l.b16 %v178
    %v204 = vunpack.c.l.b16 %v179
    %v205 = vpack.c.b16 %v198, %v197
    %v206 = vpack.c.b16 %v200, %v199
    %v207 = vpack.c.b16 %v202, %v201
    %v208 = vpack.c.b16 %v204, %v203
    %v211 = vunpack.c.l.b16 %v180
    %v212 = vunpack.c.l.b16 %v181
    %v213 = vpack.c.b16 %v212, %v211
    %vm215 = vcmask 130048
    %v217 = vsel %vm215, %v205, 0
    %v220 = vsel %vm215, %v206, 0
    %v223 = vsel %vm215, %v207, 0
    %v226 = vsel %vm215, %v208, 0
    %228 = vmatprep.subr.bf16.mxu0 0
    %229 = vmatpush1.bf16.msra.mxu0 0
    %230 = vmatprep.subr.bf16.mxu0 0
    %231 = vmatpush1.bf16.msra.mxu0 0
    %232 = vmatprep.subr.bf16.mxu0 0
    %233 = vmatpush1.bf16.msra.mxu0 0
    %234 = vmatprep.subr.bf16.mxu0 0
    %235 = vmatpush1.bf16.msra.mxu0 0
    %236 = vmatprep.subr.bf16.mxu0 0
    %237 = vmatpush1.bf16.msra.mxu0 0
    %238 = vmatprep.subr.bf16.mxu0 0
    %239 = vmatpush1.bf16.msra.mxu0 0
    %240 = vmatprep.subr.bf16.mxu0 0
    %241 = vmatpush1.bf16.msra.mxu0 0
    %242 = vmatprep.subr.bf16.mxu0 0
    %243 = vmatpush1.bf16.msra.mxu0 %v213
    %244 = vmatprep.subr.bf16.mxu0 0
    %245 = vmatpush2.bf16.msra.mxu0 0
    %246 = vmatprep.subr.bf16.mxu0 0
    %247 = vmatpush2.bf16.msra.mxu0 0
    %248 = vmatprep.subr.bf16.mxu0 0
    %249 = vmatpush2.bf16.msra.mxu0 0
    %250 = vmatprep.subr.bf16.mxu0 0
    %251 = vmatpush2.bf16.msra.mxu0 0
    %252 = vmatprep.subr.bf16.mxu0 0
    %253 = vmatpush2.bf16.msra.mxu0 0
    %254 = vmatprep.subr.bf16.mxu0 0
    %255 = vmatpush2.bf16.msra.mxu0 0
    %256 = vmatprep.subr.bf16.mxu0 0
    %257 = vmatpush2.bf16.msra.mxu0 0
    %258 = vmatprep.subr.bf16.mxu0 0
    %259 = vmatpush2.bf16.msra.mxu0 0
    %260 = vmatprep.mubr.bf16.mxu0 0
    %261 = vmatmul.mubr.bf16.gmra.mxu0 %v217
    %v262 = vpop.f32.mrf.mxu0
    %v263 = vadd.f32 %v187, %v262
    %v264 = vpop.f32.mrf.mxu0
    %v265 = vpop.f32.mrf.mxu0
    %v266 = vadd.f32 %v187, %v265
    %v267 = vpop.f32.mrf.mxu0
    %268 = vmatprep.mubr.bf16.mxu0 0
    %269 = vmatmul.mubr.bf16.gmra.mxu0 %v220
    %v270 = vpop.f32.mrf.mxu0
    %v271 = vadd.f32 %v187, %v270
    %v272 = vpop.f32.mrf.mxu0
    %v273 = vpop.f32.mrf.mxu0
    %v274 = vadd.f32 %v187, %v273
    %v275 = vpop.f32.mrf.mxu0
    %276 = vmatprep.mubr.bf16.mxu0 0
    %277 = vmatmul.mubr.bf16.gmra.mxu0 %v223
    %v278 = vpop.f32.mrf.mxu0
    %v279 = vadd.f32 %v187, %v278
    %v280 = vpop.f32.mrf.mxu0
    %v281 = vpop.f32.mrf.mxu0
    %v282 = vadd.f32 %v187, %v281
    %v283 = vpop.f32.mrf.mxu0
    %284 = vmatprep.mubr.bf16.mxu0 0
    %285 = vmatmul.mubr.bf16.gmra.mxu0 %v226
    %v286 = vpop.f32.mrf.mxu0
    %v287 = vadd.f32 %v187, %v286
    %v288 = vpop.f32.mrf.mxu0
    %v289 = vpop.f32.mrf.mxu0
    %v290 = vadd.f32 %v187, %v289
    %v291 = vpop.f32.mrf.mxu0
    %292 = vdwg.mxu0
    %v293 = vld [vmem:[%s15] sm:$0xff]
    %v294 = vld [vmem:[%s15 + $0x8] sm:$0xff]
    %v295 = vld [vmem:[%s15 + $0x10] sm:$0xff]
    %v296 = vld [vmem:[%s15 + $0x18] sm:$0xff]
    %v297 = vld [vmem:[%s15 + $0x20] sm:$0xff]
    %v298 = vld [vmem:[%s15 + $0x28] sm:$0xff]
    %v299 = vld [vmem:[%s15 + $0x30] sm:$0xff]
    %v300 = vld [vmem:[%s15 + $0x38] sm:$0xff]
    %v301 = vld [vmem:[%s15 + $0x40] sm:$0xff]
    %v302 = vld [vmem:[%s15 + $0x48] sm:$0xff]
    %v303 = vld [vmem:[%s15 + $0x50] sm:$0xff]
    %v304 = vld [vmem:[%s15 + $0x58] sm:$0xff]
    %v305 = vld [vmem:[%s17] sm:$0xff]
    %v306 = vld [vmem:[%s17 + $0x8] sm:$0xf]
    %v307 = vld [vmem:[%s11] sm:$0x1]
    %v308 = vld [vmem:[%s13] sm:$0x1]
    %310 = vset.pattern.permute.xlu0 0
    %311 = vperm.xlu0 %310, %v164
    %v312 = vpop.permute.xlu0 %311
    %315 = vset.pattern.permute.xlu0 0
    %316 = vperm.xlu0 %315, %v165
    %v317 = vpop.permute.xlu0 %316
    %320 = vset.pattern.permute.xlu0 0
    %321 = vperm.xlu0 %320, %v166
    %v322 = vpop.permute.xlu0 %321
    %325 = vset.pattern.permute.xlu0 0
    %326 = vperm.xlu0 %325, %v167
    %v327 = vpop.permute.xlu0 %326
    %330 = vset.pattern.permute.xlu0 0
    %331 = vperm.xlu0 %330, %v168
    %v332 = vpop.permute.xlu0 %331
    %335 = vset.pattern.permute.xlu0 0
    %336 = vperm.xlu0 %335, %v169
    %v337 = vpop.permute.xlu0 %336
    %340 = vset.pattern.permute.xlu0 0
    %341 = vperm.xlu0 %340, %v170
    %v342 = vpop.permute.xlu0 %341
    %345 = vset.pattern.permute.xlu0 0
    %346 = vperm.xlu0 %345, %v171
    %v347 = vpop.permute.xlu0 %346
    %v349 = vmul.f32 %v312, %v263
    %v350 = vmul.f32 %v317, %v266
    %v351 = vmul.f32 %v322, %v271
    %v352 = vmul.f32 %v327, %v274
    %v353 = vmul.f32 %v332, %v279
    %v354 = vmul.f32 %v337, %v282
    %v355 = vmul.f32 %v342, %v287
    %v356 = vmul.f32 %v347, %v290
    %vm357 = vcmask 785408
    %v358 = vsel %vm357, %v349, 0.0
    %v359 = vsel %vm357, %v350, 0.0
    %v360 = vadd.f32 %v358, %v359
    %v361 = vsel %vm357, %v351, 0.0
    %v362 = vadd.f32 %v360, %v361
    %v363 = vsel %vm357, %v352, 0.0
    %v364 = vadd.f32 %v362, %v363
    %v365 = vsel %vm357, %v353, 0.0
    %v366 = vadd.f32 %v364, %v365
    %v367 = vsel %vm357, %v354, 0.0
    %v368 = vadd.f32 %v366, %v367
    %v369 = vsel %vm357, %v355, 0.0
    %v370 = vadd.f32 %v368, %v369
    %v371 = vsel %vm357, %v356, 0.0
    %v372 = vadd.f32 %v370, %v371
    %v373 = vrot.slane %v372, 4
    %v374 = vadd.f32 %v372, %v373
    %v375 = vrot.slane %v374, 2
    %v376 = vadd.f32 %v374, %v375
    %v377 = vrot.slane %v376, 1
    %v378 = vadd.f32 %v376, %v377
    %v380 = vsel %vm357, %v378, 0
    %382 = vmatprep.subr.mxu0 0.0
    %383 = vmatpush1.msra.mxu0 0.0
    %384 = vmatprep.subr.mxu0 0.0
    %385 = vmatpush1.msra.mxu0 0.0
    %386 = vmatprep.subr.mxu0 0.0
    %387 = vmatpush1.msra.mxu0 0.0
    %388 = vmatprep.subr.mxu0 0.0
    %389 = vmatpush1.msra.mxu0 0.0
    %390 = vmatprep.subr.mxu0 0.0
    %391 = vmatpush1.msra.mxu0 %v304
    %392 = vmatprep.subr.mxu0 0.0
    %393 = vmatpush1.msra.mxu0 %v303
    %394 = vmatprep.subr.mxu0 0.0
    %395 = vmatpush1.msra.mxu0 %v302
    %396 = vmatprep.subr.mxu0 0.0
    %397 = vmatpush1.msra.mxu0 %v301
    %398 = vmatprep.subr.mxu0 0.0
    %399 = vmatpush1.msra.mxu0 %v300
    %400 = vmatprep.subr.mxu0 0.0
    %401 = vmatpush1.msra.mxu0 %v299
    %402 = vmatprep.subr.mxu0 0.0
    %403 = vmatpush1.msra.mxu0 %v298
    %404 = vmatprep.subr.mxu0 0.0
    %405 = vmatpush1.msra.mxu0 %v297
    %406 = vmatprep.subr.mxu0 0.0
    %407 = vmatpush1.msra.mxu0 %v296
    %408 = vmatprep.subr.mxu0 0.0
    %409 = vmatpush1.msra.mxu0 %v295
    %410 = vmatprep.subr.mxu0 0.0
    %411 = vmatpush1.msra.mxu0 %v294
    %412 = vmatprep.subr.mxu0 0.0
    %413 = vmatpush1.msra.mxu0 %v293
    %414 = vmatprep.subr.mxu0 0.0
    %415 = vmatpush2.msra.mxu0 0.0
    %416 = vmatprep.subr.mxu0 0.0
    %417 = vmatpush2.msra.mxu0 0.0
    %418 = vmatprep.subr.mxu0 0.0
    %419 = vmatpush2.msra.mxu0 0.0
    %420 = vmatprep.subr.mxu0 0.0
    %421 = vmatpush2.msra.mxu0 0.0
    %422 = vmatprep.subr.mxu0 0.0
    %423 = vmatpush2.msra.mxu0 0.0
    %424 = vmatprep.subr.mxu0 0.0
    %425 = vmatpush2.msra.mxu0 0.0
    %426 = vmatprep.subr.mxu0 0.0
    %427 = vmatpush2.msra.mxu0 0.0
    %428 = vmatprep.subr.mxu0 0.0
    %429 = vmatpush2.msra.mxu0 0.0
    %430 = vmatprep.subr.mxu0 0.0
    %431 = vmatpush2.msra.mxu0 0.0
    %432 = vmatprep.subr.mxu0 0.0
    %433 = vmatpush2.msra.mxu0 0.0
    %434 = vmatprep.subr.mxu0 0.0
    %435 = vmatpush2.msra.mxu0 0.0
    %436 = vmatprep.subr.mxu0 0.0
    %437 = vmatpush2.msra.mxu0 0.0
    %438 = vmatprep.subr.mxu0 0.0
    %439 = vmatpush2.msra.mxu0 0.0
    %440 = vmatprep.subr.mxu0 0.0
    %441 = vmatpush2.msra.mxu0 0.0
    %442 = vmatprep.subr.mxu0 0.0
    %443 = vmatpush2.msra.mxu0 0.0
    %444 = vmatprep.subr.mxu0 0.0
    %445 = vmatpush2.msra.mxu0 0.0
    %446 = vmatprep.mubr.f32.mxu0 0.0
    %447 = vmatmul.mubr.f32.gmra.mxu0 %v380
    %v448 = vpop.f32.mrf.mxu0
    %v449 = vadd.f32 0.0, %v448
    %v450 = vpop.f32.mrf.mxu0
    %451 = vdwg.mxu0
    %vm452 = vcmask 97280
    %v454 = vsel %vm452, %v449, 0
    %vm456 = vcmask 1043456
    %v458 = vsel %vm456, %v306, 0
    %460 = vmatprep.subr.mxu0 0.0
    %461 = vmatpush1.msra.mxu0 0.0
    %462 = vmatprep.subr.mxu0 0.0
    %463 = vmatpush1.msra.mxu0 0.0
    %464 = vmatprep.subr.mxu0 0.0
    %465 = vmatpush1.msra.mxu0 0.0
    %466 = vmatprep.subr.mxu0 0.0
    %467 = vmatpush1.msra.mxu0 0.0
    %468 = vmatprep.subr.mxu0 0.0
    %469 = vmatpush1.msra.mxu0 0.0
    %470 = vmatprep.subr.mxu0 0.0
    %471 = vmatpush1.msra.mxu0 0.0
    %472 = vmatprep.subr.mxu0 0.0
    %473 = vmatpush1.msra.mxu0 0.0
    %474 = vmatprep.subr.mxu0 0.0
    %475 = vmatpush1.msra.mxu0 0.0
    %476 = vmatprep.subr.mxu0 0.0
    %477 = vmatpush1.msra.mxu0 0.0
    %478 = vmatprep.subr.mxu0 0.0
    %479 = vmatpush1.msra.mxu0 0.0
    %480 = vmatprep.subr.mxu0 0.0
    %481 = vmatpush1.msra.mxu0 0.0
    %482 = vmatprep.subr.mxu0 0.0
    %483 = vmatpush1.msra.mxu0 0.0
    %484 = vmatprep.subr.mxu0 0.0
    %485 = vmatpush1.msra.mxu0 0.0
    %486 = vmatprep.subr.mxu0 0.0
    %487 = vmatpush1.msra.mxu0 0.0
    %488 = vmatprep.subr.mxu0 0.0
    %489 = vmatpush1.msra.mxu0 %v458
    %490 = vmatprep.subr.mxu0 0.0
    %491 = vmatpush1.msra.mxu0 %v305
    %492 = vmatprep.subr.mxu0 0.0
    %493 = vmatpush2.msra.mxu0 0.0
    %494 = vmatprep.subr.mxu0 0.0
    %495 = vmatpush2.msra.mxu0 0.0
    %496 = vmatprep.subr.mxu0 0.0
    %497 = vmatpush2.msra.mxu0 0.0
    %498 = vmatprep.subr.mxu0 0.0
    %499 = vmatpush2.msra.mxu0 0.0
    %500 = vmatprep.subr.mxu0 0.0
    %501 = vmatpush2.msra.mxu0 0.0
    %502 = vmatprep.subr.mxu0 0.0
    %503 = vmatpush2.msra.mxu0 0.0
    %504 = vmatprep.subr.mxu0 0.0
    %505 = vmatpush2.msra.mxu0 0.0
    %506 = vmatprep.subr.mxu0 0.0
    %507 = vmatpush2.msra.mxu0 0.0
    %508 = vmatprep.subr.mxu0 0.0
    %509 = vmatpush2.msra.mxu0 0.0
    %510 = vmatprep.subr.mxu0 0.0
    %511 = vmatpush2.msra.mxu0 0.0
    %512 = vmatprep.subr.mxu0 0.0
    %513 = vmatpush2.msra.mxu0 0.0
    %514 = vmatprep.subr.mxu0 0.0
    %515 = vmatpush2.msra.mxu0 0.0
    %516 = vmatprep.subr.mxu0 0.0
    %517 = vmatpush2.msra.mxu0 0.0
    %518 = vmatprep.subr.mxu0 0.0
    %519 = vmatpush2.msra.mxu0 0.0
    %520 = vmatprep.subr.mxu0 0.0
    %521 = vmatpush2.msra.mxu0 0.0
    %522 = vmatprep.subr.mxu0 0.0
    %523 = vmatpush2.msra.mxu0 0.0
    %524 = vmatprep.mubr.f32.mxu0 0.0
    %525 = vmatmul.mubr.f32.gmra.mxu0 %v454
    %v526 = vpop.f32.mrf.mxu0
    %v527 = vadd.f32 0.0, %v526
    %v528 = vpop.f32.mrf.mxu0
    %529 = vdwg.mxu0
    %v530 = vlaneseq
    %v531 = vshrl.u32 %v530, 7
    %v532 = vsub.s32 0, %v531
    %v533 = vrot.slane %v527, %v532
    %v534 = vsub.f32 %v263, %v533
    %v535 = vsub.f32 %v266, %v533
    %v536 = vsub.f32 %v271, %v533
    %v537 = vsub.f32 %v274, %v533
    %v538 = vsub.f32 %v279, %v533
    %v539 = vsub.f32 %v282, %v533
    %v540 = vsub.f32 %v287, %v533
    %v541 = vsub.f32 %v290, %v533
    %v542 = vmul.f32 %v534, %v534
    %v543 = vmul.f32 %v535, %v535
    %v544 = vmul.f32 %v536, %v536
    %v545 = vmul.f32 %v537, %v537
    %v546 = vmul.f32 %v538, %v538
    %v547 = vmul.f32 %v539, %v539
    %v548 = vmul.f32 %v540, %v540
    %v549 = vmul.f32 %v541, %v541
    %v550 = vmul.f32 %v312, %v542
    %v551 = vmul.f32 %v317, %v543
    %v552 = vmul.f32 %v322, %v544
    %v553 = vmul.f32 %v327, %v545
    %v554 = vmul.f32 %v332, %v546
    %v555 = vmul.f32 %v337, %v547
    %v556 = vmul.f32 %v342, %v548
    %v557 = vmul.f32 %v347, %v549
    %v558 = vsel %vm357, %v550, 0.0
    %v559 = vsel %vm357, %v551, 0.0
    %v560 = vadd.f32 %v558, %v559
    %v561 = vsel %vm357, %v552, 0.0
    %v562 = vadd.f32 %v560, %v561
    %v563 = vsel %vm357, %v553, 0.0
    %v564 = vadd.f32 %v562, %v563
    %v565 = vsel %vm357, %v554, 0.0
    %v566 = vadd.f32 %v564, %v565
    %v567 = vsel %vm357, %v555, 0.0
    %v568 = vadd.f32 %v566, %v567
    %v569 = vsel %vm357, %v556, 0.0
    %v570 = vadd.f32 %v568, %v569
    %v571 = vsel %vm357, %v557, 0.0
    %v572 = vadd.f32 %v570, %v571
    %v573 = vrot.slane %v572, 4
    %v574 = vadd.f32 %v572, %v573
    %v575 = vrot.slane %v574, 2
    %v576 = vadd.f32 %v574, %v575
    %v577 = vrot.slane %v576, 1
    %v578 = vadd.f32 %v576, %v577
    %v580 = vsel %vm357, %v578, 0
    %582 = vmatprep.subr.mxu0 0.0
    %583 = vmatpush1.msra.mxu0 0.0
    %584 = vmatprep.subr.mxu0 0.0
    %585 = vmatpush1.msra.mxu0 0.0
    %586 = vmatprep.subr.mxu0 0.0
    %587 = vmatpush1.msra.mxu0 0.0
    %588 = vmatprep.subr.mxu0 0.0
    %589 = vmatpush1.msra.mxu0 0.0
    %590 = vmatprep.subr.mxu0 0.0
    %591 = vmatpush1.msra.mxu0 %v304
    %592 = vmatprep.subr.mxu0 0.0
    %593 = vmatpush1.msra.mxu0 %v303
    %594 = vmatprep.subr.mxu0 0.0
    %595 = vmatpush1.msra.mxu0 %v302
    %596 = vmatprep.subr.mxu0 0.0
    %597 = vmatpush1.msra.mxu0 %v301
    %598 = vmatprep.subr.mxu0 0.0
    %599 = vmatpush1.msra.mxu0 %v300
    %600 = vmatprep.subr.mxu0 0.0
    %601 = vmatpush1.msra.mxu0 %v299
    %602 = vmatprep.subr.mxu0 0.0
    %603 = vmatpush1.msra.mxu0 %v298
    %604 = vmatprep.subr.mxu0 0.0
    %605 = vmatpush1.msra.mxu0 %v297
    %606 = vmatprep.subr.mxu0 0.0
    %607 = vmatpush1.msra.mxu0 %v296
    %608 = vmatprep.subr.mxu0 0.0
    %609 = vmatpush1.msra.mxu0 %v295
    %610 = vmatprep.subr.mxu0 0.0
    %611 = vmatpush1.msra.mxu0 %v294
    %612 = vmatprep.subr.mxu0 0.0
    %613 = vmatpush1.msra.mxu0 %v293
    %614 = vmatprep.subr.mxu0 0.0
    %615 = vmatpush2.msra.mxu0 0.0
    %616 = vmatprep.subr.mxu0 0.0
    %617 = vmatpush2.msra.mxu0 0.0
    %618 = vmatprep.subr.mxu0 0.0
    %619 = vmatpush2.msra.mxu0 0.0
    %620 = vmatprep.subr.mxu0 0.0
    %621 = vmatpush2.msra.mxu0 0.0
    %622 = vmatprep.subr.mxu0 0.0
    %623 = vmatpush2.msra.mxu0 0.0
    %624 = vmatprep.subr.mxu0 0.0
    %625 = vmatpush2.msra.mxu0 0.0
    %626 = vmatprep.subr.mxu0 0.0
    %627 = vmatpush2.msra.mxu0 0.0
    %628 = vmatprep.subr.mxu0 0.0
    %629 = vmatpush2.msra.mxu0 0.0
    %630 = vmatprep.subr.mxu0 0.0
    %631 = vmatpush2.msra.mxu0 0.0
    %632 = vmatprep.subr.mxu0 0.0
    %633 = vmatpush2.msra.mxu0 0.0
    %634 = vmatprep.subr.mxu0 0.0
    %635 = vmatpush2.msra.mxu0 0.0
    %636 = vmatprep.subr.mxu0 0.0
    %637 = vmatpush2.msra.mxu0 0.0
    %638 = vmatprep.subr.mxu0 0.0
    %639 = vmatpush2.msra.mxu0 0.0
    %640 = vmatprep.subr.mxu0 0.0
    %641 = vmatpush2.msra.mxu0 0.0
    %642 = vmatprep.subr.mxu0 0.0
    %643 = vmatpush2.msra.mxu0 0.0
    %644 = vmatprep.subr.mxu0 0.0
    %645 = vmatpush2.msra.mxu0 0.0
    %646 = vmatprep.mubr.f32.mxu0 0.0
    %647 = vmatmul.mubr.f32.gmra.mxu0 %v580
    %v648 = vpop.f32.mrf.mxu0
    %v649 = vadd.f32 1e-05, %v648
    %v650 = vpop.f32.mrf.mxu0
    %651 = vdwg.mxu0
    %v652 = vrsqrt.pop %v649
    %v654 = vsel %vm452, %v652, 0
    %656 = vmatprep.subr.mxu0 0.0
    %657 = vmatpush1.msra.mxu0 0.0
    %658 = vmatprep.subr.mxu0 0.0
    %659 = vmatpush1.msra.mxu0 0.0
    %660 = vmatprep.subr.mxu0 0.0
    %661 = vmatpush1.msra.mxu0 0.0
    %662 = vmatprep.subr.mxu0 0.0
    %663 = vmatpush1.msra.mxu0 0.0
    %664 = vmatprep.subr.mxu0 0.0
    %665 = vmatpush1.msra.mxu0 0.0
    %666 = vmatprep.subr.mxu0 0.0
    %667 = vmatpush1.msra.mxu0 0.0
    %668 = vmatprep.subr.mxu0 0.0
    %669 = vmatpush1.msra.mxu0 0.0
    %670 = vmatprep.subr.mxu0 0.0
    %671 = vmatpush1.msra.mxu0 0.0
    %672 = vmatprep.subr.mxu0 0.0
    %673 = vmatpush1.msra.mxu0 0.0
    %674 = vmatprep.subr.mxu0 0.0
    %675 = vmatpush1.msra.mxu0 0.0
    %676 = vmatprep.subr.mxu0 0.0
    %677 = vmatpush1.msra.mxu0 0.0
    %678 = vmatprep.subr.mxu0 0.0
    %679 = vmatpush1.msra.mxu0 0.0
    %680 = vmatprep.subr.mxu0 0.0
    %681 = vmatpush1.msra.mxu0 0.0
    %682 = vmatprep.subr.mxu0 0.0
    %683 = vmatpush1.msra.mxu0 0.0
    %684 = vmatprep.subr.mxu0 0.0
    %685 = vmatpush1.msra.mxu0 %v458
    %686 = vmatprep.subr.mxu0 0.0
    %687 = vmatpush1.msra.mxu0 %v305
    %688 = vmatprep.subr.mxu0 0.0
    %689 = vmatpush2.msra.mxu0 0.0
    %690 = vmatprep.subr.mxu0 0.0
    %691 = vmatpush2.msra.mxu0 0.0
    %692 = vmatprep.subr.mxu0 0.0
    %693 = vmatpush2.msra.mxu0 0.0
    %694 = vmatprep.subr.mxu0 0.0
    %695 = vmatpush2.msra.mxu0 0.0
    %696 = vmatprep.subr.mxu0 0.0
    %697 = vmatpush2.msra.mxu0 0.0
    %698 = vmatprep.subr.mxu0 0.0
    %699 = vmatpush2.msra.mxu0 0.0
    %700 = vmatprep.subr.mxu0 0.0
    %701 = vmatpush2.msra.mxu0 0.0
    %702 = vmatprep.subr.mxu0 0.0
    %703 = vmatpush2.msra.mxu0 0.0
    %704 = vmatprep.subr.mxu0 0.0
    %705 = vmatpush2.msra.mxu0 0.0
    %706 = vmatprep.subr.mxu0 0.0
    %707 = vmatpush2.msra.mxu0 0.0
    %708 = vmatprep.subr.mxu0 0.0
    %709 = vmatpush2.msra.mxu0 0.0
    %710 = vmatprep.subr.mxu0 0.0
    %711 = vmatpush2.msra.mxu0 0.0
    %712 = vmatprep.subr.mxu0 0.0
    %713 = vmatpush2.msra.mxu0 0.0
    %714 = vmatprep.subr.mxu0 0.0
    %715 = vmatpush2.msra.mxu0 0.0
    %716 = vmatprep.subr.mxu0 0.0
    %717 = vmatpush2.msra.mxu0 0.0
    %718 = vmatprep.subr.mxu0 0.0
    %719 = vmatpush2.msra.mxu0 0.0
    %720 = vmatprep.mubr.f32.mxu0 0.0
    %721 = vmatmul.mubr.f32.gmra.mxu0 %v654
    %v722 = vpop.f32.mrf.mxu0
    %v723 = vadd.f32 0.0, %v722
    %v724 = vpop.f32.mrf.mxu0
    %725 = vdwg.mxu0
    %v727 = vlaneseq
    %v728 = vshrl.u32 %v727, 7
    %v729 = vsub.s32 0, %v728
    %v730 = vrot.slane %v307, %v729
    %v732 = vmul.f32 %v730, %v534
    %v733 = vmul.f32 %v730, %v535
    %v734 = vmul.f32 %v730, %v536
    %v735 = vmul.f32 %v730, %v537
    %v736 = vmul.f32 %v730, %v538
    %v737 = vmul.f32 %v730, %v539
    %v738 = vmul.f32 %v730, %v540
    %v739 = vmul.f32 %v730, %v541
    %v740 = vlaneseq
    %v741 = vshrl.u32 %v740, 7
    %v742 = vsub.s32 0, %v741
    %v743 = vrot.slane %v723, %v742
    %v744 = vmul.f32 %v732, %v743
    %v745 = vmul.f32 %v733, %v743
    %v746 = vmul.f32 %v734, %v743
    %v747 = vmul.f32 %v735, %v743
    %v748 = vmul.f32 %v736, %v743
    %v749 = vmul.f32 %v737, %v743
    %v750 = vmul.f32 %v738, %v743
    %v751 = vmul.f32 %v739, %v743
    %v753 = vlaneseq
    %v754 = vshrl.u32 %v753, 7
    %v755 = vsub.s32 0, %v754
    %v756 = vrot.slane %v308, %v755
    %v758 = vadd.f32 %v744, %v756
    %v759 = vadd.f32 %v745, %v756
    %v760 = vadd.f32 %v746, %v756
    %v761 = vadd.f32 %v747, %v756
    %v762 = vadd.f32 %v748, %v756
    %v763 = vadd.f32 %v749, %v756
    %v764 = vadd.f32 %v750, %v756
    %v765 = vadd.f32 %v751, %v756
    %vm766 = vcmp.gt.f32.partialorder %v758, 0.0
    %vm767 = vcmp.gt.f32.partialorder %v759, 0.0
    %vm768 = vcmp.gt.f32.partialorder %v760, 0.0
    %vm769 = vcmp.gt.f32.partialorder %v761, 0.0
    %vm770 = vcmp.gt.f32.partialorder %v762, 0.0
    %vm771 = vcmp.gt.f32.partialorder %v763, 0.0
    %vm772 = vcmp.gt.f32.partialorder %v764, 0.0
    %vm773 = vcmp.gt.f32.partialorder %v765, 0.0
    %v774 = vmin.f32 %v758, 0.0
    %v775 = vmin.f32 %v759, 0.0
    %v776 = vmin.f32 %v760, 0.0
    %v777 = vmin.f32 %v761, 0.0
    %v778 = vmin.f32 %v762, 0.0
    %v779 = vmin.f32 %v763, 0.0
    %v780 = vmin.f32 %v764, 0.0
    %v781 = vmin.f32 %v765, 0.0
    %v782 = vmul.f32 %v774, 1.442695
    %v783 = vpow.pop %v782
    %v784 = vmul.f32 %v775, 1.442695
    %v785 = vpow.pop %v784
    %v786 = vmul.f32 %v776, 1.442695
    %v787 = vpow.pop %v786
    %v788 = vmul.f32 %v777, 1.442695
    %v789 = vpow.pop %v788
    %v790 = vmul.f32 %v778, 1.442695
    %v791 = vpow.pop %v790
    %v792 = vmul.f32 %v779, 1.442695
    %v793 = vpow.pop %v792
    %v794 = vmul.f32 %v780, 1.442695
    %v795 = vpow.pop %v794
    %v796 = vmul.f32 %v781, 1.442695
    %v797 = vpow.pop %v796
    %v798 = vsub.f32 %v783, 1.0
    %v799 = vsub.f32 %v785, 1.0
    %v800 = vsub.f32 %v787, 1.0
    %v801 = vsub.f32 %v789, 1.0
    %v802 = vsub.f32 %v791, 1.0
    %v803 = vsub.f32 %v793, 1.0
    %v804 = vsub.f32 %v795, 1.0
    %v805 = vsub.f32 %v797, 1.0
    %v806 = vsel %vm766, %v758, %v798
    %v807 = vsel %vm767, %v759, %v799
    %v808 = vsel %vm768, %v760, %v800
    %v809 = vsel %vm769, %v761, %v801
    %v810 = vsel %vm770, %v762, %v802
    %v811 = vsel %vm771, %v763, %v803
    %v812 = vsel %vm772, %v764, %v804
    %v813 = vsel %vm773, %v765, %v805
    %v814 = vpack.c.bf16 %v807, %v806
    %v815 = vpack.c.bf16 %v809, %v808
    %v816 = vpack.c.bf16 %v811, %v810
    %v817 = vpack.c.bf16 %v813, %v812
    %v818 = vld [vmem:[%s19] sm:$0xf]
    %v819 = vld [vmem:[%s19 + $0x4] sm:$0xf]
    %v820 = vld [vmem:[%s19 + $0x8] sm:$0xf]
    %v821 = vld [vmem:[%s19 + $0xc] sm:$0xf]
    %v822 = vld [vmem:[%s19 + $0x10] sm:$0xf]
    %v823 = vld [vmem:[%s19 + $0x14] sm:$0xf]
    %v824 = vld [vmem:[%s19 + $0x18] sm:$0xf]
    %v825 = vld [vmem:[%s19 + $0x1c] sm:$0xf]
    %v826 = vld [vmem:[%s19 + $0x20] sm:$0xf]
    %v827 = vld [vmem:[%s19 + $0x24] sm:$0xf]
    %v828 = vld [vmem:[%s19 + $0x28] sm:$0xf]
    %v829 = vld [vmem:[%s19 + $0x2c] sm:$0xf]
    %v830 = vld [vmem:[%s21] sm:$0x1]
    %v832 = vlaneseq
    %v833 = vshrl.u32 %v832, 7
    %v834 = vsub.s32 0, %v833
    %v835 = vrot.slane %v830, %v834
    %v849 = vunpack.c.l.b16 %v818
    %v850 = vunpack.c.l.b16 %v819
    %v851 = vunpack.c.l.b16 %v820
    %v852 = vunpack.c.l.b16 %v821
    %v853 = vunpack.c.l.b16 %v822
    %v854 = vunpack.c.l.b16 %v823
    %v855 = vunpack.c.l.b16 %v824
    %v856 = vunpack.c.l.b16 %v825
    %v857 = vunpack.c.l.b16 %v826
    %v858 = vunpack.c.l.b16 %v827
    %v859 = vunpack.c.l.b16 %v828
    %v860 = vunpack.c.l.b16 %v829
    %v861 = vpack.c.b16 %v850, %v849
    %v862 = vpack.c.b16 %v852, %v851
    %v863 = vpack.c.b16 %v854, %v853
    %v864 = vpack.c.b16 %v856, %v855
    %v865 = vpack.c.b16 %v858, %v857
    %v866 = vpack.c.b16 %v860, %v859
    %v874 = vsel %vm357, %v814, 0
    %v877 = vsel %vm357, %v815, 0
    %v880 = vsel %vm357, %v816, 0
    %v883 = vsel %vm357, %v817, 0
    %885 = vmatprep.subr.bf16.mxu0 0
    %886 = vmatpush1.bf16.msra.mxu0 0
    %887 = vmatprep.subr.bf16.mxu0 0
    %888 = vmatpush1.bf16.msra.mxu0 0
    %889 = vmatprep.subr.bf16.mxu0 0
    %890 = vmatpush1.bf16.msra.mxu0 %v866
    %891 = vmatprep.subr.bf16.mxu0 0
    %892 = vmatpush1.bf16.msra.mxu0 %v865
    %893 = vmatprep.subr.bf16.mxu0 0
    %894 = vmatpush1.bf16.msra.mxu0 %v864
    %895 = vmatprep.subr.bf16.mxu0 0
    %896 = vmatpush1.bf16.msra.mxu0 %v863
    %897 = vmatprep.subr.bf16.mxu0 0
    %898 = vmatpush1.bf16.msra.mxu0 %v862
    %899 = vmatprep.subr.bf16.mxu0 0
    %900 = vmatpush1.bf16.msra.mxu0 %v861
    %901 = vmatprep.subr.bf16.mxu0 0
    %902 = vmatpush2.bf16.msra.mxu0 0
    %903 = vmatprep.subr.bf16.mxu0 0
    %904 = vmatpush2.bf16.msra.mxu0 0
    %905 = vmatprep.subr.bf16.mxu0 0
    %906 = vmatpush2.bf16.msra.mxu0 0
    %907 = vmatprep.subr.bf16.mxu0 0
    %908 = vmatpush2.bf16.msra.mxu0 0
    %909 = vmatprep.subr.bf16.mxu0 0
    %910 = vmatpush2.bf16.msra.mxu0 0
    %911 = vmatprep.subr.bf16.mxu0 0
    %912 = vmatpush2.bf16.msra.mxu0 0
    %913 = vmatprep.subr.bf16.mxu0 0
    %914 = vmatpush2.bf16.msra.mxu0 0
    %915 = vmatprep.subr.bf16.mxu0 0
    %916 = vmatpush2.bf16.msra.mxu0 0
    %917 = vmatprep.mubr.bf16.mxu0 0
    %918 = vmatmul.mubr.bf16.gmra.mxu0 %v874
    %v919 = vpop.f32.mrf.mxu0
    %v920 = vadd.f32 %v835, %v919
    %v921 = vpop.f32.mrf.mxu0
    %v922 = vpop.f32.mrf.mxu0
    %v923 = vadd.f32 %v835, %v922
    %v924 = vpop.f32.mrf.mxu0
    %925 = vmatprep.mubr.bf16.mxu0 0
    %926 = vmatmul.mubr.bf16.gmra.mxu0 %v877
    %v927 = vpop.f32.mrf.mxu0
    %v928 = vadd.f32 %v835, %v927
    %v929 = vpop.f32.mrf.mxu0
    %v930 = vpop.f32.mrf.mxu0
    %v931 = vadd.f32 %v835, %v930
    %v932 = vpop.f32.mrf.mxu0
    %933 = vmatprep.mubr.bf16.mxu0 0
    %934 = vmatmul.mubr.bf16.gmra.mxu0 %v880
    %v935 = vpop.f32.mrf.mxu0
    %v936 = vadd.f32 %v835, %v935
    %v937 = vpop.f32.mrf.mxu0
    %v938 = vpop.f32.mrf.mxu0
    %v939 = vadd.f32 %v835, %v938
    %v940 = vpop.f32.mrf.mxu0
    %941 = vmatprep.mubr.bf16.mxu0 0
    %942 = vmatmul.mubr.bf16.gmra.mxu0 %v883
    %v943 = vpop.f32.mrf.mxu0
    %v944 = vadd.f32 %v835, %v943
    %v945 = vpop.f32.mrf.mxu0
    %v946 = vpop.f32.mrf.mxu0
    %v947 = vadd.f32 %v835, %v946
    %v948 = vpop.f32.mrf.mxu0
    %949 = vdwg.mxu0
    %v950 = vld [vmem:[%s27] sm:$0xff]
    %v951 = vld [vmem:[%s27 + $0x8] sm:$0xff]
    %v952 = vld [vmem:[%s27 + $0x10] sm:$0xff]
    %v953 = vld [vmem:[%s27 + $0x18] sm:$0xff]
    %v954 = vld [vmem:[%s29] sm:$0xf]
    %v955 = vld [vmem:[%s23] sm:$0x1]
    %v956 = vld [vmem:[%s25] sm:$0x1]
    %v957 = vmul.f32 %v312, %v920
    %v958 = vmul.f32 %v317, %v923
    %v959 = vmul.f32 %v322, %v928
    %v960 = vmul.f32 %v327, %v931
    %v961 = vmul.f32 %v332, %v936
    %v962 = vmul.f32 %v337, %v939
    %v963 = vmul.f32 %v342, %v944
    %v964 = vmul.f32 %v347, %v947
    %vm965 = vcmask 261120
    %v966 = vsel %vm965, %v957, 0.0
    %v967 = vsel %vm965, %v958, 0.0
    %v968 = vadd.f32 %v966, %v967
    %v969 = vsel %vm965, %v959, 0.0
    %v970 = vadd.f32 %v968, %v969
    %v971 = vsel %vm965, %v960, 0.0
    %v972 = vadd.f32 %v970, %v971
    %v973 = vsel %vm965, %v961, 0.0
    %v974 = vadd.f32 %v972, %v973
    %v975 = vsel %vm965, %v962, 0.0
    %v976 = vadd.f32 %v974, %v975
    %v977 = vsel %vm965, %v963, 0.0
    %v978 = vadd.f32 %v976, %v977
    %v979 = vsel %vm965, %v964, 0.0
    %v980 = vadd.f32 %v978, %v979
    %v981 = vrot.slane %v980, 4
    %v982 = vadd.f32 %v980, %v981
    %v983 = vrot.slane %v982, 2
    %v984 = vadd.f32 %v982, %v983
    %v985 = vrot.slane %v984, 1
    %v986 = vadd.f32 %v984, %v985
    %v988 = vsel %vm965, %v986, 0
    %990 = vmatprep.subr.mxu0 0.0
    %991 = vmatpush1.msra.mxu0 0.0
    %992 = vmatprep.subr.mxu0 0.0
    %993 = vmatpush1.msra.mxu0 0.0
    %994 = vmatprep.subr.mxu0 0.0
    %995 = vmatpush1.msra.mxu0 0.0
    %996 = vmatprep.subr.mxu0 0.0
    %997 = vmatpush1.msra.mxu0 0.0
    %998 = vmatprep.subr.mxu0 0.0
    %999 = vmatpush1.msra.mxu0 0.0
    %1000 = vmatprep.subr.mxu0 0.0
    %1001 = vmatpush1.msra.mxu0 0.0
    %1002 = vmatprep.subr.mxu0 0.0
    %1003 = vmatpush1.msra.mxu0 0.0
    %1004 = vmatprep.subr.mxu0 0.0
    %1005 = vmatpush1.msra.mxu0 0.0
    %1006 = vmatprep.subr.mxu0 0.0
    %1007 = vmatpush1.msra.mxu0 0.0
    %1008 = vmatprep.subr.mxu0 0.0
    %1009 = vmatpush1.msra.mxu0 0.0
    %1010 = vmatprep.subr.mxu0 0.0
    %1011 = vmatpush1.msra.mxu0 0.0
    %1012 = vmatprep.subr.mxu0 0.0
    %1013 = vmatpush1.msra.mxu0 0.0
    %1014 = vmatprep.subr.mxu0 0.0
    %1015 = vmatpush1.msra.mxu0 %v953
    %1016 = vmatprep.subr.mxu0 0.0
    %1017 = vmatpush1.msra.mxu0 %v952
    %1018 = vmatprep.subr.mxu0 0.0
    %1019 = vmatpush1.msra.mxu0 %v951
    %1020 = vmatprep.subr.mxu0 0.0
    %1021 = vmatpush1.msra.mxu0 %v950
    %1022 = vmatprep.subr.mxu0 0.0
    %1023 = vmatpush2.msra.mxu0 0.0
    %1024 = vmatprep.subr.mxu0 0.0
    %1025 = vmatpush2.msra.mxu0 0.0
    %1026 = vmatprep.subr.mxu0 0.0
    %1027 = vmatpush2.msra.mxu0 0.0
    %1028 = vmatprep.subr.mxu0 0.0
    %1029 = vmatpush2.msra.mxu0 0.0
    %1030 = vmatprep.subr.mxu0 0.0
    %1031 = vmatpush2.msra.mxu0 0.0
    %1032 = vmatprep.subr.mxu0 0.0
    %1033 = vmatpush2.msra.mxu0 0.0
    %1034 = vmatprep.subr.mxu0 0.0
    %1035 = vmatpush2.msra.mxu0 0.0
    %1036 = vmatprep.subr.mxu0 0.0
    %1037 = vmatpush2.msra.mxu0 0.0
    %1038 = vmatprep.subr.mxu0 0.0
    %1039 = vmatpush2.msra.mxu0 0.0
    %1040 = vmatprep.subr.mxu0 0.0
    %1041 = vmatpush2.msra.mxu0 0.0
    %1042 = vmatprep.subr.mxu0 0.0
    %1043 = vmatpush2.msra.mxu0 0.0
    %1044 = vmatprep.subr.mxu0 0.0
    %1045 = vmatpush2.msra.mxu0 0.0
    %1046 = vmatprep.subr.mxu0 0.0
    %1047 = vmatpush2.msra.mxu0 0.0
    %1048 = vmatprep.subr.mxu0 0.0
    %1049 = vmatpush2.msra.mxu0 0.0
    %1050 = vmatprep.subr.mxu0 0.0
    %1051 = vmatpush2.msra.mxu0 0.0
    %1052 = vmatprep.subr.mxu0 0.0
    %1053 = vmatpush2.msra.mxu0 0.0
    %1054 = vmatprep.mubr.f32.mxu0 0.0
    %1055 = vmatmul.mubr.f32.gmra.mxu0 %v988
    %v1056 = vpop.f32.mrf.mxu0
    %v1057 = vadd.f32 0.0, %v1056
    %v1058 = vpop.f32.mrf.mxu0
    %1059 = vdwg.mxu0
    %vm1060 = vcmask 31744
    %v1062 = vsel %vm1060, %v1057, 0
    %v1065 = vsel %vm456, %v954, 0
    %1067 = vmatprep.subr.mxu0 0.0
    %1068 = vmatpush1.msra.mxu0 0.0
    %1069 = vmatprep.subr.mxu0 0.0
    %1070 = vmatpush1.msra.mxu0 0.0
    %1071 = vmatprep.subr.mxu0 0.0
    %1072 = vmatpush1.msra.mxu0 0.0
    %1073 = vmatprep.subr.mxu0 0.0
    %1074 = vmatpush1.msra.mxu0 0.0
    %1075 = vmatprep.subr.mxu0 0.0
    %1076 = vmatpush1.msra.mxu0 0.0
    %1077 = vmatprep.subr.mxu0 0.0
    %1078 = vmatpush1.msra.mxu0 0.0
    %1079 = vmatprep.subr.mxu0 0.0
    %1080 = vmatpush1.msra.mxu0 0.0
    %1081 = vmatprep.subr.mxu0 0.0
    %1082 = vmatpush1.msra.mxu0 0.0
    %1083 = vmatprep.subr.mxu0 0.0
    %1084 = vmatpush1.msra.mxu0 0.0
    %1085 = vmatprep.subr.mxu0 0.0
    %1086 = vmatpush1.msra.mxu0 0.0
    %1087 = vmatprep.subr.mxu0 0.0
    %1088 = vmatpush1.msra.mxu0 0.0
    %1089 = vmatprep.subr.mxu0 0.0
    %1090 = vmatpush1.msra.mxu0 0.0
    %1091 = vmatprep.subr.mxu0 0.0
    %1092 = vmatpush1.msra.mxu0 0.0
    %1093 = vmatprep.subr.mxu0 0.0
    %1094 = vmatpush1.msra.mxu0 0.0
    %1095 = vmatprep.subr.mxu0 0.0
    %1096 = vmatpush1.msra.mxu0 0.0
    %1097 = vmatprep.subr.mxu0 0.0
    %1098 = vmatpush1.msra.mxu0 %v1065
    %1099 = vmatprep.subr.mxu0 0.0
    %1100 = vmatpush2.msra.mxu0 0.0
    %1101 = vmatprep.subr.mxu0 0.0
    %1102 = vmatpush2.msra.mxu0 0.0
    %1103 = vmatprep.subr.mxu0 0.0
    %1104 = vmatpush2.msra.mxu0 0.0
    %1105 = vmatprep.subr.mxu0 0.0
    %1106 = vmatpush2.msra.mxu0 0.0
    %1107 = vmatprep.subr.mxu0 0.0
    %1108 = vmatpush2.msra.mxu0 0.0
    %1109 = vmatprep.subr.mxu0 0.0
    %1110 = vmatpush2.msra.mxu0 0.0
    %1111 = vmatprep.subr.mxu0 0.0
    %1112 = vmatpush2.msra.mxu0 0.0
    %1113 = vmatprep.subr.mxu0 0.0
    %1114 = vmatpush2.msra.mxu0 0.0
    %1115 = vmatprep.subr.mxu0 0.0
    %1116 = vmatpush2.msra.mxu0 0.0
    %1117 = vmatprep.subr.mxu0 0.0
    %1118 = vmatpush2.msra.mxu0 0.0
    %1119 = vmatprep.subr.mxu0 0.0
    %1120 = vmatpush2.msra.mxu0 0.0
    %1121 = vmatprep.subr.mxu0 0.0
    %1122 = vmatpush2.msra.mxu0 0.0
    %1123 = vmatprep.subr.mxu0 0.0
    %1124 = vmatpush2.msra.mxu0 0.0
    %1125 = vmatprep.subr.mxu0 0.0
    %1126 = vmatpush2.msra.mxu0 0.0
    %1127 = vmatprep.subr.mxu0 0.0
    %1128 = vmatpush2.msra.mxu0 0.0
    %1129 = vmatprep.subr.mxu0 0.0
    %1130 = vmatpush2.msra.mxu0 0.0
    %1131 = vmatprep.mubr.f32.mxu0 0.0
    %1132 = vmatmul.mubr.f32.gmra.mxu0 %v1062
    %v1133 = vpop.f32.mrf.mxu0
    %v1134 = vadd.f32 0.0, %v1133
    %v1135 = vpop.f32.mrf.mxu0
    %1136 = vdwg.mxu0
    %v1137 = vlaneseq
    %v1138 = vshrl.u32 %v1137, 7
    %v1139 = vsub.s32 0, %v1138
    %v1140 = vrot.slane %v1134, %v1139
    %v1141 = vsub.f32 %v920, %v1140
    %v1142 = vsub.f32 %v923, %v1140
    %v1143 = vsub.f32 %v928, %v1140
    %v1144 = vsub.f32 %v931, %v1140
    %v1145 = vsub.f32 %v936, %v1140
    %v1146 = vsub.f32 %v939, %v1140
    %v1147 = vsub.f32 %v944, %v1140
    %v1148 = vsub.f32 %v947, %v1140
    %v1149 = vmul.f32 %v1141, %v1141
    %v1150 = vmul.f32 %v1142, %v1142
    %v1151 = vmul.f32 %v1143, %v1143
    %v1152 = vmul.f32 %v1144, %v1144
    %v1153 = vmul.f32 %v1145, %v1145
    %v1154 = vmul.f32 %v1146, %v1146
    %v1155 = vmul.f32 %v1147, %v1147
    %v1156 = vmul.f32 %v1148, %v1148
    %v1157 = vmul.f32 %v312, %v1149
    %v1158 = vmul.f32 %v317, %v1150
    %v1159 = vmul.f32 %v322, %v1151
    %v1160 = vmul.f32 %v327, %v1152
    %v1161 = vmul.f32 %v332, %v1153
    %v1162 = vmul.f32 %v337, %v1154
    %v1163 = vmul.f32 %v342, %v1155
    %v1164 = vmul.f32 %v347, %v1156
    %v1165 = vsel %vm965, %v1157, 0.0
    %v1166 = vsel %vm965, %v1158, 0.0
    %v1167 = vadd.f32 %v1165, %v1166
    %v1168 = vsel %vm965, %v1159, 0.0
    %v1169 = vadd.f32 %v1167, %v1168
    %v1170 = vsel %vm965, %v1160, 0.0
    %v1171 = vadd.f32 %v1169, %v1170
    %v1172 = vsel %vm965, %v1161, 0.0
    %v1173 = vadd.f32 %v1171, %v1172
    %v1174 = vsel %vm965, %v1162, 0.0
    %v1175 = vadd.f32 %v1173, %v1174
    %v1176 = vsel %vm965, %v1163, 0.0
    %v1177 = vadd.f32 %v1175, %v1176
    %v1178 = vsel %vm965, %v1164, 0.0
    %v1179 = vadd.f32 %v1177, %v1178
    %v1180 = vrot.slane %v1179, 4
    %v1181 = vadd.f32 %v1179, %v1180
    %v1182 = vrot.slane %v1181, 2
    %v1183 = vadd.f32 %v1181, %v1182
    %v1184 = vrot.slane %v1183, 1
    %v1185 = vadd.f32 %v1183, %v1184
    %v1187 = vsel %vm965, %v1185, 0
    %1189 = vmatprep.subr.mxu0 0.0
    %1190 = vmatpush1.msra.mxu0 0.0
    %1191 = vmatprep.subr.mxu0 0.0
    %1192 = vmatpush1.msra.mxu0 0.0
    %1193 = vmatprep.subr.mxu0 0.0
    %1194 = vmatpush1.msra.mxu0 0.0
    %1195 = vmatprep.subr.mxu0 0.0
    %1196 = vmatpush1.msra.mxu0 0.0
    %1197 = vmatprep.subr.mxu0 0.0
    %1198 = vmatpush1.msra.mxu0 0.0
    %1199 = vmatprep.subr.mxu0 0.0
    %1200 = vmatpush1.msra.mxu0 0.0
    %1201 = vmatprep.subr.mxu0 0.0
    %1202 = vmatpush1.msra.mxu0 0.0
    %1203 = vmatprep.subr.mxu0 0.0
    %1204 = vmatpush1.msra.mxu0 0.0
    %1205 = vmatprep.subr.mxu0 0.0
    %1206 = vmatpush1.msra.mxu0 0.0
    %1207 = vmatprep.subr.mxu0 0.0
    %1208 = vmatpush1.msra.mxu0 0.0
    %1209 = vmatprep.subr.mxu0 0.0
    %1210 = vmatpush1.msra.mxu0 0.0
    %1211 = vmatprep.subr.mxu0 0.0
    %1212 = vmatpush1.msra.mxu0 0.0
    %1213 = vmatprep.subr.mxu0 0.0
    %1214 = vmatpush1.msra.mxu0 %v953
    %1215 = vmatprep.subr.mxu0 0.0
    %1216 = vmatpush1.msra.mxu0 %v952
    %1217 = vmatprep.subr.mxu0 0.0
    %1218 = vmatpush1.msra.mxu0 %v951
    %1219 = vmatprep.subr.mxu0 0.0
    %1220 = vmatpush1.msra.mxu0 %v950
    %1221 = vmatprep.subr.mxu0 0.0
    %1222 = vmatpush2.msra.mxu0 0.0
    %1223 = vmatprep.subr.mxu0 0.0
    %1224 = vmatpush2.msra.mxu0 0.0
    %1225 = vmatprep.subr.mxu0 0.0
    %1226 = vmatpush2.msra.mxu0 0.0
    %1227 = vmatprep.subr.mxu0 0.0
    %1228 = vmatpush2.msra.mxu0 0.0
    %1229 = vmatprep.subr.mxu0 0.0
    %1230 = vmatpush2.msra.mxu0 0.0
    %1231 = vmatprep.subr.mxu0 0.0
    %1232 = vmatpush2.msra.mxu0 0.0
    %1233 = vmatprep.subr.mxu0 0.0
    %1234 = vmatpush2.msra.mxu0 0.0
    %1235 = vmatprep.subr.mxu0 0.0
    %1236 = vmatpush2.msra.mxu0 0.0
    %1237 = vmatprep.subr.mxu0 0.0
    %1238 = vmatpush2.msra.mxu0 0.0
    %1239 = vmatprep.subr.mxu0 0.0
    %1240 = vmatpush2.msra.mxu0 0.0
    %1241 = vmatprep.subr.mxu0 0.0
    %1242 = vmatpush2.msra.mxu0 0.0
    %1243 = vmatprep.subr.mxu0 0.0
    %1244 = vmatpush2.msra.mxu0 0.0
    %1245 = vmatprep.subr.mxu0 0.0
    %1246 = vmatpush2.msra.mxu0 0.0
    %1247 = vmatprep.subr.mxu0 0.0
    %1248 = vmatpush2.msra.mxu0 0.0
    %1249 = vmatprep.subr.mxu0 0.0
    %1250 = vmatpush2.msra.mxu0 0.0
    %1251 = vmatprep.subr.mxu0 0.0
    %1252 = vmatpush2.msra.mxu0 0.0
    %1253 = vmatprep.mubr.f32.mxu0 0.0
    %1254 = vmatmul.mubr.f32.gmra.mxu0 %v1187
    %v1255 = vpop.f32.mrf.mxu0
    %v1256 = vadd.f32 1e-05, %v1255
    %v1257 = vpop.f32.mrf.mxu0
    %1258 = vdwg.mxu0
    %v1259 = vrsqrt.pop %v1256
    %v1261 = vsel %vm1060, %v1259, 0
    %1263 = vmatprep.subr.mxu0 0.0
    %1264 = vmatpush1.msra.mxu0 0.0
    %1265 = vmatprep.subr.mxu0 0.0
    %1266 = vmatpush1.msra.mxu0 0.0
    %1267 = vmatprep.subr.mxu0 0.0
    %1268 = vmatpush1.msra.mxu0 0.0
    %1269 = vmatprep.subr.mxu0 0.0
    %1270 = vmatpush1.msra.mxu0 0.0
    %1271 = vmatprep.subr.mxu0 0.0
    %1272 = vmatpush1.msra.mxu0 0.0
    %1273 = vmatprep.subr.mxu0 0.0
    %1274 = vmatpush1.msra.mxu0 0.0
    %1275 = vmatprep.subr.mxu0 0.0
    %1276 = vmatpush1.msra.mxu0 0.0
    %1277 = vmatprep.subr.mxu0 0.0
    %1278 = vmatpush1.msra.mxu0 0.0
    %1279 = vmatprep.subr.mxu0 0.0
    %1280 = vmatpush1.msra.mxu0 0.0
    %1281 = vmatprep.subr.mxu0 0.0
    %1282 = vmatpush1.msra.mxu0 0.0
    %1283 = vmatprep.subr.mxu0 0.0
    %1284 = vmatpush1.msra.mxu0 0.0
    %1285 = vmatprep.subr.mxu0 0.0
    %1286 = vmatpush1.msra.mxu0 0.0
    %1287 = vmatprep.subr.mxu0 0.0
    %1288 = vmatpush1.msra.mxu0 0.0
    %1289 = vmatprep.subr.mxu0 0.0
    %1290 = vmatpush1.msra.mxu0 0.0
    %1291 = vmatprep.subr.mxu0 0.0
    %1292 = vmatpush1.msra.mxu0 0.0
    %1293 = vmatprep.subr.mxu0 0.0
    %1294 = vmatpush1.msra.mxu0 %v1065
    %1295 = vmatprep.subr.mxu0 0.0
    %1296 = vmatpush2.msra.mxu0 0.0
    %1297 = vmatprep.subr.mxu0 0.0
    %1298 = vmatpush2.msra.mxu0 0.0
    %1299 = vmatprep.subr.mxu0 0.0
    %1300 = vmatpush2.msra.mxu0 0.0
    %1301 = vmatprep.subr.mxu0 0.0
    %1302 = vmatpush2.msra.mxu0 0.0
    %1303 = vmatprep.subr.mxu0 0.0
    %1304 = vmatpush2.msra.mxu0 0.0
    %1305 = vmatprep.subr.mxu0 0.0
    %1306 = vmatpush2.msra.mxu0 0.0
    %1307 = vmatprep.subr.mxu0 0.0
    %1308 = vmatpush2.msra.mxu0 0.0
    %1309 = vmatprep.subr.mxu0 0.0
    %1310 = vmatpush2.msra.mxu0 0.0
    %1311 = vmatprep.subr.mxu0 0.0
    %1312 = vmatpush2.msra.mxu0 0.0
    %1313 = vmatprep.subr.mxu0 0.0
    %1314 = vmatpush2.msra.mxu0 0.0
    %1315 = vmatprep.subr.mxu0 0.0
    %1316 = vmatpush2.msra.mxu0 0.0
    %1317 = vmatprep.subr.mxu0 0.0
    %1318 = vmatpush2.msra.mxu0 0.0
    %1319 = vmatprep.subr.mxu0 0.0
    %1320 = vmatpush2.msra.mxu0 0.0
    %1321 = vmatprep.subr.mxu0 0.0
    %1322 = vmatpush2.msra.mxu0 0.0
    %1323 = vmatprep.subr.mxu0 0.0
    %1324 = vmatpush2.msra.mxu0 0.0
    %1325 = vmatprep.subr.mxu0 0.0
    %1326 = vmatpush2.msra.mxu0 0.0
    %1327 = vmatprep.mubr.f32.mxu0 0.0
    %1328 = vmatmul.mubr.f32.gmra.mxu0 %v1261
    %v1329 = vpop.f32.mrf.mxu0
    %v1330 = vadd.f32 0.0, %v1329
    %v1331 = vpop.f32.mrf.mxu0
    %1332 = vdwg.mxu0
    %v1334 = vlaneseq
    %v1335 = vshrl.u32 %v1334, 7
    %v1336 = vsub.s32 0, %v1335
    %v1337 = vrot.slane %v955, %v1336
    %v1339 = vmul.f32 %v1337, %v1141
    %v1340 = vmul.f32 %v1337, %v1142
    %v1341 = vmul.f32 %v1337, %v1143
    %v1342 = vmul.f32 %v1337, %v1144
    %v1343 = vmul.f32 %v1337, %v1145
    %v1344 = vmul.f32 %v1337, %v1146
    %v1345 = vmul.f32 %v1337, %v1147
    %v1346 = vmul.f32 %v1337, %v1148
    %v1347 = vlaneseq
    %v1348 = vshrl.u32 %v1347, 7
    %v1349 = vsub.s32 0, %v1348
    %v1350 = vrot.slane %v1330, %v1349
    %v1351 = vmul.f32 %v1339, %v1350
    %v1352 = vmul.f32 %v1340, %v1350
    %v1353 = vmul.f32 %v1341, %v1350
    %v1354 = vmul.f32 %v1342, %v1350
    %v1355 = vmul.f32 %v1343, %v1350
    %v1356 = vmul.f32 %v1344, %v1350
    %v1357 = vmul.f32 %v1345, %v1350
    %v1358 = vmul.f32 %v1346, %v1350
    %v1360 = vlaneseq
    %v1361 = vshrl.u32 %v1360, 7
    %v1362 = vsub.s32 0, %v1361
    %v1363 = vrot.slane %v956, %v1362
    %v1365 = vadd.f32 %v1351, %v1363
    %v1366 = vadd.f32 %v1352, %v1363
    %v1367 = vadd.f32 %v1353, %v1363
    %v1368 = vadd.f32 %v1354, %v1363
    %v1369 = vadd.f32 %v1355, %v1363
    %v1370 = vadd.f32 %v1356, %v1363
    %v1371 = vadd.f32 %v1357, %v1363
    %v1372 = vadd.f32 %v1358, %v1363
    %vm1373 = vcmp.gt.f32.partialorder %v1365, 0.0
    %vm1374 = vcmp.gt.f32.partialorder %v1366, 0.0
    %vm1375 = vcmp.gt.f32.partialorder %v1367, 0.0
    %vm1376 = vcmp.gt.f32.partialorder %v1368, 0.0
    %vm1377 = vcmp.gt.f32.partialorder %v1369, 0.0
    %vm1378 = vcmp.gt.f32.partialorder %v1370, 0.0
    %vm1379 = vcmp.gt.f32.partialorder %v1371, 0.0
    %vm1380 = vcmp.gt.f32.partialorder %v1372, 0.0
    %v1381 = vmin.f32 %v1365, 0.0
    %v1382 = vmin.f32 %v1366, 0.0
    %v1383 = vmin.f32 %v1367, 0.0
    %v1384 = vmin.f32 %v1368, 0.0
    %v1385 = vmin.f32 %v1369, 0.0
    %v1386 = vmin.f32 %v1370, 0.0
    %v1387 = vmin.f32 %v1371, 0.0
    %v1388 = vmin.f32 %v1372, 0.0
    %v1389 = vmul.f32 %v1381, 1.442695
    %v1390 = vpow.pop %v1389
    %v1391 = vmul.f32 %v1382, 1.442695
    %v1392 = vpow.pop %v1391
    %v1393 = vmul.f32 %v1383, 1.442695
    %v1394 = vpow.pop %v1393
    %v1395 = vmul.f32 %v1384, 1.442695
    %v1396 = vpow.pop %v1395
    %v1397 = vmul.f32 %v1385, 1.442695
    %v1398 = vpow.pop %v1397
    %v1399 = vmul.f32 %v1386, 1.442695
    %v1400 = vpow.pop %v1399
    %v1401 = vmul.f32 %v1387, 1.442695
    %v1402 = vpow.pop %v1401
    %v1403 = vmul.f32 %v1388, 1.442695
    %v1404 = vpow.pop %v1403
    %v1405 = vsub.f32 %v1390, 1.0
    %v1406 = vsub.f32 %v1392, 1.0
    %v1407 = vsub.f32 %v1394, 1.0
    %v1408 = vsub.f32 %v1396, 1.0
    %v1409 = vsub.f32 %v1398, 1.0
    %v1410 = vsub.f32 %v1400, 1.0
    %v1411 = vsub.f32 %v1402, 1.0
    %v1412 = vsub.f32 %v1404, 1.0
    %v1413 = vsel %vm1373, %v1365, %v1405
    %v1414 = vsel %vm1374, %v1366, %v1406
    %v1415 = vsel %vm1375, %v1367, %v1407
    %v1416 = vsel %vm1376, %v1368, %v1408
    %v1417 = vsel %vm1377, %v1369, %v1409
    %v1418 = vsel %vm1378, %v1370, %v1410
    %v1419 = vsel %vm1379, %v1371, %v1411
    %v1420 = vsel %vm1380, %v1372, %v1412
    %v1421 = vld [vmem:[%s5] sm:$0xf]
    %v1422 = vld [vmem:[%s5 + $0x4] sm:$0xf]
    %v1423 = vld [vmem:[%s5 + $0x8] sm:$0xf]
    %v1424 = vld [vmem:[%s5 + $0xc] sm:$0xf]
    %v1425 = vld [vmem:[%s5 + $0x10] sm:$0xf]
    %v1426 = vld [vmem:[%s5 + $0x14] sm:$0xf]
    %v1427 = vld [vmem:[%s5 + $0x18] sm:$0xf]
    %v1428 = vld [vmem:[%s5 + $0x1c] sm:$0xf]
    %v1429 = vld [vmem:[%s31] sm:$0xf]
    %v1430 = vld [vmem:[%s31 + $0x4] sm:$0xf]
    %v1431 = vld [vmem:[%s31 + $0x8] sm:$0xf]
    %v1432 = vld [vmem:[%s33] sm:$0x1]
    %v1434 = vlaneseq
    %v1435 = vshrl.u32 %v1434, 7
    %v1436 = vsub.s32 0, %v1435
    %v1437 = vrot.slane %v1432, %v1436
    %v1447 = vunpack.c.l.b16 %v1421
    %v1448 = vunpack.c.l.b16 %v1422
    %v1449 = vunpack.c.l.b16 %v1423
    %v1450 = vunpack.c.l.b16 %v1424
    %v1451 = vunpack.c.l.b16 %v1425
    %v1452 = vunpack.c.l.b16 %v1426
    %v1453 = vunpack.c.l.b16 %v1427
    %v1454 = vunpack.c.l.b16 %v1428
    %v1455 = vpack.c.b16 %v1448, %v1447
    %v1456 = vpack.c.b16 %v1450, %v1449
    %v1457 = vpack.c.b16 %v1452, %v1451
    %v1458 = vpack.c.b16 %v1454, %v1453
    %v1462 = vunpack.c.l.b16 %v1429
    %v1463 = vunpack.c.l.b16 %v1430
    %v1464 = vunpack.c.l.b16 %v1431
    %v1465 = vpack.c.b16 %v1463, %v1462
    %v1466 = vpack.c.b16 %v1464, %v1464
    %vm1468 = vcmask 195584
    %v1470 = vsel %vm1468, %v1455, 0
    %v1473 = vsel %vm1468, %v1456, 0
    %v1476 = vsel %vm1468, %v1457, 0
    %v1479 = vsel %vm1468, %v1458, 0
    %v1482 = vsel %vm456, %v1466, 0
    %1484 = vmatprep.subr.bf16.mxu0 0
    %1485 = vmatpush1.bf16.msra.mxu0 0
    %1486 = vmatprep.subr.bf16.mxu0 0
    %1487 = vmatpush1.bf16.msra.mxu0 0
    %1488 = vmatprep.subr.bf16.mxu0 0
    %1489 = vmatpush1.bf16.msra.mxu0 0
    %1490 = vmatprep.subr.bf16.mxu0 0
    %1491 = vmatpush1.bf16.msra.mxu0 0
    %1492 = vmatprep.subr.bf16.mxu0 0
    %1493 = vmatpush1.bf16.msra.mxu0 0
    %1494 = vmatprep.subr.bf16.mxu0 0
    %1495 = vmatpush1.bf16.msra.mxu0 0
    %1496 = vmatprep.subr.bf16.mxu0 0
    %1497 = vmatpush1.bf16.msra.mxu0 %v1482
    %1498 = vmatprep.subr.bf16.mxu0 0
    %1499 = vmatpush1.bf16.msra.mxu0 %v1465
    %1500 = vmatprep.subr.bf16.mxu0 0
    %1501 = vmatpush2.bf16.msra.mxu0 0
    %1502 = vmatprep.subr.bf16.mxu0 0
    %1503 = vmatpush2.bf16.msra.mxu0 0
    %1504 = vmatprep.subr.bf16.mxu0 0
    %1505 = vmatpush2.bf16.msra.mxu0 0
    %1506 = vmatprep.subr.bf16.mxu0 0
    %1507 = vmatpush2.bf16.msra.mxu0 0
    %1508 = vmatprep.subr.bf16.mxu0 0
    %1509 = vmatpush2.bf16.msra.mxu0 0
    %1510 = vmatprep.subr.bf16.mxu0 0
    %1511 = vmatpush2.bf16.msra.mxu0 0
    %1512 = vmatprep.subr.bf16.mxu0 0
    %1513 = vmatpush2.bf16.msra.mxu0 0
    %1514 = vmatprep.subr.bf16.mxu0 0
    %1515 = vmatpush2.bf16.msra.mxu0 0
    %1516 = vmatprep.mubr.bf16.mxu0 0
    %1517 = vmatmul.mubr.bf16.gmra.mxu0 %v1470
    %v1518 = vpop.f32.mrf.mxu0
    %v1519 = vadd.f32 %v1437, %v1518
    %v1520 = vpop.f32.mrf.mxu0
    %v1521 = vpop.f32.mrf.mxu0
    %v1522 = vadd.f32 %v1437, %v1521
    %v1523 = vpop.f32.mrf.mxu0
    %1524 = vmatprep.mubr.bf16.mxu0 0
    %1525 = vmatmul.mubr.bf16.gmra.mxu0 %v1473
    %v1526 = vpop.f32.mrf.mxu0
    %v1527 = vadd.f32 %v1437, %v1526
    %v1528 = vpop.f32.mrf.mxu0
    %v1529 = vpop.f32.mrf.mxu0
    %v1530 = vadd.f32 %v1437, %v1529
    %v1531 = vpop.f32.mrf.mxu0
    %1532 = vmatprep.mubr.bf16.mxu0 0
    %1533 = vmatmul.mubr.bf16.gmra.mxu0 %v1476
    %v1534 = vpop.f32.mrf.mxu0
    %v1535 = vadd.f32 %v1437, %v1534
    %v1536 = vpop.f32.mrf.mxu0
    %v1537 = vpop.f32.mrf.mxu0
    %v1538 = vadd.f32 %v1437, %v1537
    %v1539 = vpop.f32.mrf.mxu0
    %1540 = vmatprep.mubr.bf16.mxu0 0
    %1541 = vmatmul.mubr.bf16.gmra.mxu0 %v1479
    %v1542 = vpop.f32.mrf.mxu0
    %v1543 = vadd.f32 %v1437, %v1542
    %v1544 = vpop.f32.mrf.mxu0
    %v1545 = vpop.f32.mrf.mxu0
    %v1546 = vadd.f32 %v1437, %v1545
    %v1547 = vpop.f32.mrf.mxu0
    %1548 = vdwg.mxu0
    %v1549 = vld [vmem:[%s39] sm:$0xff]
    %v1550 = vld [vmem:[%s39 + $0x8] sm:$0xff]
    %v1551 = vld [vmem:[%s39 + $0x10] sm:$0xff]
    %v1552 = vld [vmem:[%s39 + $0x18] sm:$0xff]
    %v1553 = vld [vmem:[%s39 + $0x20] sm:$0xff]
    %v1554 = vld [vmem:[%s39 + $0x28] sm:$0xff]
    %v1555 = vld [vmem:[%s39 + $0x30] sm:$0xff]
    %v1556 = vld [vmem:[%s39 + $0x38] sm:$0xff]
    %v1557 = vld [vmem:[%s39 + $0x40] sm:$0xff]
    %v1558 = vld [vmem:[%s39 + $0x48] sm:$0xff]
    %v1559 = vld [vmem:[%s39 + $0x50] sm:$0xff]
    %v1560 = vld [vmem:[%s39 + $0x58] sm:$0xff]
    %v1561 = vld [vmem:[%s41] sm:$0xff]
    %v1562 = vld [vmem:[%s41 + $0x8] sm:$0xf]
    %v1563 = vld [vmem:[%s35] sm:$0x1]
    %v1564 = vld [vmem:[%s37] sm:$0x1]
    %v1565 = vmul.f32 %v312, %v1519
    %v1566 = vmul.f32 %v317, %v1522
    %v1567 = vmul.f32 %v322, %v1527
    %v1568 = vmul.f32 %v327, %v1530
    %v1569 = vmul.f32 %v332, %v1535
    %v1570 = vmul.f32 %v337, %v1538
    %v1571 = vmul.f32 %v342, %v1543
    %v1572 = vmul.f32 %v347, %v1546
    %v1573 = vsel %vm357, %v1565, 0.0
    %v1574 = vsel %vm357, %v1566, 0.0
    %v1575 = vadd.f32 %v1573, %v1574
    %v1576 = vsel %vm357, %v1567, 0.0
    %v1577 = vadd.f32 %v1575, %v1576
    %v1578 = vsel %vm357, %v1568, 0.0
    %v1579 = vadd.f32 %v1577, %v1578
    %v1580 = vsel %vm357, %v1569, 0.0
    %v1581 = vadd.f32 %v1579, %v1580
    %v1582 = vsel %vm357, %v1570, 0.0
    %v1583 = vadd.f32 %v1581, %v1582
    %v1584 = vsel %vm357, %v1571, 0.0
    %v1585 = vadd.f32 %v1583, %v1584
    %v1586 = vsel %vm357, %v1572, 0.0
    %v1587 = vadd.f32 %v1585, %v1586
    %v1588 = vrot.slane %v1587, 4
    %v1589 = vadd.f32 %v1587, %v1588
    %v1590 = vrot.slane %v1589, 2
    %v1591 = vadd.f32 %v1589, %v1590
    %v1592 = vrot.slane %v1591, 1
    %v1593 = vadd.f32 %v1591, %v1592
    %v1595 = vsel %vm357, %v1593, 0
    %1597 = vmatprep.subr.mxu0 0.0
    %1598 = vmatpush1.msra.mxu0 0.0
    %1599 = vmatprep.subr.mxu0 0.0
    %1600 = vmatpush1.msra.mxu0 0.0
    %1601 = vmatprep.subr.mxu0 0.0
    %1602 = vmatpush1.msra.mxu0 0.0
    %1603 = vmatprep.subr.mxu0 0.0
    %1604 = vmatpush1.msra.mxu0 0.0
    %1605 = vmatprep.subr.mxu0 0.0
    %1606 = vmatpush1.msra.mxu0 %v1560
    %1607 = vmatprep.subr.mxu0 0.0
    %1608 = vmatpush1.msra.mxu0 %v1559
    %1609 = vmatprep.subr.mxu0 0.0
    %1610 = vmatpush1.msra.mxu0 %v1558
    %1611 = vmatprep.subr.mxu0 0.0
    %1612 = vmatpush1.msra.mxu0 %v1557
    %1613 = vmatprep.subr.mxu0 0.0
    %1614 = vmatpush1.msra.mxu0 %v1556
    %1615 = vmatprep.subr.mxu0 0.0
    %1616 = vmatpush1.msra.mxu0 %v1555
    %1617 = vmatprep.subr.mxu0 0.0
    %1618 = vmatpush1.msra.mxu0 %v1554
    %1619 = vmatprep.subr.mxu0 0.0
    %1620 = vmatpush1.msra.mxu0 %v1553
    %1621 = vmatprep.subr.mxu0 0.0
    %1622 = vmatpush1.msra.mxu0 %v1552
    %1623 = vmatprep.subr.mxu0 0.0
    %1624 = vmatpush1.msra.mxu0 %v1551
    %1625 = vmatprep.subr.mxu0 0.0
    %1626 = vmatpush1.msra.mxu0 %v1550
    %1627 = vmatprep.subr.mxu0 0.0
    %1628 = vmatpush1.msra.mxu0 %v1549
    %1629 = vmatprep.subr.mxu0 0.0
    %1630 = vmatpush2.msra.mxu0 0.0
    %1631 = vmatprep.subr.mxu0 0.0
    %1632 = vmatpush2.msra.mxu0 0.0
    %1633 = vmatprep.subr.mxu0 0.0
    %1634 = vmatpush2.msra.mxu0 0.0
    %1635 = vmatprep.subr.mxu0 0.0
    %1636 = vmatpush2.msra.mxu0 0.0
    %1637 = vmatprep.subr.mxu0 0.0
    %1638 = vmatpush2.msra.mxu0 0.0
    %1639 = vmatprep.subr.mxu0 0.0
    %1640 = vmatpush2.msra.mxu0 0.0
    %1641 = vmatprep.subr.mxu0 0.0
    %1642 = vmatpush2.msra.mxu0 0.0
    %1643 = vmatprep.subr.mxu0 0.0
    %1644 = vmatpush2.msra.mxu0 0.0
    %1645 = vmatprep.subr.mxu0 0.0
    %1646 = vmatpush2.msra.mxu0 0.0
    %1647 = vmatprep.subr.mxu0 0.0
    %1648 = vmatpush2.msra.mxu0 0.0
    %1649 = vmatprep.subr.mxu0 0.0
    %1650 = vmatpush2.msra.mxu0 0.0
    %1651 = vmatprep.subr.mxu0 0.0
    %1652 = vmatpush2.msra.mxu0 0.0
    %1653 = vmatprep.subr.mxu0 0.0
    %1654 = vmatpush2.msra.mxu0 0.0
    %1655 = vmatprep.subr.mxu0 0.0
    %1656 = vmatpush2.msra.mxu0 0.0
    %1657 = vmatprep.subr.mxu0 0.0
    %1658 = vmatpush2.msra.mxu0 0.0
    %1659 = vmatprep.subr.mxu0 0.0
    %1660 = vmatpush2.msra.mxu0 0.0
    %1661 = vmatprep.mubr.f32.mxu0 0.0
    %1662 = vmatmul.mubr.f32.gmra.mxu0 %v1595
    %v1663 = vpop.f32.mrf.mxu0
    %v1664 = vadd.f32 0.0, %v1663
    %v1665 = vpop.f32.mrf.mxu0
    %1666 = vdwg.mxu0
    %v1668 = vsel %vm452, %v1664, 0
    %v1671 = vsel %vm456, %v1562, 0
    %1673 = vmatprep.subr.mxu0 0.0
    %1674 = vmatpush1.msra.mxu0 0.0
    %1675 = vmatprep.subr.mxu0 0.0
    %1676 = vmatpush1.msra.mxu0 0.0
    %1677 = vmatprep.subr.mxu0 0.0
    %1678 = vmatpush1.msra.mxu0 0.0
    %1679 = vmatprep.subr.mxu0 0.0
    %1680 = vmatpush1.msra.mxu0 0.0
    %1681 = vmatprep.subr.mxu0 0.0
    %1682 = vmatpush1.msra.mxu0 0.0
    %1683 = vmatprep.subr.mxu0 0.0
    %1684 = vmatpush1.msra.mxu0 0.0
    %1685 = vmatprep.subr.mxu0 0.0
    %1686 = vmatpush1.msra.mxu0 0.0
    %1687 = vmatprep.subr.mxu0 0.0
    %1688 = vmatpush1.msra.mxu0 0.0
    %1689 = vmatprep.subr.mxu0 0.0
    %1690 = vmatpush1.msra.mxu0 0.0
    %1691 = vmatprep.subr.mxu0 0.0
    %1692 = vmatpush1.msra.mxu0 0.0
    %1693 = vmatprep.subr.mxu0 0.0
    %1694 = vmatpush1.msra.mxu0 0.0
    %1695 = vmatprep.subr.mxu0 0.0
    %1696 = vmatpush1.msra.mxu0 0.0
    %1697 = vmatprep.subr.mxu0 0.0
    %1698 = vmatpush1.msra.mxu0 0.0
    %1699 = vmatprep.subr.mxu0 0.0
    %1700 = vmatpush1.msra.mxu0 0.0
    %1701 = vmatprep.subr.mxu0 0.0
    %1702 = vmatpush1.msra.mxu0 %v1671
    %1703 = vmatprep.subr.mxu0 0.0
    %1704 = vmatpush1.msra.mxu0 %v1561
    %1705 = vmatprep.subr.mxu0 0.0
    %1706 = vmatpush2.msra.mxu0 0.0
    %1707 = vmatprep.subr.mxu0 0.0
    %1708 = vmatpush2.msra.mxu0 0.0
    %1709 = vmatprep.subr.mxu0 0.0
    %1710 = vmatpush2.msra.mxu0 0.0
    %1711 = vmatprep.subr.mxu0 0.0
    %1712 = vmatpush2.msra.mxu0 0.0
    %1713 = vmatprep.subr.mxu0 0.0
    %1714 = vmatpush2.msra.mxu0 0.0
    %1715 = vmatprep.subr.mxu0 0.0
    %1716 = vmatpush2.msra.mxu0 0.0
    %1717 = vmatprep.subr.mxu0 0.0
    %1718 = vmatpush2.msra.mxu0 0.0
    %1719 = vmatprep.subr.mxu0 0.0
    %1720 = vmatpush2.msra.mxu0 0.0
    %1721 = vmatprep.subr.mxu0 0.0
    %1722 = vmatpush2.msra.mxu0 0.0
    %1723 = vmatprep.subr.mxu0 0.0
    %1724 = vmatpush2.msra.mxu0 0.0
    %1725 = vmatprep.subr.mxu0 0.0
    %1726 = vmatpush2.msra.mxu0 0.0
    %1727 = vmatprep.subr.mxu0 0.0
    %1728 = vmatpush2.msra.mxu0 0.0
    %1729 = vmatprep.subr.mxu0 0.0
    %1730 = vmatpush2.msra.mxu0 0.0
    %1731 = vmatprep.subr.mxu0 0.0
    %1732 = vmatpush2.msra.mxu0 0.0
    %1733 = vmatprep.subr.mxu0 0.0
    %1734 = vmatpush2.msra.mxu0 0.0
    %1735 = vmatprep.subr.mxu0 0.0
    %1736 = vmatpush2.msra.mxu0 0.0
    %1737 = vmatprep.mubr.f32.mxu0 0.0
    %1738 = vmatmul.mubr.f32.gmra.mxu0 %v1668
    %v1739 = vpop.f32.mrf.mxu0
    %v1740 = vadd.f32 0.0, %v1739
    %v1741 = vpop.f32.mrf.mxu0
    %1742 = vdwg.mxu0
    %v1743 = vlaneseq
    %v1744 = vshrl.u32 %v1743, 7
    %v1745 = vsub.s32 0, %v1744
    %v1746 = vrot.slane %v1740, %v1745
    %v1747 = vsub.f32 %v1519, %v1746
    %v1748 = vsub.f32 %v1522, %v1746
    %v1749 = vsub.f32 %v1527, %v1746
    %v1750 = vsub.f32 %v1530, %v1746
    %v1751 = vsub.f32 %v1535, %v1746
    %v1752 = vsub.f32 %v1538, %v1746
    %v1753 = vsub.f32 %v1543, %v1746
    %v1754 = vsub.f32 %v1546, %v1746
    %v1755 = vmul.f32 %v1747, %v1747
    %v1756 = vmul.f32 %v1748, %v1748
    %v1757 = vmul.f32 %v1749, %v1749
    %v1758 = vmul.f32 %v1750, %v1750
    %v1759 = vmul.f32 %v1751, %v1751
    %v1760 = vmul.f32 %v1752, %v1752
    %v1761 = vmul.f32 %v1753, %v1753
    %v1762 = vmul.f32 %v1754, %v1754
    %v1763 = vmul.f32 %v312, %v1755
    %v1764 = vmul.f32 %v317, %v1756
    %v1765 = vmul.f32 %v322, %v1757
    %v1766 = vmul.f32 %v327, %v1758
    %v1767 = vmul.f32 %v332, %v1759
    %v1768 = vmul.f32 %v337, %v1760
    %v1769 = vmul.f32 %v342, %v1761
    %v1770 = vmul.f32 %v347, %v1762
    %v1771 = vsel %vm357, %v1763, 0.0
    %v1772 = vsel %vm357, %v1764, 0.0
    %v1773 = vadd.f32 %v1771, %v1772
    %v1774 = vsel %vm357, %v1765, 0.0
    %v1775 = vadd.f32 %v1773, %v1774
    %v1776 = vsel %vm357, %v1766, 0.0
    %v1777 = vadd.f32 %v1775, %v1776
    %v1778 = vsel %vm357, %v1767, 0.0
    %v1779 = vadd.f32 %v1777, %v1778
    %v1780 = vsel %vm357, %v1768, 0.0
    %v1781 = vadd.f32 %v1779, %v1780
    %v1782 = vsel %vm357, %v1769, 0.0
    %v1783 = vadd.f32 %v1781, %v1782
    %v1784 = vsel %vm357, %v1770, 0.0
    %v1785 = vadd.f32 %v1783, %v1784
    %v1786 = vrot.slane %v1785, 4
    %v1787 = vadd.f32 %v1785, %v1786
    %v1788 = vrot.slane %v1787, 2
    %v1789 = vadd.f32 %v1787, %v1788
    %v1790 = vrot.slane %v1789, 1
    %v1791 = vadd.f32 %v1789, %v1790
    %v1793 = vsel %vm357, %v1791, 0
    %1795 = vmatprep.subr.mxu0 0.0
    %1796 = vmatpush1.msra.mxu0 0.0
    %1797 = vmatprep.subr.mxu0 0.0
    %1798 = vmatpush1.msra.mxu0 0.0
    %1799 = vmatprep.subr.mxu0 0.0
    %1800 = vmatpush1.msra.mxu0 0.0
    %1801 = vmatprep.subr.mxu0 0.0
    %1802 = vmatpush1.msra.mxu0 0.0
    %1803 = vmatprep.subr.mxu0 0.0
    %1804 = vmatpush1.msra.mxu0 %v1560
    %1805 = vmatprep.subr.mxu0 0.0
    %1806 = vmatpush1.msra.mxu0 %v1559
    %1807 = vmatprep.subr.mxu0 0.0
    %1808 = vmatpush1.msra.mxu0 %v1558
    %1809 = vmatprep.subr.mxu0 0.0
    %1810 = vmatpush1.msra.mxu0 %v1557
    %1811 = vmatprep.subr.mxu0 0.0
    %1812 = vmatpush1.msra.mxu0 %v1556
    %1813 = vmatprep.subr.mxu0 0.0
    %1814 = vmatpush1.msra.mxu0 %v1555
    %1815 = vmatprep.subr.mxu0 0.0
    %1816 = vmatpush1.msra.mxu0 %v1554
    %1817 = vmatprep.subr.mxu0 0.0
    %1818 = vmatpush1.msra.mxu0 %v1553
    %1819 = vmatprep.subr.mxu0 0.0
    %1820 = vmatpush1.msra.mxu0 %v1552
    %1821 = vmatprep.subr.mxu0 0.0
    %1822 = vmatpush1.msra.mxu0 %v1551
    %1823 = vmatprep.subr.mxu0 0.0
    %1824 = vmatpush1.msra.mxu0 %v1550
    %1825 = vmatprep.subr.mxu0 0.0
    %1826 = vmatpush1.msra.mxu0 %v1549
    %1827 = vmatprep.subr.mxu0 0.0
    %1828 = vmatpush2.msra.mxu0 0.0
    %1829 = vmatprep.subr.mxu0 0.0
    %1830 = vmatpush2.msra.mxu0 0.0
    %1831 = vmatprep.subr.mxu0 0.0
    %1832 = vmatpush2.msra.mxu0 0.0
    %1833 = vmatprep.subr.mxu0 0.0
    %1834 = vmatpush2.msra.mxu0 0.0
    %1835 = vmatprep.subr.mxu0 0.0
    %1836 = vmatpush2.msra.mxu0 0.0
    %1837 = vmatprep.subr.mxu0 0.0
    %1838 = vmatpush2.msra.mxu0 0.0
    %1839 = vmatprep.subr.mxu0 0.0
    %1840 = vmatpush2.msra.mxu0 0.0
    %1841 = vmatprep.subr.mxu0 0.0
    %1842 = vmatpush2.msra.mxu0 0.0
    %1843 = vmatprep.subr.mxu0 0.0
    %1844 = vmatpush2.msra.mxu0 0.0
    %1845 = vmatprep.subr.mxu0 0.0
    %1846 = vmatpush2.msra.mxu0 0.0
    %1847 = vmatprep.subr.mxu0 0.0
    %1848 = vmatpush2.msra.mxu0 0.0
    %1849 = vmatprep.subr.mxu0 0.0
    %1850 = vmatpush2.msra.mxu0 0.0
    %1851 = vmatprep.subr.mxu0 0.0
    %1852 = vmatpush2.msra.mxu0 0.0
    %1853 = vmatprep.subr.mxu0 0.0
    %1854 = vmatpush2.msra.mxu0 0.0
    %1855 = vmatprep.subr.mxu0 0.0
    %1856 = vmatpush2.msra.mxu0 0.0
    %1857 = vmatprep.subr.mxu0 0.0
    %1858 = vmatpush2.msra.mxu0 0.0
    %1859 = vmatprep.mubr.f32.mxu0 0.0
    %1860 = vmatmul.mubr.f32.gmra.mxu0 %v1793
    %v1861 = vpop.f32.mrf.mxu0
    %v1862 = vadd.f32 1e-05, %v1861
    %v1863 = vpop.f32.mrf.mxu0
    %1864 = vdwg.mxu0
    %v1865 = vrsqrt.pop %v1862
    %v1867 = vsel %vm452, %v1865, 0
    %1869 = vmatprep.subr.mxu0 0.0
    %1870 = vmatpush1.msra.mxu0 0.0
    %1871 = vmatprep.subr.mxu0 0.0
    %1872 = vmatpush1.msra.mxu0 0.0
    %1873 = vmatprep.subr.mxu0 0.0
    %1874 = vmatpush1.msra.mxu0 0.0
    %1875 = vmatprep.subr.mxu0 0.0
    %1876 = vmatpush1.msra.mxu0 0.0
    %1877 = vmatprep.subr.mxu0 0.0
    %1878 = vmatpush1.msra.mxu0 0.0
    %1879 = vmatprep.subr.mxu0 0.0
    %1880 = vmatpush1.msra.mxu0 0.0
    %1881 = vmatprep.subr.mxu0 0.0
    %1882 = vmatpush1.msra.mxu0 0.0
    %1883 = vmatprep.subr.mxu0 0.0
    %1884 = vmatpush1.msra.mxu0 0.0
    %1885 = vmatprep.subr.mxu0 0.0
    %1886 = vmatpush1.msra.mxu0 0.0
    %1887 = vmatprep.subr.mxu0 0.0
    %1888 = vmatpush1.msra.mxu0 0.0
    %1889 = vmatprep.subr.mxu0 0.0
    %1890 = vmatpush1.msra.mxu0 0.0
    %1891 = vmatprep.subr.mxu0 0.0
    %1892 = vmatpush1.msra.mxu0 0.0
    %1893 = vmatprep.subr.mxu0 0.0
    %1894 = vmatpush1.msra.mxu0 0.0
    %1895 = vmatprep.subr.mxu0 0.0
    %1896 = vmatpush1.msra.mxu0 0.0
    %1897 = vmatprep.subr.mxu0 0.0
    %1898 = vmatpush1.msra.mxu0 %v1671
    %1899 = vmatprep.subr.mxu0 0.0
    %1900 = vmatpush1.msra.mxu0 %v1561
    %1901 = vmatprep.subr.mxu0 0.0
    %1902 = vmatpush2.msra.mxu0 0.0
    %1903 = vmatprep.subr.mxu0 0.0
    %1904 = vmatpush2.msra.mxu0 0.0
    %1905 = vmatprep.subr.mxu0 0.0
    %1906 = vmatpush2.msra.mxu0 0.0
    %1907 = vmatprep.subr.mxu0 0.0
    %1908 = vmatpush2.msra.mxu0 0.0
    %1909 = vmatprep.subr.mxu0 0.0
    %1910 = vmatpush2.msra.mxu0 0.0
    %1911 = vmatprep.subr.mxu0 0.0
    %1912 = vmatpush2.msra.mxu0 0.0
    %1913 = vmatprep.subr.mxu0 0.0
    %1914 = vmatpush2.msra.mxu0 0.0
    %1915 = vmatprep.subr.mxu0 0.0
    %1916 = vmatpush2.msra.mxu0 0.0
    %1917 = vmatprep.subr.mxu0 0.0
    %1918 = vmatpush2.msra.mxu0 0.0
    %1919 = vmatprep.subr.mxu0 0.0
    %1920 = vmatpush2.msra.mxu0 0.0
    %1921 = vmatprep.subr.mxu0 0.0
    %1922 = vmatpush2.msra.mxu0 0.0
    %1923 = vmatprep.subr.mxu0 0.0
    %1924 = vmatpush2.msra.mxu0 0.0
    %1925 = vmatprep.subr.mxu0 0.0
    %1926 = vmatpush2.msra.mxu0 0.0
    %1927 = vmatprep.subr.mxu0 0.0
    %1928 = vmatpush2.msra.mxu0 0.0
    %1929 = vmatprep.subr.mxu0 0.0
    %1930 = vmatpush2.msra.mxu0 0.0
    %1931 = vmatprep.subr.mxu0 0.0
    %1932 = vmatpush2.msra.mxu0 0.0
    %1933 = vmatprep.mubr.f32.mxu0 0.0
    %1934 = vmatmul.mubr.f32.gmra.mxu0 %v1867
    %v1935 = vpop.f32.mrf.mxu0
    %v1936 = vadd.f32 0.0, %v1935
    %v1937 = vpop.f32.mrf.mxu0
    %1938 = vdwg.mxu0
    %v1940 = vlaneseq
    %v1941 = vshrl.u32 %v1940, 7
    %v1942 = vsub.s32 0, %v1941
    %v1943 = vrot.slane %v1563, %v1942
    %v1945 = vmul.f32 %v1943, %v1747
    %v1946 = vmul.f32 %v1943, %v1748
    %v1947 = vmul.f32 %v1943, %v1749
    %v1948 = vmul.f32 %v1943, %v1750
    %v1949 = vmul.f32 %v1943, %v1751
    %v1950 = vmul.f32 %v1943, %v1752
    %v1951 = vmul.f32 %v1943, %v1753
    %v1952 = vmul.f32 %v1943, %v1754
    %v1953 = vlaneseq
    %v1954 = vshrl.u32 %v1953, 7
    %v1955 = vsub.s32 0, %v1954
    %v1956 = vrot.slane %v1936, %v1955
    %v1957 = vmul.f32 %v1945, %v1956
    %v1958 = vmul.f32 %v1946, %v1956
    %v1959 = vmul.f32 %v1947, %v1956
    %v1960 = vmul.f32 %v1948, %v1956
    %v1961 = vmul.f32 %v1949, %v1956
    %v1962 = vmul.f32 %v1950, %v1956
    %v1963 = vmul.f32 %v1951, %v1956
    %v1964 = vmul.f32 %v1952, %v1956
    %v1966 = vlaneseq
    %v1967 = vshrl.u32 %v1966, 7
    %v1968 = vsub.s32 0, %v1967
    %v1969 = vrot.slane %v1564, %v1968
    %v1971 = vadd.f32 %v1957, %v1969
    %v1972 = vadd.f32 %v1958, %v1969
    %v1973 = vadd.f32 %v1959, %v1969
    %v1974 = vadd.f32 %v1960, %v1969
    %v1975 = vadd.f32 %v1961, %v1969
    %v1976 = vadd.f32 %v1962, %v1969
    %v1977 = vadd.f32 %v1963, %v1969
    %v1978 = vadd.f32 %v1964, %v1969
    %vm1979 = vcmp.gt.f32.partialorder %v1971, 0.0
    %vm1980 = vcmp.gt.f32.partialorder %v1972, 0.0
    %vm1981 = vcmp.gt.f32.partialorder %v1973, 0.0
    %vm1982 = vcmp.gt.f32.partialorder %v1974, 0.0
    %vm1983 = vcmp.gt.f32.partialorder %v1975, 0.0
    %vm1984 = vcmp.gt.f32.partialorder %v1976, 0.0
    %vm1985 = vcmp.gt.f32.partialorder %v1977, 0.0
    %vm1986 = vcmp.gt.f32.partialorder %v1978, 0.0
    %v1987 = vmin.f32 %v1971, 0.0
    %v1988 = vmin.f32 %v1972, 0.0
    %v1989 = vmin.f32 %v1973, 0.0
    %v1990 = vmin.f32 %v1974, 0.0
    %v1991 = vmin.f32 %v1975, 0.0
    %v1992 = vmin.f32 %v1976, 0.0
    %v1993 = vmin.f32 %v1977, 0.0
    %v1994 = vmin.f32 %v1978, 0.0
    %v1995 = vmul.f32 %v1987, 1.442695
    %v1996 = vpow.pop %v1995
    %v1997 = vmul.f32 %v1988, 1.442695
    %v1998 = vpow.pop %v1997
    %v1999 = vmul.f32 %v1989, 1.442695
    %v2000 = vpow.pop %v1999
    %v2001 = vmul.f32 %v1990, 1.442695
    %v2002 = vpow.pop %v2001
    %v2003 = vmul.f32 %v1991, 1.442695
    %v2004 = vpow.pop %v2003
    %v2005 = vmul.f32 %v1992, 1.442695
    %v2006 = vpow.pop %v2005
    %v2007 = vmul.f32 %v1993, 1.442695
    %v2008 = vpow.pop %v2007
    %v2009 = vmul.f32 %v1994, 1.442695
    %v2010 = vpow.pop %v2009
    %v2011 = vsub.f32 %v1996, 1.0
    %v2012 = vsub.f32 %v1998, 1.0
    %v2013 = vsub.f32 %v2000, 1.0
    %v2014 = vsub.f32 %v2002, 1.0
    %v2015 = vsub.f32 %v2004, 1.0
    %v2016 = vsub.f32 %v2006, 1.0
    %v2017 = vsub.f32 %v2008, 1.0
    %v2018 = vsub.f32 %v2010, 1.0
    %v2019 = vsel %vm1979, %v1971, %v2011
    %v2020 = vsel %vm1980, %v1972, %v2012
    %v2021 = vsel %vm1981, %v1973, %v2013
    %v2022 = vsel %vm1982, %v1974, %v2014
    %v2023 = vsel %vm1983, %v1975, %v2015
    %v2024 = vsel %vm1984, %v1976, %v2016
    %v2025 = vsel %vm1985, %v1977, %v2017
    %v2026 = vsel %vm1986, %v1978, %v2018
    %v2027 = vpack.c.bf16 %v2020, %v2019
    %v2028 = vpack.c.bf16 %v2022, %v2021
    %v2029 = vpack.c.bf16 %v2024, %v2023
    %v2030 = vpack.c.bf16 %v2026, %v2025
    %v2031 = vld [vmem:[%s43] sm:$0xf]
    %v2032 = vld [vmem:[%s43 + $0x4] sm:$0xf]
    %v2033 = vld [vmem:[%s43 + $0x8] sm:$0xf]
    %v2034 = vld [vmem:[%s43 + $0xc] sm:$0xf]
    %v2035 = vld [vmem:[%s43 + $0x10] sm:$0xf]
    %v2036 = vld [vmem:[%s43 + $0x14] sm:$0xf]
    %v2037 = vld [vmem:[%s43 + $0x18] sm:$0xf]
    %v2038 = vld [vmem:[%s43 + $0x1c] sm:$0xf]
    %v2039 = vld [vmem:[%s43 + $0x20] sm:$0xf]
    %v2040 = vld [vmem:[%s43 + $0x24] sm:$0xf]
    %v2041 = vld [vmem:[%s43 + $0x28] sm:$0xf]
    %v2042 = vld [vmem:[%s43 + $0x2c] sm:$0xf]
    %v2043 = vld [vmem:[%s45] sm:$0x1]
    %v2045 = vlaneseq
    %v2046 = vshrl.u32 %v2045, 7
    %v2047 = vsub.s32 0, %v2046
    %v2048 = vrot.slane %v2043, %v2047
    %v2062 = vunpack.c.l.b16 %v2031
    %v2063 = vunpack.c.l.b16 %v2032
    %v2064 = vunpack.c.l.b16 %v2033
    %v2065 = vunpack.c.l.b16 %v2034
    %v2066 = vunpack.c.l.b16 %v2035
    %v2067 = vunpack.c.l.b16 %v2036
    %v2068 = vunpack.c.l.b16 %v2037
    %v2069 = vunpack.c.l.b16 %v2038
    %v2070 = vunpack.c.l.b16 %v2039
    %v2071 = vunpack.c.l.b16 %v2040
    %v2072 = vunpack.c.l.b16 %v2041
    %v2073 = vunpack.c.l.b16 %v2042
    %v2074 = vpack.c.b16 %v2063, %v2062
    %v2075 = vpack.c.b16 %v2065, %v2064
    %v2076 = vpack.c.b16 %v2067, %v2066
    %v2077 = vpack.c.b16 %v2069, %v2068
    %v2078 = vpack.c.b16 %v2071, %v2070
    %v2079 = vpack.c.b16 %v2073, %v2072
    %v2087 = vsel %vm357, %v2027, 0
    %v2090 = vsel %vm357, %v2028, 0
    %v2093 = vsel %vm357, %v2029, 0
    %v2096 = vsel %vm357, %v2030, 0
    %2098 = vmatprep.subr.bf16.mxu0 0
    %2099 = vmatpush1.bf16.msra.mxu0 0
    %2100 = vmatprep.subr.bf16.mxu0 0
    %2101 = vmatpush1.bf16.msra.mxu0 0
    %2102 = vmatprep.subr.bf16.mxu0 0
    %2103 = vmatpush1.bf16.msra.mxu0 %v2079
    %2104 = vmatprep.subr.bf16.mxu0 0
    %2105 = vmatpush1.bf16.msra.mxu0 %v2078
    %2106 = vmatprep.subr.bf16.mxu0 0
    %2107 = vmatpush1.bf16.msra.mxu0 %v2077
    %2108 = vmatprep.subr.bf16.mxu0 0
    %2109 = vmatpush1.bf16.msra.mxu0 %v2076
    %2110 = vmatprep.subr.bf16.mxu0 0
    %2111 = vmatpush1.bf16.msra.mxu0 %v2075
    %2112 = vmatprep.subr.bf16.mxu0 0
    %2113 = vmatpush1.bf16.msra.mxu0 %v2074
    %2114 = vmatprep.subr.bf16.mxu0 0
    %2115 = vmatpush2.bf16.msra.mxu0 0
    %2116 = vmatprep.subr.bf16.mxu0 0
    %2117 = vmatpush2.bf16.msra.mxu0 0
    %2118 = vmatprep.subr.bf16.mxu0 0
    %2119 = vmatpush2.bf16.msra.mxu0 0
    %2120 = vmatprep.subr.bf16.mxu0 0
    %2121 = vmatpush2.bf16.msra.mxu0 0
    %2122 = vmatprep.subr.bf16.mxu0 0
    %2123 = vmatpush2.bf16.msra.mxu0 0
    %2124 = vmatprep.subr.bf16.mxu0 0
    %2125 = vmatpush2.bf16.msra.mxu0 0
    %2126 = vmatprep.subr.bf16.mxu0 0
    %2127 = vmatpush2.bf16.msra.mxu0 0
    %2128 = vmatprep.subr.bf16.mxu0 0
    %2129 = vmatpush2.bf16.msra.mxu0 0
    %2130 = vmatprep.mubr.bf16.mxu0 0
    %2131 = vmatmul.mubr.bf16.gmra.mxu0 %v2087
    %v2132 = vpop.f32.mrf.mxu0
    %v2133 = vadd.f32 %v2048, %v2132
    %v2134 = vpop.f32.mrf.mxu0
    %v2135 = vpop.f32.mrf.mxu0
    %v2136 = vadd.f32 %v2048, %v2135
    %v2137 = vpop.f32.mrf.mxu0
    %2138 = vmatprep.mubr.bf16.mxu0 0
    %2139 = vmatmul.mubr.bf16.gmra.mxu0 %v2090
    %v2140 = vpop.f32.mrf.mxu0
    %v2141 = vadd.f32 %v2048, %v2140
    %v2142 = vpop.f32.mrf.mxu0
    %v2143 = vpop.f32.mrf.mxu0
    %v2144 = vadd.f32 %v2048, %v2143
    %v2145 = vpop.f32.mrf.mxu0
    %2146 = vmatprep.mubr.bf16.mxu0 0
    %2147 = vmatmul.mubr.bf16.gmra.mxu0 %v2093
    %v2148 = vpop.f32.mrf.mxu0
    %v2149 = vadd.f32 %v2048, %v2148
    %v2150 = vpop.f32.mrf.mxu0
    %v2151 = vpop.f32.mrf.mxu0
    %v2152 = vadd.f32 %v2048, %v2151
    %v2153 = vpop.f32.mrf.mxu0
    %2154 = vmatprep.mubr.bf16.mxu0 0
    %2155 = vmatmul.mubr.bf16.gmra.mxu0 %v2096
    %v2156 = vpop.f32.mrf.mxu0
    %v2157 = vadd.f32 %v2048, %v2156
    %v2158 = vpop.f32.mrf.mxu0
    %v2159 = vpop.f32.mrf.mxu0
    %v2160 = vadd.f32 %v2048, %v2159
    %v2161 = vpop.f32.mrf.mxu0
    %2162 = vdwg.mxu0
    %v2163 = vld [vmem:[%s51] sm:$0xff]
    %v2164 = vld [vmem:[%s51 + $0x8] sm:$0xff]
    %v2165 = vld [vmem:[%s51 + $0x10] sm:$0xff]
    %v2166 = vld [vmem:[%s51 + $0x18] sm:$0xff]
    %v2167 = vld [vmem:[%s53] sm:$0xf]
    %v2168 = vld [vmem:[%s47] sm:$0x1]
    %v2169 = vld [vmem:[%s49] sm:$0x1]
    %v2170 = vmul.f32 %v312, %v2133
    %v2171 = vmul.f32 %v317, %v2136
    %v2172 = vmul.f32 %v322, %v2141
    %v2173 = vmul.f32 %v327, %v2144
    %v2174 = vmul.f32 %v332, %v2149
    %v2175 = vmul.f32 %v337, %v2152
    %v2176 = vmul.f32 %v342, %v2157
    %v2177 = vmul.f32 %v347, %v2160
    %v2178 = vsel %vm965, %v2170, 0.0
    %v2179 = vsel %vm965, %v2171, 0.0
    %v2180 = vadd.f32 %v2178, %v2179
    %v2181 = vsel %vm965, %v2172, 0.0
    %v2182 = vadd.f32 %v2180, %v2181
    %v2183 = vsel %vm965, %v2173, 0.0
    %v2184 = vadd.f32 %v2182, %v2183
    %v2185 = vsel %vm965, %v2174, 0.0
    %v2186 = vadd.f32 %v2184, %v2185
    %v2187 = vsel %vm965, %v2175, 0.0
    %v2188 = vadd.f32 %v2186, %v2187
    %v2189 = vsel %vm965, %v2176, 0.0
    %v2190 = vadd.f32 %v2188, %v2189
    %v2191 = vsel %vm965, %v2177, 0.0
    %v2192 = vadd.f32 %v2190, %v2191
    %v2193 = vrot.slane %v2192, 4
    %v2194 = vadd.f32 %v2192, %v2193
    %v2195 = vrot.slane %v2194, 2
    %v2196 = vadd.f32 %v2194, %v2195
    %v2197 = vrot.slane %v2196, 1
    %v2198 = vadd.f32 %v2196, %v2197
    %v2200 = vsel %vm965, %v2198, 0
    %2202 = vmatprep.subr.mxu0 0.0
    %2203 = vmatpush1.msra.mxu0 0.0
    %2204 = vmatprep.subr.mxu0 0.0
    %2205 = vmatpush1.msra.mxu0 0.0
    %2206 = vmatprep.subr.mxu0 0.0
    %2207 = vmatpush1.msra.mxu0 0.0
    %2208 = vmatprep.subr.mxu0 0.0
    %2209 = vmatpush1.msra.mxu0 0.0
    %2210 = vmatprep.subr.mxu0 0.0
    %2211 = vmatpush1.msra.mxu0 0.0
    %2212 = vmatprep.subr.mxu0 0.0
    %2213 = vmatpush1.msra.mxu0 0.0
    %2214 = vmatprep.subr.mxu0 0.0
    %2215 = vmatpush1.msra.mxu0 0.0
    %2216 = vmatprep.subr.mxu0 0.0
    %2217 = vmatpush1.msra.mxu0 0.0
    %2218 = vmatprep.subr.mxu0 0.0
    %2219 = vmatpush1.msra.mxu0 0.0
    %2220 = vmatprep.subr.mxu0 0.0
    %2221 = vmatpush1.msra.mxu0 0.0
    %2222 = vmatprep.subr.mxu0 0.0
    %2223 = vmatpush1.msra.mxu0 0.0
    %2224 = vmatprep.subr.mxu0 0.0
    %2225 = vmatpush1.msra.mxu0 0.0
    %2226 = vmatprep.subr.mxu0 0.0
    %2227 = vmatpush1.msra.mxu0 %v2166
    %2228 = vmatprep.subr.mxu0 0.0
    %2229 = vmatpush1.msra.mxu0 %v2165
    %2230 = vmatprep.subr.mxu0 0.0
    %2231 = vmatpush1.msra.mxu0 %v2164
    %2232 = vmatprep.subr.mxu0 0.0
    %2233 = vmatpush1.msra.mxu0 %v2163
    %2234 = vmatprep.subr.mxu0 0.0
    %2235 = vmatpush2.msra.mxu0 0.0
    %2236 = vmatprep.subr.mxu0 0.0
    %2237 = vmatpush2.msra.mxu0 0.0
    %2238 = vmatprep.subr.mxu0 0.0
    %2239 = vmatpush2.msra.mxu0 0.0
    %2240 = vmatprep.subr.mxu0 0.0
    %2241 = vmatpush2.msra.mxu0 0.0
    %2242 = vmatprep.subr.mxu0 0.0
    %2243 = vmatpush2.msra.mxu0 0.0
    %2244 = vmatprep.subr.mxu0 0.0
    %2245 = vmatpush2.msra.mxu0 0.0
    %2246 = vmatprep.subr.mxu0 0.0
    %2247 = vmatpush2.msra.mxu0 0.0
    %2248 = vmatprep.subr.mxu0 0.0
    %2249 = vmatpush2.msra.mxu0 0.0
    %2250 = vmatprep.subr.mxu0 0.0
    %2251 = vmatpush2.msra.mxu0 0.0
    %2252 = vmatprep.subr.mxu0 0.0
    %2253 = vmatpush2.msra.mxu0 0.0
    %2254 = vmatprep.subr.mxu0 0.0
    %2255 = vmatpush2.msra.mxu0 0.0
    %2256 = vmatprep.subr.mxu0 0.0
    %2257 = vmatpush2.msra.mxu0 0.0
    %2258 = vmatprep.subr.mxu0 0.0
    %2259 = vmatpush2.msra.mxu0 0.0
    %2260 = vmatprep.subr.mxu0 0.0
    %2261 = vmatpush2.msra.mxu0 0.0
    %2262 = vmatprep.subr.mxu0 0.0
    %2263 = vmatpush2.msra.mxu0 0.0
    %2264 = vmatprep.subr.mxu0 0.0
    %2265 = vmatpush2.msra.mxu0 0.0
    %2266 = vmatprep.mubr.f32.mxu0 0.0
    %2267 = vmatmul.mubr.f32.gmra.mxu0 %v2200
    %v2268 = vpop.f32.mrf.mxu0
    %v2269 = vadd.f32 0.0, %v2268
    %v2270 = vpop.f32.mrf.mxu0
    %2271 = vdwg.mxu0
    %v2273 = vsel %vm1060, %v2269, 0
    %v2276 = vsel %vm456, %v2167, 0
    %2278 = vmatprep.subr.mxu0 0.0
    %2279 = vmatpush1.msra.mxu0 0.0
    %2280 = vmatprep.subr.mxu0 0.0
    %2281 = vmatpush1.msra.mxu0 0.0
    %2282 = vmatprep.subr.mxu0 0.0
    %2283 = vmatpush1.msra.mxu0 0.0
    %2284 = vmatprep.subr.mxu0 0.0
    %2285 = vmatpush1.msra.mxu0 0.0
    %2286 = vmatprep.subr.mxu0 0.0
    %2287 = vmatpush1.msra.mxu0 0.0
    %2288 = vmatprep.subr.mxu0 0.0
    %2289 = vmatpush1.msra.mxu0 0.0
    %2290 = vmatprep.subr.mxu0 0.0
    %2291 = vmatpush1.msra.mxu0 0.0
    %2292 = vmatprep.subr.mxu0 0.0
    %2293 = vmatpush1.msra.mxu0 0.0
    %2294 = vmatprep.subr.mxu0 0.0
    %2295 = vmatpush1.msra.mxu0 0.0
    %2296 = vmatprep.subr.mxu0 0.0
    %2297 = vmatpush1.msra.mxu0 0.0
    %2298 = vmatprep.subr.mxu0 0.0
    %2299 = vmatpush1.msra.mxu0 0.0
    %2300 = vmatprep.subr.mxu0 0.0
    %2301 = vmatpush1.msra.mxu0 0.0
    %2302 = vmatprep.subr.mxu0 0.0
    %2303 = vmatpush1.msra.mxu0 0.0
    %2304 = vmatprep.subr.mxu0 0.0
    %2305 = vmatpush1.msra.mxu0 0.0
    %2306 = vmatprep.subr.mxu0 0.0
    %2307 = vmatpush1.msra.mxu0 0.0
    %2308 = vmatprep.subr.mxu0 0.0
    %2309 = vmatpush1.msra.mxu0 %v2276
    %2310 = vmatprep.subr.mxu0 0.0
    %2311 = vmatpush2.msra.mxu0 0.0
    %2312 = vmatprep.subr.mxu0 0.0
    %2313 = vmatpush2.msra.mxu0 0.0
    %2314 = vmatprep.subr.mxu0 0.0
    %2315 = vmatpush2.msra.mxu0 0.0
    %2316 = vmatprep.subr.mxu0 0.0
    %2317 = vmatpush2.msra.mxu0 0.0
    %2318 = vmatprep.subr.mxu0 0.0
    %2319 = vmatpush2.msra.mxu0 0.0
    %2320 = vmatprep.subr.mxu0 0.0
    %2321 = vmatpush2.msra.mxu0 0.0
    %2322 = vmatprep.subr.mxu0 0.0
    %2323 = vmatpush2.msra.mxu0 0.0
    %2324 = vmatprep.subr.mxu0 0.0
    %2325 = vmatpush2.msra.mxu0 0.0
    %2326 = vmatprep.subr.mxu0 0.0
    %2327 = vmatpush2.msra.mxu0 0.0
    %2328 = vmatprep.subr.mxu0 0.0
    %2329 = vmatpush2.msra.mxu0 0.0
    %2330 = vmatprep.subr.mxu0 0.0
    %2331 = vmatpush2.msra.mxu0 0.0
    %2332 = vmatprep.subr.mxu0 0.0
    %2333 = vmatpush2.msra.mxu0 0.0
    %2334 = vmatprep.subr.mxu0 0.0
    %2335 = vmatpush2.msra.mxu0 0.0
    %2336 = vmatprep.subr.mxu0 0.0
    %2337 = vmatpush2.msra.mxu0 0.0
    %2338 = vmatprep.subr.mxu0 0.0
    %2339 = vmatpush2.msra.mxu0 0.0
    %2340 = vmatprep.subr.mxu0 0.0
    %2341 = vmatpush2.msra.mxu0 0.0
    %2342 = vmatprep.mubr.f32.mxu0 0.0
    %2343 = vmatmul.mubr.f32.gmra.mxu0 %v2273
    %v2344 = vpop.f32.mrf.mxu0
    %v2345 = vadd.f32 0.0, %v2344
    %v2346 = vpop.f32.mrf.mxu0
    %2347 = vdwg.mxu0
    %v2348 = vlaneseq
    %v2349 = vshrl.u32 %v2348, 7
    %v2350 = vsub.s32 0, %v2349
    %v2351 = vrot.slane %v2345, %v2350
    %v2352 = vsub.f32 %v2133, %v2351
    %v2353 = vsub.f32 %v2136, %v2351
    %v2354 = vsub.f32 %v2141, %v2351
    %v2355 = vsub.f32 %v2144, %v2351
    %v2356 = vsub.f32 %v2149, %v2351
    %v2357 = vsub.f32 %v2152, %v2351
    %v2358 = vsub.f32 %v2157, %v2351
    %v2359 = vsub.f32 %v2160, %v2351
    %v2360 = vmul.f32 %v2352, %v2352
    %v2361 = vmul.f32 %v2353, %v2353
    %v2362 = vmul.f32 %v2354, %v2354
    %v2363 = vmul.f32 %v2355, %v2355
    %v2364 = vmul.f32 %v2356, %v2356
    %v2365 = vmul.f32 %v2357, %v2357
    %v2366 = vmul.f32 %v2358, %v2358
    %v2367 = vmul.f32 %v2359, %v2359
    %v2368 = vmul.f32 %v312, %v2360
    %v2369 = vmul.f32 %v317, %v2361
    %v2370 = vmul.f32 %v322, %v2362
    %v2371 = vmul.f32 %v327, %v2363
    %v2372 = vmul.f32 %v332, %v2364
    %v2373 = vmul.f32 %v337, %v2365
    %v2374 = vmul.f32 %v342, %v2366
    %v2375 = vmul.f32 %v347, %v2367
    %v2376 = vsel %vm965, %v2368, 0.0
    %v2377 = vsel %vm965, %v2369, 0.0
    %v2378 = vadd.f32 %v2376, %v2377
    %v2379 = vsel %vm965, %v2370, 0.0
    %v2380 = vadd.f32 %v2378, %v2379
    %v2381 = vsel %vm965, %v2371, 0.0
    %v2382 = vadd.f32 %v2380, %v2381
    %v2383 = vsel %vm965, %v2372, 0.0
    %v2384 = vadd.f32 %v2382, %v2383
    %v2385 = vsel %vm965, %v2373, 0.0
    %v2386 = vadd.f32 %v2384, %v2385
    %v2387 = vsel %vm965, %v2374, 0.0
    %v2388 = vadd.f32 %v2386, %v2387
    %v2389 = vsel %vm965, %v2375, 0.0
    %v2390 = vadd.f32 %v2388, %v2389
    %v2391 = vrot.slane %v2390, 4
    %v2392 = vadd.f32 %v2390, %v2391
    %v2393 = vrot.slane %v2392, 2
    %v2394 = vadd.f32 %v2392, %v2393
    %v2395 = vrot.slane %v2394, 1
    %v2396 = vadd.f32 %v2394, %v2395
    %v2398 = vsel %vm965, %v2396, 0
    %2400 = vmatprep.subr.mxu0 0.0
    %2401 = vmatpush1.msra.mxu0 0.0
    %2402 = vmatprep.subr.mxu0 0.0
    %2403 = vmatpush1.msra.mxu0 0.0
    %2404 = vmatprep.subr.mxu0 0.0
    %2405 = vmatpush1.msra.mxu0 0.0
    %2406 = vmatprep.subr.mxu0 0.0
    %2407 = vmatpush1.msra.mxu0 0.0
    %2408 = vmatprep.subr.mxu0 0.0
    %2409 = vmatpush1.msra.mxu0 0.0
    %2410 = vmatprep.subr.mxu0 0.0
    %2411 = vmatpush1.msra.mxu0 0.0
    %2412 = vmatprep.subr.mxu0 0.0
    %2413 = vmatpush1.msra.mxu0 0.0
    %2414 = vmatprep.subr.mxu0 0.0
    %2415 = vmatpush1.msra.mxu0 0.0
    %2416 = vmatprep.subr.mxu0 0.0
    %2417 = vmatpush1.msra.mxu0 0.0
    %2418 = vmatprep.subr.mxu0 0.0
    %2419 = vmatpush1.msra.mxu0 0.0
    %2420 = vmatprep.subr.mxu0 0.0
    %2421 = vmatpush1.msra.mxu0 0.0
    %2422 = vmatprep.subr.mxu0 0.0
    %2423 = vmatpush1.msra.mxu0 0.0
    %2424 = vmatprep.subr.mxu0 0.0
    %2425 = vmatpush1.msra.mxu0 %v2166
    %2426 = vmatprep.subr.mxu0 0.0
    %2427 = vmatpush1.msra.mxu0 %v2165
    %2428 = vmatprep.subr.mxu0 0.0
    %2429 = vmatpush1.msra.mxu0 %v2164
    %2430 = vmatprep.subr.mxu0 0.0
    %2431 = vmatpush1.msra.mxu0 %v2163
    %2432 = vmatprep.subr.mxu0 0.0
    %2433 = vmatpush2.msra.mxu0 0.0
    %2434 = vmatprep.subr.mxu0 0.0
    %2435 = vmatpush2.msra.mxu0 0.0
    %2436 = vmatprep.subr.mxu0 0.0
    %2437 = vmatpush2.msra.mxu0 0.0
    %2438 = vmatprep.subr.mxu0 0.0
    %2439 = vmatpush2.msra.mxu0 0.0
    %2440 = vmatprep.subr.mxu0 0.0
    %2441 = vmatpush2.msra.mxu0 0.0
    %2442 = vmatprep.subr.mxu0 0.0
    %2443 = vmatpush2.msra.mxu0 0.0
    %2444 = vmatprep.subr.mxu0 0.0
    %2445 = vmatpush2.msra.mxu0 0.0
    %2446 = vmatprep.subr.mxu0 0.0
    %2447 = vmatpush2.msra.mxu0 0.0
    %2448 = vmatprep.subr.mxu0 0.0
    %2449 = vmatpush2.msra.mxu0 0.0
    %2450 = vmatprep.subr.mxu0 0.0
    %2451 = vmatpush2.msra.mxu0 0.0
    %2452 = vmatprep.subr.mxu0 0.0
    %2453 = vmatpush2.msra.mxu0 0.0
    %2454 = vmatprep.subr.mxu0 0.0
    %2455 = vmatpush2.msra.mxu0 0.0
    %2456 = vmatprep.subr.mxu0 0.0
    %2457 = vmatpush2.msra.mxu0 0.0
    %2458 = vmatprep.subr.mxu0 0.0
    %2459 = vmatpush2.msra.mxu0 0.0
    %2460 = vmatprep.subr.mxu0 0.0
    %2461 = vmatpush2.msra.mxu0 0.0
    %2462 = vmatprep.subr.mxu0 0.0
    %2463 = vmatpush2.msra.mxu0 0.0
    %2464 = vmatprep.mubr.f32.mxu0 0.0
    %2465 = vmatmul.mubr.f32.gmra.mxu0 %v2398
    %v2466 = vpop.f32.mrf.mxu0
    %v2467 = vadd.f32 1e-05, %v2466
    %v2468 = vpop.f32.mrf.mxu0
    %2469 = vdwg.mxu0
    %v2470 = vrsqrt.pop %v2467
    %v2472 = vsel %vm1060, %v2470, 0
    %2474 = vmatprep.subr.mxu0 0.0
    %2475 = vmatpush1.msra.mxu0 0.0
    %2476 = vmatprep.subr.mxu0 0.0
    %2477 = vmatpush1.msra.mxu0 0.0
    %2478 = vmatprep.subr.mxu0 0.0
    %2479 = vmatpush1.msra.mxu0 0.0
    %2480 = vmatprep.subr.mxu0 0.0
    %2481 = vmatpush1.msra.mxu0 0.0
    %2482 = vmatprep.subr.mxu0 0.0
    %2483 = vmatpush1.msra.mxu0 0.0
    %2484 = vmatprep.subr.mxu0 0.0
    %2485 = vmatpush1.msra.mxu0 0.0
    %2486 = vmatprep.subr.mxu0 0.0
    %2487 = vmatpush1.msra.mxu0 0.0
    %2488 = vmatprep.subr.mxu0 0.0
    %2489 = vmatpush1.msra.mxu0 0.0
    %2490 = vmatprep.subr.mxu0 0.0
    %2491 = vmatpush1.msra.mxu0 0.0
    %2492 = vmatprep.subr.mxu0 0.0
    %2493 = vmatpush1.msra.mxu0 0.0
    %2494 = vmatprep.subr.mxu0 0.0
    %2495 = vmatpush1.msra.mxu0 0.0
    %2496 = vmatprep.subr.mxu0 0.0
    %2497 = vmatpush1.msra.mxu0 0.0
    %2498 = vmatprep.subr.mxu0 0.0
    %2499 = vmatpush1.msra.mxu0 0.0
    %2500 = vmatprep.subr.mxu0 0.0
    %2501 = vmatpush1.msra.mxu0 0.0
    %2502 = vmatprep.subr.mxu0 0.0
    %2503 = vmatpush1.msra.mxu0 0.0
    %2504 = vmatprep.subr.mxu0 0.0
    %2505 = vmatpush1.msra.mxu0 %v2276
    %2506 = vmatprep.subr.mxu0 0.0
    %2507 = vmatpush2.msra.mxu0 0.0
    %2508 = vmatprep.subr.mxu0 0.0
    %2509 = vmatpush2.msra.mxu0 0.0
    %2510 = vmatprep.subr.mxu0 0.0
    %2511 = vmatpush2.msra.mxu0 0.0
    %2512 = vmatprep.subr.mxu0 0.0
    %2513 = vmatpush2.msra.mxu0 0.0
    %2514 = vmatprep.subr.mxu0 0.0
    %2515 = vmatpush2.msra.mxu0 0.0
    %2516 = vmatprep.subr.mxu0 0.0
    %2517 = vmatpush2.msra.mxu0 0.0
    %2518 = vmatprep.subr.mxu0 0.0
    %2519 = vmatpush2.msra.mxu0 0.0
    %2520 = vmatprep.subr.mxu0 0.0
    %2521 = vmatpush2.msra.mxu0 0.0
    %2522 = vmatprep.subr.mxu0 0.0
    %2523 = vmatpush2.msra.mxu0 0.0
    %2524 = vmatprep.subr.mxu0 0.0
    %2525 = vmatpush2.msra.mxu0 0.0
    %2526 = vmatprep.subr.mxu0 0.0
    %2527 = vmatpush2.msra.mxu0 0.0
    %2528 = vmatprep.subr.mxu0 0.0
    %2529 = vmatpush2.msra.mxu0 0.0
    %2530 = vmatprep.subr.mxu0 0.0
    %2531 = vmatpush2.msra.mxu0 0.0
    %2532 = vmatprep.subr.mxu0 0.0
    %2533 = vmatpush2.msra.mxu0 0.0
    %2534 = vmatprep.subr.mxu0 0.0
    %2535 = vmatpush2.msra.mxu0 0.0
    %2536 = vmatprep.subr.mxu0 0.0
    %2537 = vmatpush2.msra.mxu0 0.0
    %2538 = vmatprep.mubr.f32.mxu0 0.0
    %2539 = vmatmul.mubr.f32.gmra.mxu0 %v2472
    %v2540 = vpop.f32.mrf.mxu0
    %v2541 = vadd.f32 0.0, %v2540
    %v2542 = vpop.f32.mrf.mxu0
    %2543 = vdwg.mxu0
    %v2545 = vlaneseq
    %v2546 = vshrl.u32 %v2545, 7
    %v2547 = vsub.s32 0, %v2546
    %v2548 = vrot.slane %v2168, %v2547
    %v2550 = vmul.f32 %v2548, %v2352
    %v2551 = vmul.f32 %v2548, %v2353
    %v2552 = vmul.f32 %v2548, %v2354
    %v2553 = vmul.f32 %v2548, %v2355
    %v2554 = vmul.f32 %v2548, %v2356
    %v2555 = vmul.f32 %v2548, %v2357
    %v2556 = vmul.f32 %v2548, %v2358
    %v2557 = vmul.f32 %v2548, %v2359
    %v2558 = vlaneseq
    %v2559 = vshrl.u32 %v2558, 7
    %v2560 = vsub.s32 0, %v2559
    %v2561 = vrot.slane %v2541, %v2560
    %v2562 = vmul.f32 %v2550, %v2561
    %v2563 = vmul.f32 %v2551, %v2561
    %v2564 = vmul.f32 %v2552, %v2561
    %v2565 = vmul.f32 %v2553, %v2561
    %v2566 = vmul.f32 %v2554, %v2561
    %v2567 = vmul.f32 %v2555, %v2561
    %v2568 = vmul.f32 %v2556, %v2561
    %v2569 = vmul.f32 %v2557, %v2561
    %v2571 = vlaneseq
    %v2572 = vshrl.u32 %v2571, 7
    %v2573 = vsub.s32 0, %v2572
    %v2574 = vrot.slane %v2169, %v2573
    %v2576 = vadd.f32 %v2562, %v2574
    %v2577 = vadd.f32 %v2563, %v2574
    %v2578 = vadd.f32 %v2564, %v2574
    %v2579 = vadd.f32 %v2565, %v2574
    %v2580 = vadd.f32 %v2566, %v2574
    %v2581 = vadd.f32 %v2567, %v2574
    %v2582 = vadd.f32 %v2568, %v2574
    %v2583 = vadd.f32 %v2569, %v2574
    %vm2584 = vcmp.gt.f32.partialorder %v2576, 0.0
    %vm2585 = vcmp.gt.f32.partialorder %v2577, 0.0
    %vm2586 = vcmp.gt.f32.partialorder %v2578, 0.0
    %vm2587 = vcmp.gt.f32.partialorder %v2579, 0.0
    %vm2588 = vcmp.gt.f32.partialorder %v2580, 0.0
    %vm2589 = vcmp.gt.f32.partialorder %v2581, 0.0
    %vm2590 = vcmp.gt.f32.partialorder %v2582, 0.0
    %vm2591 = vcmp.gt.f32.partialorder %v2583, 0.0
    %v2592 = vmin.f32 %v2576, 0.0
    %v2593 = vmin.f32 %v2577, 0.0
    %v2594 = vmin.f32 %v2578, 0.0
    %v2595 = vmin.f32 %v2579, 0.0
    %v2596 = vmin.f32 %v2580, 0.0
    %v2597 = vmin.f32 %v2581, 0.0
    %v2598 = vmin.f32 %v2582, 0.0
    %v2599 = vmin.f32 %v2583, 0.0
    %v2600 = vmul.f32 %v2592, 1.442695
    %v2601 = vpow.pop %v2600
    %v2602 = vmul.f32 %v2593, 1.442695
    %v2603 = vpow.pop %v2602
    %v2604 = vmul.f32 %v2594, 1.442695
    %v2605 = vpow.pop %v2604
    %v2606 = vmul.f32 %v2595, 1.442695
    %v2607 = vpow.pop %v2606
    %v2608 = vmul.f32 %v2596, 1.442695
    %v2609 = vpow.pop %v2608
    %v2610 = vmul.f32 %v2597, 1.442695
    %v2611 = vpow.pop %v2610
    %v2612 = vmul.f32 %v2598, 1.442695
    %v2613 = vpow.pop %v2612
    %v2614 = vmul.f32 %v2599, 1.442695
    %v2615 = vpow.pop %v2614
    %v2616 = vsub.f32 %v2601, 1.0
    %v2617 = vsub.f32 %v2603, 1.0
    %v2618 = vsub.f32 %v2605, 1.0
    %v2619 = vsub.f32 %v2607, 1.0
    %v2620 = vsub.f32 %v2609, 1.0
    %v2621 = vsub.f32 %v2611, 1.0
    %v2622 = vsub.f32 %v2613, 1.0
    %v2623 = vsub.f32 %v2615, 1.0
    %v2624 = vsel %vm2584, %v2576, %v2616
    %v2625 = vsel %vm2585, %v2577, %v2617
    %v2626 = vsel %vm2586, %v2578, %v2618
    %v2627 = vsel %vm2587, %v2579, %v2619
    %v2628 = vsel %vm2588, %v2580, %v2620
    %v2629 = vsel %vm2589, %v2581, %v2621
    %v2630 = vsel %vm2590, %v2582, %v2622
    %v2631 = vsel %vm2591, %v2583, %v2623
    %v2632 = vpack.c.bf16 %v1414, %v1413
    %v2633 = vpack.c.bf16 %v1416, %v1415
    %v2634 = vpack.c.bf16 %v1418, %v1417
    %v2635 = vpack.c.bf16 %v1420, %v1419
    %v2636 = vld [vmem:[%s55] sm:$0xf]
    %v2637 = vld [vmem:[%s55 + $0x4] sm:$0xf]
    %v2638 = vld [vmem:[%s55 + $0x8] sm:$0xf]
    %v2639 = vld [vmem:[%s55 + $0xc] sm:$0xf]
    %v2640 = vpack.c.bf16 %v2625, %v2624
    %v2641 = vpack.c.bf16 %v2627, %v2626
    %v2642 = vpack.c.bf16 %v2629, %v2628
    %v2643 = vpack.c.bf16 %v2631, %v2630
    %v2644 = vld [vmem:[%s57] sm:$0xf]
    %v2645 = vld [vmem:[%s57 + $0x4] sm:$0xf]
    %v2646 = vld [vmem:[%s57 + $0x8] sm:$0xf]
    %v2647 = vld [vmem:[%s57 + $0xc] sm:$0xf]
    %v2652 = vunpack.c.l.b16 %v2644
    %v2653 = vunpack.c.l.b16 %v2645
    %v2654 = vunpack.c.l.b16 %v2646
    %v2655 = vunpack.c.l.b16 %v2647
    %v2656 = vpack.c.b16 %v2653, %v2652
    %v2657 = vpack.c.b16 %v2655, %v2654
    %v2661 = vsel %vm965, %v2640, 0
    %v2664 = vsel %vm965, %v2641, 0
    %v2667 = vsel %vm965, %v2642, 0
    %v2670 = vsel %vm965, %v2643, 0
    %2672 = vmatprep.subr.bf16.mxu0 0
    %2673 = vmatpush1.bf16.msra.mxu0 0
    %2674 = vmatprep.subr.bf16.mxu0 0
    %2675 = vmatpush1.bf16.msra.mxu0 0
    %2676 = vmatprep.subr.bf16.mxu0 0
    %2677 = vmatpush1.bf16.msra.mxu0 0
    %2678 = vmatprep.subr.bf16.mxu0 0
    %2679 = vmatpush1.bf16.msra.mxu0 0
    %2680 = vmatprep.subr.bf16.mxu0 0
    %2681 = vmatpush1.bf16.msra.mxu0 0
    %2682 = vmatprep.subr.bf16.mxu0 0
    %2683 = vmatpush1.bf16.msra.mxu0 0
    %2684 = vmatprep.subr.bf16.mxu0 0
    %2685 = vmatpush1.bf16.msra.mxu0 %v2657
    %2686 = vmatprep.subr.bf16.mxu0 0
    %2687 = vmatpush1.bf16.msra.mxu0 %v2656
    %2688 = vmatprep.subr.bf16.mxu0 0
    %2689 = vmatpush2.bf16.msra.mxu0 0
    %2690 = vmatprep.subr.bf16.mxu0 0
    %2691 = vmatpush2.bf16.msra.mxu0 0
    %2692 = vmatprep.subr.bf16.mxu0 0
    %2693 = vmatpush2.bf16.msra.mxu0 0
    %2694 = vmatprep.subr.bf16.mxu0 0
    %2695 = vmatpush2.bf16.msra.mxu0 0
    %2696 = vmatprep.subr.bf16.mxu0 0
    %2697 = vmatpush2.bf16.msra.mxu0 0
    %2698 = vmatprep.subr.bf16.mxu0 0
    %2699 = vmatpush2.bf16.msra.mxu0 0
    %2700 = vmatprep.subr.bf16.mxu0 0
    %2701 = vmatpush2.bf16.msra.mxu0 0
    %2702 = vmatprep.subr.bf16.mxu0 0
    %2703 = vmatpush2.bf16.msra.mxu0 0
    %2704 = vmatprep.mubr.bf16.mxu0 0
    %2705 = vmatmul.mubr.bf16.gmra.mxu0 %v2661
    %v2706 = vpop.f32.mrf.mxu0
    %v2707 = vadd.f32 0.0, %v2706
    %v2708 = vpop.f32.mrf.mxu0
    %v2709 = vpop.f32.mrf.mxu0
    %v2710 = vadd.f32 0.0, %v2709
    %v2711 = vpop.f32.mrf.mxu0
    %2712 = vmatprep.mubr.bf16.mxu0 0
    %2713 = vmatmul.mubr.bf16.gmra.mxu0 %v2664
    %v2714 = vpop.f32.mrf.mxu0
    %v2715 = vadd.f32 0.0, %v2714
    %v2716 = vpop.f32.mrf.mxu0
    %v2717 = vpop.f32.mrf.mxu0
    %v2718 = vadd.f32 0.0, %v2717
    %v2719 = vpop.f32.mrf.mxu0
    %2720 = vmatprep.mubr.bf16.mxu0 0
    %2721 = vmatmul.mubr.bf16.gmra.mxu0 %v2667
    %v2722 = vpop.f32.mrf.mxu0
    %v2723 = vadd.f32 0.0, %v2722
    %v2724 = vpop.f32.mrf.mxu0
    %v2725 = vpop.f32.mrf.mxu0
    %v2726 = vadd.f32 0.0, %v2725
    %v2727 = vpop.f32.mrf.mxu0
    %2728 = vmatprep.mubr.bf16.mxu0 0
    %2729 = vmatmul.mubr.bf16.gmra.mxu0 %v2670
    %v2730 = vpop.f32.mrf.mxu0
    %v2731 = vadd.f32 0.0, %v2730
    %v2732 = vpop.f32.mrf.mxu0
    %v2733 = vpop.f32.mrf.mxu0
    %v2734 = vadd.f32 0.0, %v2733
    %v2735 = vpop.f32.mrf.mxu0
    %2736 = vdwg.mxu0
    %v2741 = vunpack.c.l.b16 %v2636
    %v2742 = vunpack.c.l.b16 %v2637
    %v2743 = vunpack.c.l.b16 %v2638
    %v2744 = vunpack.c.l.b16 %v2639
    %v2745 = vpack.c.b16 %v2742, %v2741
    %v2746 = vpack.c.b16 %v2744, %v2743
    %v2750 = vsel %vm965, %v2632, 0
    %v2753 = vsel %vm965, %v2633, 0
    %v2756 = vsel %vm965, %v2634, 0
    %v2759 = vsel %vm965, %v2635, 0
    %2761 = vmatprep.subr.bf16.mxu0 0
    %2762 = vmatpush1.bf16.msra.mxu0 0
    %2763 = vmatprep.subr.bf16.mxu0 0
    %2764 = vmatpush1.bf16.msra.mxu0 0
    %2765 = vmatprep.subr.bf16.mxu0 0
    %2766 = vmatpush1.bf16.msra.mxu0 0
    %2767 = vmatprep.subr.bf16.mxu0 0
    %2768 = vmatpush1.bf16.msra.mxu0 0
    %2769 = vmatprep.subr.bf16.mxu0 0
    %2770 = vmatpush1.bf16.msra.mxu0 0
    %2771 = vmatprep.subr.bf16.mxu0 0
    %2772 = vmatpush1.bf16.msra.mxu0 0
    %2773 = vmatprep.subr.bf16.mxu0 0
    %2774 = vmatpush1.bf16.msra.mxu0 %v2746
    %2775 = vmatprep.subr.bf16.mxu0 0
    %2776 = vmatpush1.bf16.msra.mxu0 %v2745
    %2777 = vmatprep.subr.bf16.mxu0 0
    %2778 = vmatpush2.bf16.msra.mxu0 0
    %2779 = vmatprep.subr.bf16.mxu0 0
    %2780 = vmatpush2.bf16.msra.mxu0 0
    %2781 = vmatprep.subr.bf16.mxu0 0
    %2782 = vmatpush2.bf16.msra.mxu0 0
    %2783 = vmatprep.subr.bf16.mxu0 0
    %2784 = vmatpush2.bf16.msra.mxu0 0
    %2785 = vmatprep.subr.bf16.mxu0 0
    %2786 = vmatpush2.bf16.msra.mxu0 0
    %2787 = vmatprep.subr.bf16.mxu0 0
    %2788 = vmatpush2.bf16.msra.mxu0 0
    %2789 = vmatprep.subr.bf16.mxu0 0
    %2790 = vmatpush2.bf16.msra.mxu0 0
    %2791 = vmatprep.subr.bf16.mxu0 0
    %2792 = vmatpush2.bf16.msra.mxu0 0
    %2793 = vmatprep.mubr.bf16.mxu0 0
    %2794 = vmatmul.mubr.bf16.gmra.mxu0 %v2750
    %v2795 = vpop.f32.mrf.mxu0
    %v2796 = vadd.f32 %v2707, %v2795
    %v2797 = vpop.f32.mrf.mxu0
    %v2798 = vpop.f32.mrf.mxu0
    %v2799 = vadd.f32 %v2710, %v2798
    %v2800 = vpop.f32.mrf.mxu0
    %2801 = vmatprep.mubr.bf16.mxu0 0
    %2802 = vmatmul.mubr.bf16.gmra.mxu0 %v2753
    %v2803 = vpop.f32.mrf.mxu0
    %v2804 = vadd.f32 %v2715, %v2803
    %v2805 = vpop.f32.mrf.mxu0
    %v2806 = vpop.f32.mrf.mxu0
    %v2807 = vadd.f32 %v2718, %v2806
    %v2808 = vpop.f32.mrf.mxu0
    %2809 = vmatprep.mubr.bf16.mxu0 0
    %2810 = vmatmul.mubr.bf16.gmra.mxu0 %v2756
    %v2811 = vpop.f32.mrf.mxu0
    %v2812 = vadd.f32 %v2723, %v2811
    %v2813 = vpop.f32.mrf.mxu0
    %v2814 = vpop.f32.mrf.mxu0
    %v2815 = vadd.f32 %v2726, %v2814
    %v2816 = vpop.f32.mrf.mxu0
    %2817 = vmatprep.mubr.bf16.mxu0 0
    %2818 = vmatmul.mubr.bf16.gmra.mxu0 %v2759
    %v2819 = vpop.f32.mrf.mxu0
    %v2820 = vadd.f32 %v2731, %v2819
    %v2821 = vpop.f32.mrf.mxu0
    %v2822 = vpop.f32.mrf.mxu0
    %v2823 = vadd.f32 %v2734, %v2822
    %v2824 = vpop.f32.mrf.mxu0
    %2825 = vdwg.mxu0
    %v2826 = vld [vmem:[%s59] sm:$0x1]
    %v2828 = vlaneseq
    %v2829 = vshrl.u32 %v2828, 7
    %v2830 = vsub.s32 0, %v2829
    %v2831 = vrot.slane %v2826, %v2830
    %v2833 = vadd.f32 %v2796, %v2831
    %v2834 = vadd.f32 %v2799, %v2831
    %v2835 = vadd.f32 %v2804, %v2831
    %v2836 = vadd.f32 %v2807, %v2831
    %v2837 = vadd.f32 %v2812, %v2831
    %v2838 = vadd.f32 %v2815, %v2831
    %v2839 = vadd.f32 %v2820, %v2831
    %v2840 = vadd.f32 %v2823, %v2831
    %v2841 = vld [vmem:[%s61] sm:$0x1]
    %v2842 = vld [vmem:[%s63] sm:$0x1]
    %v2843 = vmul.f32 %v312, %v2833
    %v2844 = vmul.f32 %v317, %v2834
    %v2845 = vmul.f32 %v322, %v2835
    %v2846 = vmul.f32 %v327, %v2836
    %v2847 = vmul.f32 %v332, %v2837
    %v2848 = vmul.f32 %v337, %v2838
    %v2849 = vmul.f32 %v342, %v2839
    %v2850 = vmul.f32 %v347, %v2840
    %v2851 = vsel %vm965, %v2843, 0.0
    %v2852 = vsel %vm965, %v2844, 0.0
    %v2853 = vadd.f32 %v2851, %v2852
    %v2854 = vsel %vm965, %v2845, 0.0
    %v2855 = vadd.f32 %v2853, %v2854
    %v2856 = vsel %vm965, %v2846, 0.0
    %v2857 = vadd.f32 %v2855, %v2856
    %v2858 = vsel %vm965, %v2847, 0.0
    %v2859 = vadd.f32 %v2857, %v2858
    %v2860 = vsel %vm965, %v2848, 0.0
    %v2861 = vadd.f32 %v2859, %v2860
    %v2862 = vsel %vm965, %v2849, 0.0
    %v2863 = vadd.f32 %v2861, %v2862
    %v2864 = vsel %vm965, %v2850, 0.0
    %v2865 = vadd.f32 %v2863, %v2864
    %v2866 = vrot.slane %v2865, 4
    %v2867 = vadd.f32 %v2865, %v2866
    %v2868 = vrot.slane %v2867, 2
    %v2869 = vadd.f32 %v2867, %v2868
    %v2870 = vrot.slane %v2869, 1
    %v2871 = vadd.f32 %v2869, %v2870
    %v2872 = vmul.f32 %v2871, 0.0625
    %v2873 = vsub.f32 %v2833, %v2872
    %v2874 = vsub.f32 %v2834, %v2872
    %v2875 = vsub.f32 %v2835, %v2872
    %v2876 = vsub.f32 %v2836, %v2872
    %v2877 = vsub.f32 %v2837, %v2872
    %v2878 = vsub.f32 %v2838, %v2872
    %v2879 = vsub.f32 %v2839, %v2872
    %v2880 = vsub.f32 %v2840, %v2872
    %v2881 = vmul.f32 %v2873, %v2873
    %v2882 = vmul.f32 %v2874, %v2874
    %v2883 = vmul.f32 %v2875, %v2875
    %v2884 = vmul.f32 %v2876, %v2876
    %v2885 = vmul.f32 %v2877, %v2877
    %v2886 = vmul.f32 %v2878, %v2878
    %v2887 = vmul.f32 %v2879, %v2879
    %v2888 = vmul.f32 %v2880, %v2880
    %v2889 = vmul.f32 %v312, %v2881
    %v2890 = vmul.f32 %v317, %v2882
    %v2891 = vmul.f32 %v322, %v2883
    %v2892 = vmul.f32 %v327, %v2884
    %v2893 = vmul.f32 %v332, %v2885
    %v2894 = vmul.f32 %v337, %v2886
    %v2895 = vmul.f32 %v342, %v2887
    %v2896 = vmul.f32 %v347, %v2888
    %v2897 = vsel %vm965, %v2889, 0.0
    %v2898 = vsel %vm965, %v2890, 0.0
    %v2899 = vadd.f32 %v2897, %v2898
    %v2900 = vsel %vm965, %v2891, 0.0
    %v2901 = vadd.f32 %v2899, %v2900
    %v2902 = vsel %vm965, %v2892, 0.0
    %v2903 = vadd.f32 %v2901, %v2902
    %v2904 = vsel %vm965, %v2893, 0.0
    %v2905 = vadd.f32 %v2903, %v2904
    %v2906 = vsel %vm965, %v2894, 0.0
    %v2907 = vadd.f32 %v2905, %v2906
    %v2908 = vsel %vm965, %v2895, 0.0
    %v2909 = vadd.f32 %v2907, %v2908
    %v2910 = vsel %vm965, %v2896, 0.0
    %v2911 = vadd.f32 %v2909, %v2910
    %v2912 = vrot.slane %v2911, 4
    %v2913 = vadd.f32 %v2911, %v2912
    %v2914 = vrot.slane %v2913, 2
    %v2915 = vadd.f32 %v2913, %v2914
    %v2916 = vrot.slane %v2915, 1
    %v2917 = vadd.f32 %v2915, %v2916
    %v2918 = vmul.f32 %v2917, 0.0625
    %v2920 = vlaneseq
    %v2921 = vshrl.u32 %v2920, 7
    %v2922 = vsub.s32 0, %v2921
    %v2923 = vrot.slane %v2841, %v2922
    %v2925 = vmul.f32 %v2923, %v2873
    %v2926 = vmul.f32 %v2923, %v2874
    %v2927 = vmul.f32 %v2923, %v2875
    %v2928 = vmul.f32 %v2923, %v2876
    %v2929 = vmul.f32 %v2923, %v2877
    %v2930 = vmul.f32 %v2923, %v2878
    %v2931 = vmul.f32 %v2923, %v2879
    %v2932 = vmul.f32 %v2923, %v2880
    %v2933 = vadd.f32 %v2918, 1e-05
    %v2934 = vrsqrt.pop %v2933
    %v2935 = vmul.f32 %v2925, %v2934
    %v2936 = vmul.f32 %v2926, %v2934
    %v2937 = vmul.f32 %v2927, %v2934
    %v2938 = vmul.f32 %v2928, %v2934
    %v2939 = vmul.f32 %v2929, %v2934
    %v2940 = vmul.f32 %v2930, %v2934
    %v2941 = vmul.f32 %v2931, %v2934
    %v2942 = vmul.f32 %v2932, %v2934
    %v2944 = vlaneseq
    %v2945 = vshrl.u32 %v2944, 7
    %v2946 = vsub.s32 0, %v2945
    %v2947 = vrot.slane %v2842, %v2946
    %v2949 = vadd.f32 %v2935, %v2947
    %v2950 = vadd.f32 %v2936, %v2947
    %v2951 = vadd.f32 %v2937, %v2947
    %v2952 = vadd.f32 %v2938, %v2947
    %v2953 = vadd.f32 %v2939, %v2947
    %v2954 = vadd.f32 %v2940, %v2947
    %v2955 = vadd.f32 %v2941, %v2947
    %v2956 = vadd.f32 %v2942, %v2947
    %vm2957 = vcmp.gt.f32.partialorder %v2949, 0.0
    %vm2958 = vcmp.gt.f32.partialorder %v2950, 0.0
    %vm2959 = vcmp.gt.f32.partialorder %v2951, 0.0
    %vm2960 = vcmp.gt.f32.partialorder %v2952, 0.0
    %vm2961 = vcmp.gt.f32.partialorder %v2953, 0.0
    %vm2962 = vcmp.gt.f32.partialorder %v2954, 0.0
    %vm2963 = vcmp.gt.f32.partialorder %v2955, 0.0
    %vm2964 = vcmp.gt.f32.partialorder %v2956, 0.0
    %v2965 = vmin.f32 %v2949, 0.0
    %v2966 = vmin.f32 %v2950, 0.0
    %v2967 = vmin.f32 %v2951, 0.0
    %v2968 = vmin.f32 %v2952, 0.0
    %v2969 = vmin.f32 %v2953, 0.0
    %v2970 = vmin.f32 %v2954, 0.0
    %v2971 = vmin.f32 %v2955, 0.0
    %v2972 = vmin.f32 %v2956, 0.0
    %v2973 = vmul.f32 %v2965, 1.442695
    %v2974 = vpow.pop %v2973
    %v2975 = vmul.f32 %v2966, 1.442695
    %v2976 = vpow.pop %v2975
    %v2977 = vmul.f32 %v2967, 1.442695
    %v2978 = vpow.pop %v2977
    %v2979 = vmul.f32 %v2968, 1.442695
    %v2980 = vpow.pop %v2979
    %v2981 = vmul.f32 %v2969, 1.442695
    %v2982 = vpow.pop %v2981
    %v2983 = vmul.f32 %v2970, 1.442695
    %v2984 = vpow.pop %v2983
    %v2985 = vmul.f32 %v2971, 1.442695
    %v2986 = vpow.pop %v2985
    %v2987 = vmul.f32 %v2972, 1.442695
    %v2988 = vpow.pop %v2987
    %v2989 = vsub.f32 %v2974, 1.0
    %v2990 = vsub.f32 %v2976, 1.0
    %v2991 = vsub.f32 %v2978, 1.0
    %v2992 = vsub.f32 %v2980, 1.0
    %v2993 = vsub.f32 %v2982, 1.0
    %v2994 = vsub.f32 %v2984, 1.0
    %v2995 = vsub.f32 %v2986, 1.0
    %v2996 = vsub.f32 %v2988, 1.0
    %v2997 = vsel %vm2957, %v2949, %v2989
    %v2998 = vsel %vm2958, %v2950, %v2990
    %v2999 = vsel %vm2959, %v2951, %v2991
    %v3000 = vsel %vm2960, %v2952, %v2992
    %v3001 = vsel %vm2961, %v2953, %v2993
    %v3002 = vsel %vm2962, %v2954, %v2994
    %v3003 = vsel %vm2963, %v2955, %v2995
    %v3004 = vsel %vm2964, %v2956, %v2996
    %v3005 = vld [vmem:[%s67] sm:$0xf]
    %v3006 = vld [vmem:[%s67 + $0x4] sm:$0xf]
    %v3007 = vld [vmem:[%s67 + $0x8] sm:$0xf]
    %v3008 = vld [vmem:[%s67 + $0xc] sm:$0xf]
    %v3009 = vld [vmem:[%s71] sm:$0xff]
    %v3010 = vld [vmem:[%s71 + $0x8] sm:$0xff]
    %v3011 = vld [vmem:[%s71 + $0x10] sm:$0xff]
    %v3012 = vld [vmem:[%s71 + $0x18] sm:$0xff]
    %v3013 = vld [vmem:[%s71 + $0x20] sm:$0xff]
    %v3014 = vld [vmem:[%s71 + $0x28] sm:$0xff]
    %v3015 = vld [vmem:[%s71 + $0x30] sm:$0xff]
    %v3016 = vld [vmem:[%s71 + $0x38] sm:$0xff]
    %v3017 = vld [vmem:[%s71 + $0x40] sm:$0xff]
    %v3018 = vld [vmem:[%s71 + $0x48] sm:$0xff]
    %v3019 = vld [vmem:[%s71 + $0x50] sm:$0xff]
    %v3020 = vld [vmem:[%s71 + $0x58] sm:$0xff]
    %v3021 = vld [vmem:[%s73] sm:$0x3]
    %v3022 = vpack.c.bf16 %v2998, %v2997
    %v3023 = vpack.c.bf16 %v3000, %v2999
    %v3024 = vpack.c.bf16 %v3002, %v3001
    %v3025 = vpack.c.bf16 %v3004, %v3003
    %v3026 = vld [vmem:[%s65] sm:$0xf]
    %v3027 = vld [vmem:[%s65 + $0x4] sm:$0xf]
    %v3028 = vld [vmem:[%s65 + $0x8] sm:$0xf]
    %v3029 = vld [vmem:[%s65 + $0xc] sm:$0xf]
    %v3030 = vld [vmem:[%s69] sm:$0x1]
    %v3032 = vlaneseq
    %v3033 = vshrl.u32 %v3032, 7
    %v3034 = vsub.s32 0, %v3033
    %v3035 = vrot.slane %v3030, %v3034
    %v3041 = vunpack.c.l.b16 %v3026
    %v3042 = vunpack.c.l.b16 %v3027
    %v3043 = vunpack.c.l.b16 %v3028
    %v3044 = vunpack.c.l.b16 %v3029
    %v3045 = vpack.c.b16 %v3042, %v3041
    %v3046 = vpack.c.b16 %v3044, %v3043
    %v3050 = vsel %vm965, %v3022, 0
    %v3053 = vsel %vm965, %v3023, 0
    %v3056 = vsel %vm965, %v3024, 0
    %v3059 = vsel %vm965, %v3025, 0
    %3061 = vmatprep.subr.bf16.mxu0 0
    %3062 = vmatpush1.bf16.msra.mxu0 0
    %3063 = vmatprep.subr.bf16.mxu0 0
    %3064 = vmatpush1.bf16.msra.mxu0 0
    %3065 = vmatprep.subr.bf16.mxu0 0
    %3066 = vmatpush1.bf16.msra.mxu0 0
    %3067 = vmatprep.subr.bf16.mxu0 0
    %3068 = vmatpush1.bf16.msra.mxu0 0
    %3069 = vmatprep.subr.bf16.mxu0 0
    %3070 = vmatpush1.bf16.msra.mxu0 0
    %3071 = vmatprep.subr.bf16.mxu0 0
    %3072 = vmatpush1.bf16.msra.mxu0 0
    %3073 = vmatprep.subr.bf16.mxu0 0
    %3074 = vmatpush1.bf16.msra.mxu0 %v3046
    %3075 = vmatprep.subr.bf16.mxu0 0
    %3076 = vmatpush1.bf16.msra.mxu0 %v3045
    %3077 = vmatprep.subr.bf16.mxu0 0
    %3078 = vmatpush2.bf16.msra.mxu0 0
    %3079 = vmatprep.subr.bf16.mxu0 0
    %3080 = vmatpush2.bf16.msra.mxu0 0
    %3081 = vmatprep.subr.bf16.mxu0 0
    %3082 = vmatpush2.bf16.msra.mxu0 0
    %3083 = vmatprep.subr.bf16.mxu0 0
    %3084 = vmatpush2.bf16.msra.mxu0 0
    %3085 = vmatprep.subr.bf16.mxu0 0
    %3086 = vmatpush2.bf16.msra.mxu0 0
    %3087 = vmatprep.subr.bf16.mxu0 0
    %3088 = vmatpush2.bf16.msra.mxu0 0
    %3089 = vmatprep.subr.bf16.mxu0 0
    %3090 = vmatpush2.bf16.msra.mxu0 0
    %3091 = vmatprep.subr.bf16.mxu0 0
    %3092 = vmatpush2.bf16.msra.mxu0 0
    %3093 = vmatprep.mubr.bf16.mxu0 0
    %3094 = vmatmul.mubr.bf16.gmra.mxu0 %v3050
    %v3095 = vpop.f32.mrf.mxu0
    %v3096 = vadd.f32 %v3035, %v3095
    %v3097 = vpop.f32.mrf.mxu0
    %v3098 = vpop.f32.mrf.mxu0
    %v3099 = vadd.f32 %v3035, %v3098
    %v3100 = vpop.f32.mrf.mxu0
    %3101 = vmatprep.mubr.bf16.mxu0 0
    %3102 = vmatmul.mubr.bf16.gmra.mxu0 %v3053
    %v3103 = vpop.f32.mrf.mxu0
    %v3104 = vadd.f32 %v3035, %v3103
    %v3105 = vpop.f32.mrf.mxu0
    %v3106 = vpop.f32.mrf.mxu0
    %v3107 = vadd.f32 %v3035, %v3106
    %v3108 = vpop.f32.mrf.mxu0
    %3109 = vmatprep.mubr.bf16.mxu0 0
    %3110 = vmatmul.mubr.bf16.gmra.mxu0 %v3056
    %v3111 = vpop.f32.mrf.mxu0
    %v3112 = vadd.f32 %v3035, %v3111
    %v3113 = vpop.f32.mrf.mxu0
    %v3114 = vpop.f32.mrf.mxu0
    %v3115 = vadd.f32 %v3035, %v3114
    %v3116 = vpop.f32.mrf.mxu0
    %3117 = vmatprep.mubr.bf16.mxu0 0
    %3118 = vmatmul.mubr.bf16.gmra.mxu0 %v3059
    %v3119 = vpop.f32.mrf.mxu0
    %v3120 = vadd.f32 %v3035, %v3119
    %v3121 = vpop.f32.mrf.mxu0
    %v3122 = vpop.f32.mrf.mxu0
    %v3123 = vadd.f32 %v3035, %v3122
    %v3124 = vpop.f32.mrf.mxu0
    %3125 = vdwg.mxu0
    %v3130 = vunpack.c.l.b16 %v3005
    %v3131 = vunpack.c.l.b16 %v3006
    %v3132 = vunpack.c.l.b16 %v3007
    %v3133 = vunpack.c.l.b16 %v3008
    %v3134 = vpack.c.b16 %v3131, %v3130
    %v3135 = vpack.c.b16 %v3133, %v3132
    %v3139 = vsel %vm965, 0, 0
    %3141 = vmatprep.subr.bf16.mxu0 0
    %3142 = vmatpush1.bf16.msra.mxu0 0
    %3143 = vmatprep.subr.bf16.mxu0 0
    %3144 = vmatpush1.bf16.msra.mxu0 0
    %3145 = vmatprep.subr.bf16.mxu0 0
    %3146 = vmatpush1.bf16.msra.mxu0 0
    %3147 = vmatprep.subr.bf16.mxu0 0
    %3148 = vmatpush1.bf16.msra.mxu0 0
    %3149 = vmatprep.subr.bf16.mxu0 0
    %3150 = vmatpush1.bf16.msra.mxu0 0
    %3151 = vmatprep.subr.bf16.mxu0 0
    %3152 = vmatpush1.bf16.msra.mxu0 0
    %3153 = vmatprep.subr.bf16.mxu0 0
    %3154 = vmatpush1.bf16.msra.mxu0 %v3135
    %3155 = vmatprep.subr.bf16.mxu0 0
    %3156 = vmatpush1.bf16.msra.mxu0 %v3134
    %3157 = vmatprep.subr.bf16.mxu0 0
    %3158 = vmatpush2.bf16.msra.mxu0 0
    %3159 = vmatprep.subr.bf16.mxu0 0
    %3160 = vmatpush2.bf16.msra.mxu0 0
    %3161 = vmatprep.subr.bf16.mxu0 0
    %3162 = vmatpush2.bf16.msra.mxu0 0
    %3163 = vmatprep.subr.bf16.mxu0 0
    %3164 = vmatpush2.bf16.msra.mxu0 0
    %3165 = vmatprep.subr.bf16.mxu0 0
    %3166 = vmatpush2.bf16.msra.mxu0 0
    %3167 = vmatprep.subr.bf16.mxu0 0
    %3168 = vmatpush2.bf16.msra.mxu0 0
    %3169 = vmatprep.subr.bf16.mxu0 0
    %3170 = vmatpush2.bf16.msra.mxu0 0
    %3171 = vmatprep.subr.bf16.mxu0 0
    %3172 = vmatpush2.bf16.msra.mxu0 0
    %3173 = vmatprep.mubr.bf16.mxu0 0
    %3174 = vmatmul.mubr.bf16.gmra.mxu0 %v3139
    %v3175 = vpop.f32.mrf.mxu0
    %v3176 = vadd.f32 0.0, %v3175
    %v3177 = vpop.f32.mrf.mxu0
    %v3178 = vpop.f32.mrf.mxu0
    %v3179 = vpop.f32.mrf.mxu0
    %3180 = vdwg.mxu0
    %v3181 = vadd.f32 %v3096, %v3176
    %v3182 = vmul.f32 %v3181, 0.5
    %v3183 = vtanh.pop %v3182
    %v3184 = vadd.f32 %v3183, 1.0
    %v3185 = vmul.f32 %v3184, 0.5
    %v3186 = vtanh.pop %v3181
    %v3187 = vmul.f32 %v3185, 0.0
    %3189 = vrot.lane.b32.xlu0 %v3186, 32
    %v3190 = vpop.permute.xlu0 %3189
    %v3192 = vmul.f32 %v3185, %v3190
    %3194 = vrot.lane.b32.xlu0 %v3192, 32
    %v3195 = vpop.permute.xlu0 %3194
    %v3197 = vadd.f32 %v3187, %v3195
    %v3198 = vtanh.pop %v3197
    %3200 = vrot.lane.b32.xlu0 %v3198, 32
    %v3201 = vpop.permute.xlu0 %3200
    %v3203 = vmul.f32 %v3185, %v3201
    %3205 = vrot.lane.b32.xlu0 %v3203, 64
    %v3206 = vpop.permute.xlu0 %3205
    %v3208 = vsel %vm965, %v3206, 0.0
    %v3209 = vpack.c.bf16 %v3208, %v3208
    %v3211 = vlaneseq
    %v3212 = vshrl.u32 %v3211, 7
    %v3213 = vsub.s32 0, %v3212
    %v3214 = vrot.slane %v3021, %v3213
    %v3215 = vlaneseq
    %v3216 = vshrl.u32 %v3215, 7
    %v3217 = vsub.s32 1, %v3216
    %v3218 = vrot.slane %v3021, %v3217
    %v3233 = vunpack.c.l.b16 %v3009
    %v3234 = vunpack.c.h.b16 %v3009
    %v3235 = vunpack.c.l.b16 %v3010
    %v3236 = vunpack.c.h.b16 %v3010
    %v3237 = vunpack.c.l.b16 %v3011
    %v3238 = vunpack.c.h.b16 %v3011
    %v3239 = vunpack.c.l.b16 %v3012
    %v3240 = vunpack.c.h.b16 %v3012
    %v3241 = vunpack.c.l.b16 %v3013
    %v3242 = vunpack.c.h.b16 %v3013
    %v3243 = vunpack.c.l.b16 %v3014
    %v3244 = vunpack.c.h.b16 %v3014
    %v3245 = vunpack.c.l.b16 %v3015
    %v3246 = vunpack.c.h.b16 %v3015
    %v3247 = vunpack.c.l.b16 %v3016
    %v3248 = vunpack.c.h.b16 %v3016
    %v3249 = vunpack.c.l.b16 %v3017
    %v3250 = vunpack.c.h.b16 %v3017
    %v3251 = vunpack.c.l.b16 %v3018
    %v3252 = vunpack.c.h.b16 %v3018
    %v3253 = vunpack.c.l.b16 %v3019
    %v3254 = vunpack.c.h.b16 %v3019
    %v3255 = vunpack.c.l.b16 %v3020
    %v3256 = vunpack.c.h.b16 %v3020
    %v3257 = vpack.c.b16 %v3235, %v3233
    %v3258 = vpack.c.b16 %v3236, %v3234
    %v3259 = vpack.c.b16 %v3239, %v3237
    %v3260 = vpack.c.b16 %v3240, %v3238
    %v3261 = vpack.c.b16 %v3243, %v3241
    %v3262 = vpack.c.b16 %v3244, %v3242
    %v3263 = vpack.c.b16 %v3247, %v3245
    %v3264 = vpack.c.b16 %v3248, %v3246
    %v3265 = vpack.c.b16 %v3251, %v3249
    %v3266 = vpack.c.b16 %v3252, %v3250
    %v3267 = vpack.c.b16 %v3255, %v3253
    %v3268 = vpack.c.b16 %v3256, %v3254
    %v3282 = vsel %vm357, %v3209, 0
    %3284 = vmatprep.subr.bf16.mxu0 0
    %3285 = vmatpush1.bf16.msra.mxu0 0
    %3286 = vmatprep.subr.bf16.mxu0 0
    %3287 = vmatpush1.bf16.msra.mxu0 0
    %3288 = vmatprep.subr.bf16.mxu0 %v3268
    %3289 = vmatpush1.bf16.msra.mxu0 %v3267
    %3290 = vmatprep.subr.bf16.mxu0 %v3266
    %3291 = vmatpush1.bf16.msra.mxu0 %v3265
    %3292 = vmatprep.subr.bf16.mxu0 %v3264
    %3293 = vmatpush1.bf16.msra.mxu0 %v3263
    %3294 = vmatprep.subr.bf16.mxu0 %v3262
    %3295 = vmatpush1.bf16.msra.mxu0 %v3261
    %3296 = vmatprep.subr.bf16.mxu0 %v3260
    %3297 = vmatpush1.bf16.msra.mxu0 %v3259
    %3298 = vmatprep.subr.bf16.mxu0 %v3258
    %3299 = vmatpush1.bf16.msra.mxu0 %v3257
    %3300 = vmatprep.subr.bf16.mxu0 0
    %3301 = vmatpush2.bf16.msra.mxu0 0
    %3302 = vmatprep.subr.bf16.mxu0 0
    %3303 = vmatpush2.bf16.msra.mxu0 0
    %3304 = vmatprep.subr.bf16.mxu0 0
    %3305 = vmatpush2.bf16.msra.mxu0 0
    %3306 = vmatprep.subr.bf16.mxu0 0
    %3307 = vmatpush2.bf16.msra.mxu0 0
    %3308 = vmatprep.subr.bf16.mxu0 0
    %3309 = vmatpush2.bf16.msra.mxu0 0
    %3310 = vmatprep.subr.bf16.mxu0 0
    %3311 = vmatpush2.bf16.msra.mxu0 0
    %3312 = vmatprep.subr.bf16.mxu0 0
    %3313 = vmatpush2.bf16.msra.mxu0 0
    %3314 = vmatprep.subr.bf16.mxu0 0
    %3315 = vmatpush2.bf16.msra.mxu0 0
    %3316 = vmatprep.mubr.bf16.mxu0 0
    %3317 = vmatmul.mubr.bf16.gmra.mxu0 %v3282
    %v3318 = vpop.f32.mrf.mxu0
    %v3319 = vadd.f32 %v3214, %v3318
    %v3320 = vpop.f32.mrf.mxu0
    %v3321 = vadd.f32 %v3218, %v3320
    %v3322 = vpop.f32.mrf.mxu0
    %v3323 = vpop.f32.mrf.mxu0
    %3324 = vdwg.mxu0
    %v3325 = vmul.f32 %v3319, 0.5
    %v3326 = vmul.f32 %v3321, 0.5
    %v3327 = vtanh.pop %v3325
    %v3328 = vtanh.pop %v3326
    %v3329 = vadd.f32 %v3327, 1.0
    %v3330 = vadd.f32 %v3328, 1.0
    %v3331 = vmul.f32 %v3329, 0.5
    %v3332 = vmul.f32 %v3330, 0.5
    %v3333 = vtanh.pop %v3321
    %v3334 = vmul.f32 %v3331, 0.0
    %3336 = vrot.lane.b32.xlu0 %v3333, 64
    %v3337 = vpop.permute.xlu0 %3336
    %v3339 = vmul.f32 %v3331, %v3337
    %3341 = vrot.lane.b32.xlu0 %v3339, 64
    %v3342 = vpop.permute.xlu0 %3341
    %v3344 = vadd.f32 %v3334, %v3342
    %v3345 = vtanh.pop %v3344
    %3347 = vrot.lane.b32.xlu0 %v3345, 64
    %v3348 = vpop.permute.xlu0 %3347
    %v3350 = vmul.f32 %v3332, %v3348
    %v3351 = vpack.c.bf16 %v3203, %v3203
    %3353 = vrot.lane.b32.xlu0 %v3351, 64
    %v3354 = vpop.permute.xlu0 %3353
    %v3356 = vsel %vm965, %v3354, 0
    %3358 = vmatprep.subr.bf16.mxu0 0
    %3359 = vmatpush1.bf16.msra.mxu0 0
    %3360 = vmatprep.subr.bf16.mxu0 0
    %3361 = vmatpush1.bf16.msra.mxu0 0
    %3362 = vmatprep.subr.bf16.mxu0 0
    %3363 = vmatpush1.bf16.msra.mxu0 0
    %3364 = vmatprep.subr.bf16.mxu0 0
    %3365 = vmatpush1.bf16.msra.mxu0 0
    %3366 = vmatprep.subr.bf16.mxu0 0
    %3367 = vmatpush1.bf16.msra.mxu0 0
    %3368 = vmatprep.subr.bf16.mxu0 0
    %3369 = vmatpush1.bf16.msra.mxu0 0
    %3370 = vmatprep.subr.bf16.mxu0 0
    %3371 = vmatpush1.bf16.msra.mxu0 %v3135
    %3372 = vmatprep.subr.bf16.mxu0 0
    %3373 = vmatpush1.bf16.msra.mxu0 %v3134
    %3374 = vmatprep.subr.bf16.mxu0 0
    %3375 = vmatpush2.bf16.msra.mxu0 0
    %3376 = vmatprep.subr.bf16.mxu0 0
    %3377 = vmatpush2.bf16.msra.mxu0 0
    %3378 = vmatprep.subr.bf16.mxu0 0
    %3379 = vmatpush2.bf16.msra.mxu0 0
    %3380 = vmatprep.subr.bf16.mxu0 0
    %3381 = vmatpush2.bf16.msra.mxu0 0
    %3382 = vmatprep.subr.bf16.mxu0 0
    %3383 = vmatpush2.bf16.msra.mxu0 0
    %3384 = vmatprep.subr.bf16.mxu0 0
    %3385 = vmatpush2.bf16.msra.mxu0 0
    %3386 = vmatprep.subr.bf16.mxu0 0
    %3387 = vmatpush2.bf16.msra.mxu0 0
    %3388 = vmatprep.subr.bf16.mxu0 0
    %3389 = vmatpush2.bf16.msra.mxu0 0
    %3390 = vmatprep.mubr.bf16.mxu0 0
    %3391 = vmatmul.mubr.bf16.gmra.mxu0 %v3356
    %v3392 = vpop.f32.mrf.mxu0
    %v3393 = vadd.f32 0.0, %v3392
    %v3394 = vpop.f32.mrf.mxu0
    %v3395 = vpop.f32.mrf.mxu0
    %v3396 = vpop.f32.mrf.mxu0
    %3397 = vdwg.mxu0
    %v3398 = vadd.f32 %v3099, %v3393
    %v3399 = vmul.f32 %v3398, 0.5
    %v3400 = vtanh.pop %v3399
    %v3401 = vadd.f32 %v3400, 1.0
    %v3402 = vmul.f32 %v3401, 0.5
    %v3403 = vtanh.pop %v3398
    %v3404 = vmul.f32 %v3402, %v3197
    %3406 = vrot.lane.b32.xlu0 %v3403, 32
    %v3407 = vpop.permute.xlu0 %3406
    %v3409 = vmul.f32 %v3402, %v3407
    %3411 = vrot.lane.b32.xlu0 %v3409, 32
    %v3412 = vpop.permute.xlu0 %3411
    %v3414 = vadd.f32 %v3404, %v3412
    %v3415 = vtanh.pop %v3414
    %3417 = vrot.lane.b32.xlu0 %v3415, 32
    %v3418 = vpop.permute.xlu0 %3417
    %v3420 = vmul.f32 %v3402, %v3418
    %3422 = vrot.lane.b32.xlu0 %v3420, 64
    %v3423 = vpop.permute.xlu0 %3422
    %3426 = vrot.lane.b32.xlu0 %v3350, 32
    %v3427 = vpop.permute.xlu0 %3426
    %v3429 = vsel %vm965, %v3423, %v3427
    %v3430 = vpack.c.bf16 %v3429, %v3429
    %v3432 = vsel %vm357, %v3430, 0
    %3434 = vmatprep.subr.bf16.mxu0 0
    %3435 = vmatpush1.bf16.msra.mxu0 0
    %3436 = vmatprep.subr.bf16.mxu0 0
    %3437 = vmatpush1.bf16.msra.mxu0 0
    %3438 = vmatprep.subr.bf16.mxu0 %v3268
    %3439 = vmatpush1.bf16.msra.mxu0 %v3267
    %3440 = vmatprep.subr.bf16.mxu0 %v3266
    %3441 = vmatpush1.bf16.msra.mxu0 %v3265
    %3442 = vmatprep.subr.bf16.mxu0 %v3264
    %3443 = vmatpush1.bf16.msra.mxu0 %v3263
    %3444 = vmatprep.subr.bf16.mxu0 %v3262
    %3445 = vmatpush1.bf16.msra.mxu0 %v3261
    %3446 = vmatprep.subr.bf16.mxu0 %v3260
    %3447 = vmatpush1.bf16.msra.mxu0 %v3259
    %3448 = vmatprep.subr.bf16.mxu0 %v3258
    %3449 = vmatpush1.bf16.msra.mxu0 %v3257
    %3450 = vmatprep.subr.bf16.mxu0 0
    %3451 = vmatpush2.bf16.msra.mxu0 0
    %3452 = vmatprep.subr.bf16.mxu0 0
    %3453 = vmatpush2.bf16.msra.mxu0 0
    %3454 = vmatprep.subr.bf16.mxu0 0
    %3455 = vmatpush2.bf16.msra.mxu0 0
    %3456 = vmatprep.subr.bf16.mxu0 0
    %3457 = vmatpush2.bf16.msra.mxu0 0
    %3458 = vmatprep.subr.bf16.mxu0 0
    %3459 = vmatpush2.bf16.msra.mxu0 0
    %3460 = vmatprep.subr.bf16.mxu0 0
    %3461 = vmatpush2.bf16.msra.mxu0 0
    %3462 = vmatprep.subr.bf16.mxu0 0
    %3463 = vmatpush2.bf16.msra.mxu0 0
    %3464 = vmatprep.subr.bf16.mxu0 0
    %3465 = vmatpush2.bf16.msra.mxu0 0
    %3466 = vmatprep.mubr.bf16.mxu0 0
    %3467 = vmatmul.mubr.bf16.gmra.mxu0 %v3432
    %v3468 = vpop.f32.mrf.mxu0
    %v3469 = vadd.f32 %v3214, %v3468
    %v3470 = vpop.f32.mrf.mxu0
    %v3471 = vadd.f32 %v3218, %v3470
    %v3472 = vpop.f32.mrf.mxu0
    %v3473 = vpop.f32.mrf.mxu0
    %3474 = vdwg.mxu0
    %v3475 = vmul.f32 %v3469, 0.5
    %v3476 = vmul.f32 %v3471, 0.5
    %v3477 = vtanh.pop %v3475
    %v3478 = vtanh.pop %v3476
    %v3479 = vadd.f32 %v3477, 1.0
    %v3480 = vadd.f32 %v3478, 1.0
    %v3481 = vmul.f32 %v3479, 0.5
    %v3482 = vmul.f32 %v3480, 0.5
    %v3483 = vtanh.pop %v3471
    %v3484 = vmul.f32 %v3481, %v3344
    %3486 = vrot.lane.b32.xlu0 %v3483, 64
    %v3487 = vpop.permute.xlu0 %3486
    %v3489 = vmul.f32 %v3481, %v3487
    %3491 = vrot.lane.b32.xlu0 %v3489, 64
    %v3492 = vpop.permute.xlu0 %3491
    %v3494 = vadd.f32 %v3484, %v3492
    %v3495 = vtanh.pop %v3494
    %3497 = vrot.lane.b32.xlu0 %v3495, 64
    %v3498 = vpop.permute.xlu0 %3497
    %v3500 = vmul.f32 %v3482, %v3498
    %v3501 = vpack.c.bf16 %v3420, %v3420
    %3503 = vrot.lane.b32.xlu0 %v3501, 64
    %v3504 = vpop.permute.xlu0 %3503
    %v3506 = vsel %vm965, %v3504, 0
    %3508 = vmatprep.subr.bf16.mxu0 0
    %3509 = vmatpush1.bf16.msra.mxu0 0
    %3510 = vmatprep.subr.bf16.mxu0 0
    %3511 = vmatpush1.bf16.msra.mxu0 0
    %3512 = vmatprep.subr.bf16.mxu0 0
    %3513 = vmatpush1.bf16.msra.mxu0 0
    %3514 = vmatprep.subr.bf16.mxu0 0
    %3515 = vmatpush1.bf16.msra.mxu0 0
    %3516 = vmatprep.subr.bf16.mxu0 0
    %3517 = vmatpush1.bf16.msra.mxu0 0
    %3518 = vmatprep.subr.bf16.mxu0 0
    %3519 = vmatpush1.bf16.msra.mxu0 0
    %3520 = vmatprep.subr.bf16.mxu0 0
    %3521 = vmatpush1.bf16.msra.mxu0 %v3135
    %3522 = vmatprep.subr.bf16.mxu0 0
    %3523 = vmatpush1.bf16.msra.mxu0 %v3134
    %3524 = vmatprep.subr.bf16.mxu0 0
    %3525 = vmatpush2.bf16.msra.mxu0 0
    %3526 = vmatprep.subr.bf16.mxu0 0
    %3527 = vmatpush2.bf16.msra.mxu0 0
    %3528 = vmatprep.subr.bf16.mxu0 0
    %3529 = vmatpush2.bf16.msra.mxu0 0
    %3530 = vmatprep.subr.bf16.mxu0 0
    %3531 = vmatpush2.bf16.msra.mxu0 0
    %3532 = vmatprep.subr.bf16.mxu0 0
    %3533 = vmatpush2.bf16.msra.mxu0 0
    %3534 = vmatprep.subr.bf16.mxu0 0
    %3535 = vmatpush2.bf16.msra.mxu0 0
    %3536 = vmatprep.subr.bf16.mxu0 0
    %3537 = vmatpush2.bf16.msra.mxu0 0
    %3538 = vmatprep.subr.bf16.mxu0 0
    %3539 = vmatpush2.bf16.msra.mxu0 0
    %3540 = vmatprep.mubr.bf16.mxu0 0
    %3541 = vmatmul.mubr.bf16.gmra.mxu0 %v3506
    %v3542 = vpop.f32.mrf.mxu0
    %v3543 = vadd.f32 0.0, %v3542
    %v3544 = vpop.f32.mrf.mxu0
    %v3545 = vpop.f32.mrf.mxu0
    %v3546 = vpop.f32.mrf.mxu0
    %3547 = vdwg.mxu0
    %v3548 = vadd.f32 %v3104, %v3543
    %v3549 = vmul.f32 %v3548, 0.5
    %v3550 = vtanh.pop %v3549
    %v3551 = vadd.f32 %v3550, 1.0
    %v3552 = vmul.f32 %v3551, 0.5
    %v3553 = vtanh.pop %v3548
    %v3554 = vmul.f32 %v3552, %v3414
    %3556 = vrot.lane.b32.xlu0 %v3553, 32
    %v3557 = vpop.permute.xlu0 %3556
    %v3559 = vmul.f32 %v3552, %v3557
    %3561 = vrot.lane.b32.xlu0 %v3559, 32
    %v3562 = vpop.permute.xlu0 %3561
    %v3564 = vadd.f32 %v3554, %v3562
    %v3565 = vtanh.pop %v3564
    %3567 = vrot.lane.b32.xlu0 %v3565, 32
    %v3568 = vpop.permute.xlu0 %3567
    %v3570 = vmul.f32 %v3552, %v3568
    %3572 = vrot.lane.b32.xlu0 %v3570, 64
    %v3573 = vpop.permute.xlu0 %3572
    %3576 = vrot.lane.b32.xlu0 %v3500, 32
    %v3577 = vpop.permute.xlu0 %3576
    %v3579 = vsel %vm965, %v3573, %v3577
    %v3580 = vpack.c.bf16 %v3579, %v3579
    %v3582 = vsel %vm357, %v3580, 0
    %3584 = vmatprep.subr.bf16.mxu0 0
    %3585 = vmatpush1.bf16.msra.mxu0 0
    %3586 = vmatprep.subr.bf16.mxu0 0
    %3587 = vmatpush1.bf16.msra.mxu0 0
    %3588 = vmatprep.subr.bf16.mxu0 %v3268
    %3589 = vmatpush1.bf16.msra.mxu0 %v3267
    %3590 = vmatprep.subr.bf16.mxu0 %v3266
    %3591 = vmatpush1.bf16.msra.mxu0 %v3265
    %3592 = vmatprep.subr.bf16.mxu0 %v3264
    %3593 = vmatpush1.bf16.msra.mxu0 %v3263
    %3594 = vmatprep.subr.bf16.mxu0 %v3262
    %3595 = vmatpush1.bf16.msra.mxu0 %v3261
    %3596 = vmatprep.subr.bf16.mxu0 %v3260
    %3597 = vmatpush1.bf16.msra.mxu0 %v3259
    %3598 = vmatprep.subr.bf16.mxu0 %v3258
    %3599 = vmatpush1.bf16.msra.mxu0 %v3257
    %3600 = vmatprep.subr.bf16.mxu0 0
    %3601 = vmatpush2.bf16.msra.mxu0 0
    %3602 = vmatprep.subr.bf16.mxu0 0
    %3603 = vmatpush2.bf16.msra.mxu0 0
    %3604 = vmatprep.subr.bf16.mxu0 0
    %3605 = vmatpush2.bf16.msra.mxu0 0
    %3606 = vmatprep.subr.bf16.mxu0 0
    %3607 = vmatpush2.bf16.msra.mxu0 0
    %3608 = vmatprep.subr.bf16.mxu0 0
    %3609 = vmatpush2.bf16.msra.mxu0 0
    %3610 = vmatprep.subr.bf16.mxu0 0
    %3611 = vmatpush2.bf16.msra.mxu0 0
    %3612 = vmatprep.subr.bf16.mxu0 0
    %3613 = vmatpush2.bf16.msra.mxu0 0
    %3614 = vmatprep.subr.bf16.mxu0 0
    %3615 = vmatpush2.bf16.msra.mxu0 0
    %3616 = vmatprep.mubr.bf16.mxu0 0
    %3617 = vmatmul.mubr.bf16.gmra.mxu0 %v3582
    %v3618 = vpop.f32.mrf.mxu0
    %v3619 = vadd.f32 %v3214, %v3618
    %v3620 = vpop.f32.mrf.mxu0
    %v3621 = vadd.f32 %v3218, %v3620
    %v3622 = vpop.f32.mrf.mxu0
    %v3623 = vpop.f32.mrf.mxu0
    %3624 = vdwg.mxu0
    %v3625 = vmul.f32 %v3619, 0.5
    %v3626 = vmul.f32 %v3621, 0.5
    %v3627 = vtanh.pop %v3625
    %v3628 = vtanh.pop %v3626
    %v3629 = vadd.f32 %v3627, 1.0
    %v3630 = vadd.f32 %v3628, 1.0
    %v3631 = vmul.f32 %v3629, 0.5
    %v3632 = vmul.f32 %v3630, 0.5
    %v3633 = vtanh.pop %v3621
    %v3634 = vmul.f32 %v3631, %v3494
    %3636 = vrot.lane.b32.xlu0 %v3633, 64
    %v3637 = vpop.permute.xlu0 %3636
    %v3639 = vmul.f32 %v3631, %v3637
    %3641 = vrot.lane.b32.xlu0 %v3639, 64
    %v3642 = vpop.permute.xlu0 %3641
    %v3644 = vadd.f32 %v3634, %v3642
    %v3645 = vtanh.pop %v3644
    %3647 = vrot.lane.b32.xlu0 %v3645, 64
    %v3648 = vpop.permute.xlu0 %3647
    %v3650 = vmul.f32 %v3632, %v3648
    %v3651 = vpack.c.bf16 %v3570, %v3570
    %3653 = vrot.lane.b32.xlu0 %v3651, 64
    %v3654 = vpop.permute.xlu0 %3653
    %v3656 = vsel %vm965, %v3654, 0
    %3658 = vmatprep.subr.bf16.mxu0 0
    %3659 = vmatpush1.bf16.msra.mxu0 0
    %3660 = vmatprep.subr.bf16.mxu0 0
    %3661 = vmatpush1.bf16.msra.mxu0 0
    %3662 = vmatprep.subr.bf16.mxu0 0
    %3663 = vmatpush1.bf16.msra.mxu0 0
    %3664 = vmatprep.subr.bf16.mxu0 0
    %3665 = vmatpush1.bf16.msra.mxu0 0
    %3666 = vmatprep.subr.bf16.mxu0 0
    %3667 = vmatpush1.bf16.msra.mxu0 0
    %3668 = vmatprep.subr.bf16.mxu0 0
    %3669 = vmatpush1.bf16.msra.mxu0 0
    %3670 = vmatprep.subr.bf16.mxu0 0
    %3671 = vmatpush1.bf16.msra.mxu0 %v3135
    %3672 = vmatprep.subr.bf16.mxu0 0
    %3673 = vmatpush1.bf16.msra.mxu0 %v3134
    %3674 = vmatprep.subr.bf16.mxu0 0
    %3675 = vmatpush2.bf16.msra.mxu0 0
    %3676 = vmatprep.subr.bf16.mxu0 0
    %3677 = vmatpush2.bf16.msra.mxu0 0
    %3678 = vmatprep.subr.bf16.mxu0 0
    %3679 = vmatpush2.bf16.msra.mxu0 0
    %3680 = vmatprep.subr.bf16.mxu0 0
    %3681 = vmatpush2.bf16.msra.mxu0 0
    %3682 = vmatprep.subr.bf16.mxu0 0
    %3683 = vmatpush2.bf16.msra.mxu0 0
    %3684 = vmatprep.subr.bf16.mxu0 0
    %3685 = vmatpush2.bf16.msra.mxu0 0
    %3686 = vmatprep.subr.bf16.mxu0 0
    %3687 = vmatpush2.bf16.msra.mxu0 0
    %3688 = vmatprep.subr.bf16.mxu0 0
    %3689 = vmatpush2.bf16.msra.mxu0 0
    %3690 = vmatprep.mubr.bf16.mxu0 0
    %3691 = vmatmul.mubr.bf16.gmra.mxu0 %v3656
    %v3692 = vpop.f32.mrf.mxu0
    %v3693 = vadd.f32 0.0, %v3692
    %v3694 = vpop.f32.mrf.mxu0
    %v3695 = vpop.f32.mrf.mxu0
    %v3696 = vpop.f32.mrf.mxu0
    %3697 = vdwg.mxu0
    %v3698 = vadd.f32 %v3107, %v3693
    %v3699 = vmul.f32 %v3698, 0.5
    %v3700 = vtanh.pop %v3699
    %v3701 = vadd.f32 %v3700, 1.0
    %v3702 = vmul.f32 %v3701, 0.5
    %v3703 = vtanh.pop %v3698
    %v3704 = vmul.f32 %v3702, %v3564
    %3706 = vrot.lane.b32.xlu0 %v3703, 32
    %v3707 = vpop.permute.xlu0 %3706
    %v3709 = vmul.f32 %v3702, %v3707
    %3711 = vrot.lane.b32.xlu0 %v3709, 32
    %v3712 = vpop.permute.xlu0 %3711
    %v3714 = vadd.f32 %v3704, %v3712
    %v3715 = vtanh.pop %v3714
    %3717 = vrot.lane.b32.xlu0 %v3715, 32
    %v3718 = vpop.permute.xlu0 %3717
    %v3720 = vmul.f32 %v3702, %v3718
    %3722 = vrot.lane.b32.xlu0 %v3720, 64
    %v3723 = vpop.permute.xlu0 %3722
    %3726 = vrot.lane.b32.xlu0 %v3650, 32
    %v3727 = vpop.permute.xlu0 %3726
    %v3729 = vsel %vm965, %v3723, %v3727
    %v3730 = vpack.c.bf16 %v3729, %v3729
    %v3732 = vsel %vm357, %v3730, 0
    %3734 = vmatprep.subr.bf16.mxu0 0
    %3735 = vmatpush1.bf16.msra.mxu0 0
    %3736 = vmatprep.subr.bf16.mxu0 0
    %3737 = vmatpush1.bf16.msra.mxu0 0
    %3738 = vmatprep.subr.bf16.mxu0 %v3268
    %3739 = vmatpush1.bf16.msra.mxu0 %v3267
    %3740 = vmatprep.subr.bf16.mxu0 %v3266
    %3741 = vmatpush1.bf16.msra.mxu0 %v3265
    %3742 = vmatprep.subr.bf16.mxu0 %v3264
    %3743 = vmatpush1.bf16.msra.mxu0 %v3263
    %3744 = vmatprep.subr.bf16.mxu0 %v3262
    %3745 = vmatpush1.bf16.msra.mxu0 %v3261
    %3746 = vmatprep.subr.bf16.mxu0 %v3260
    %3747 = vmatpush1.bf16.msra.mxu0 %v3259
    %3748 = vmatprep.subr.bf16.mxu0 %v3258
    %3749 = vmatpush1.bf16.msra.mxu0 %v3257
    %3750 = vmatprep.subr.bf16.mxu0 0
    %3751 = vmatpush2.bf16.msra.mxu0 0
    %3752 = vmatprep.subr.bf16.mxu0 0
    %3753 = vmatpush2.bf16.msra.mxu0 0
    %3754 = vmatprep.subr.bf16.mxu0 0
    %3755 = vmatpush2.bf16.msra.mxu0 0
    %3756 = vmatprep.subr.bf16.mxu0 0
    %3757 = vmatpush2.bf16.msra.mxu0 0
    %3758 = vmatprep.subr.bf16.mxu0 0
    %3759 = vmatpush2.bf16.msra.mxu0 0
    %3760 = vmatprep.subr.bf16.mxu0 0
    %3761 = vmatpush2.bf16.msra.mxu0 0
    %3762 = vmatprep.subr.bf16.mxu0 0
    %3763 = vmatpush2.bf16.msra.mxu0 0
    %3764 = vmatprep.subr.bf16.mxu0 0
    %3765 = vmatpush2.bf16.msra.mxu0 0
    %3766 = vmatprep.mubr.bf16.mxu0 0
    %3767 = vmatmul.mubr.bf16.gmra.mxu0 %v3732
    %v3768 = vpop.f32.mrf.mxu0
    %v3769 = vadd.f32 %v3214, %v3768
    %v3770 = vpop.f32.mrf.mxu0
    %v3771 = vadd.f32 %v3218, %v3770
    %v3772 = vpop.f32.mrf.mxu0
    %v3773 = vpop.f32.mrf.mxu0
    %3774 = vdwg.mxu0
    %v3775 = vmul.f32 %v3769, 0.5
    %v3776 = vmul.f32 %v3771, 0.5
    %v3777 = vtanh.pop %v3775
    %v3778 = vtanh.pop %v3776
    %v3779 = vadd.f32 %v3777, 1.0
    %v3780 = vadd.f32 %v3778, 1.0
    %v3781 = vmul.f32 %v3779, 0.5
    %v3782 = vmul.f32 %v3780, 0.5
    %v3783 = vtanh.pop %v3771
    %v3784 = vmul.f32 %v3781, %v3644
    %3786 = vrot.lane.b32.xlu0 %v3783, 64
    %v3787 = vpop.permute.xlu0 %3786
    %v3789 = vmul.f32 %v3781, %v3787
    %3791 = vrot.lane.b32.xlu0 %v3789, 64
    %v3792 = vpop.permute.xlu0 %3791
    %v3794 = vadd.f32 %v3784, %v3792
    %v3795 = vtanh.pop %v3794
    %3797 = vrot.lane.b32.xlu0 %v3795, 64
    %v3798 = vpop.permute.xlu0 %3797
    %v3800 = vmul.f32 %v3782, %v3798
    %v3801 = vpack.c.bf16 %v3720, %v3720
    %3803 = vrot.lane.b32.xlu0 %v3801, 64
    %v3804 = vpop.permute.xlu0 %3803
    %v3806 = vsel %vm965, %v3804, 0
    %3808 = vmatprep.subr.bf16.mxu0 0
    %3809 = vmatpush1.bf16.msra.mxu0 0
    %3810 = vmatprep.subr.bf16.mxu0 0
    %3811 = vmatpush1.bf16.msra.mxu0 0
    %3812 = vmatprep.subr.bf16.mxu0 0
    %3813 = vmatpush1.bf16.msra.mxu0 0
    %3814 = vmatprep.subr.bf16.mxu0 0
    %3815 = vmatpush1.bf16.msra.mxu0 0
    %3816 = vmatprep.subr.bf16.mxu0 0
    %3817 = vmatpush1.bf16.msra.mxu0 0
    %3818 = vmatprep.subr.bf16.mxu0 0
    %3819 = vmatpush1.bf16.msra.mxu0 0
    %3820 = vmatprep.subr.bf16.mxu0 0
    %3821 = vmatpush1.bf16.msra.mxu0 %v3135
    %3822 = vmatprep.subr.bf16.mxu0 0
    %3823 = vmatpush1.bf16.msra.mxu0 %v3134
    %3824 = vmatprep.subr.bf16.mxu0 0
    %3825 = vmatpush2.bf16.msra.mxu0 0
    %3826 = vmatprep.subr.bf16.mxu0 0
    %3827 = vmatpush2.bf16.msra.mxu0 0
    %3828 = vmatprep.subr.bf16.mxu0 0
    %3829 = vmatpush2.bf16.msra.mxu0 0
    %3830 = vmatprep.subr.bf16.mxu0 0
    %3831 = vmatpush2.bf16.msra.mxu0 0
    %3832 = vmatprep.subr.bf16.mxu0 0
    %3833 = vmatpush2.bf16.msra.mxu0 0
    %3834 = vmatprep.subr.bf16.mxu0 0
    %3835 = vmatpush2.bf16.msra.mxu0 0
    %3836 = vmatprep.subr.bf16.mxu0 0
    %3837 = vmatpush2.bf16.msra.mxu0 0
    %3838 = vmatprep.subr.bf16.mxu0 0
    %3839 = vmatpush2.bf16.msra.mxu0 0
    %3840 = vmatprep.mubr.bf16.mxu0 0
    %3841 = vmatmul.mubr.bf16.gmra.mxu0 %v3806
    %v3842 = vpop.f32.mrf.mxu0
    %v3843 = vadd.f32 0.0, %v3842
    %v3844 = vpop.f32.mrf.mxu0
    %v3845 = vpop.f32.mrf.mxu0
    %v3846 = vpop.f32.mrf.mxu0
    %3847 = vdwg.mxu0
    %v3848 = vadd.f32 %v3112, %v3843
    %v3849 = vmul.f32 %v3848, 0.5
    %v3850 = vtanh.pop %v3849
    %v3851 = vadd.f32 %v3850, 1.0
    %v3852 = vmul.f32 %v3851, 0.5
    %v3853 = vtanh.pop %v3848
    %v3854 = vmul.f32 %v3852, %v3714
    %3856 = vrot.lane.b32.xlu0 %v3853, 32
    %v3857 = vpop.permute.xlu0 %3856
    %v3859 = vmul.f32 %v3852, %v3857
    %3861 = vrot.lane.b32.xlu0 %v3859, 32
    %v3862 = vpop.permute.xlu0 %3861
    %v3864 = vadd.f32 %v3854, %v3862
    %v3865 = vtanh.pop %v3864
    %3867 = vrot.lane.b32.xlu0 %v3865, 32
    %v3868 = vpop.permute.xlu0 %3867
    %v3870 = vmul.f32 %v3852, %v3868
    %3872 = vrot.lane.b32.xlu0 %v3870, 64
    %v3873 = vpop.permute.xlu0 %3872
    %3876 = vrot.lane.b32.xlu0 %v3800, 32
    %v3877 = vpop.permute.xlu0 %3876
    %v3879 = vsel %vm965, %v3873, %v3877
    %v3880 = vpack.c.bf16 %v3879, %v3879
    %v3882 = vsel %vm357, %v3880, 0
    %3884 = vmatprep.subr.bf16.mxu0 0
    %3885 = vmatpush1.bf16.msra.mxu0 0
    %3886 = vmatprep.subr.bf16.mxu0 0
    %3887 = vmatpush1.bf16.msra.mxu0 0
    %3888 = vmatprep.subr.bf16.mxu0 %v3268
    %3889 = vmatpush1.bf16.msra.mxu0 %v3267
    %3890 = vmatprep.subr.bf16.mxu0 %v3266
    %3891 = vmatpush1.bf16.msra.mxu0 %v3265
    %3892 = vmatprep.subr.bf16.mxu0 %v3264
    %3893 = vmatpush1.bf16.msra.mxu0 %v3263
    %3894 = vmatprep.subr.bf16.mxu0 %v3262
    %3895 = vmatpush1.bf16.msra.mxu0 %v3261
    %3896 = vmatprep.subr.bf16.mxu0 %v3260
    %3897 = vmatpush1.bf16.msra.mxu0 %v3259
    %3898 = vmatprep.subr.bf16.mxu0 %v3258
    %3899 = vmatpush1.bf16.msra.mxu0 %v3257
    %3900 = vmatprep.subr.bf16.mxu0 0
    %3901 = vmatpush2.bf16.msra.mxu0 0
    %3902 = vmatprep.subr.bf16.mxu0 0
    %3903 = vmatpush2.bf16.msra.mxu0 0
    %3904 = vmatprep.subr.bf16.mxu0 0
    %3905 = vmatpush2.bf16.msra.mxu0 0
    %3906 = vmatprep.subr.bf16.mxu0 0
    %3907 = vmatpush2.bf16.msra.mxu0 0
    %3908 = vmatprep.subr.bf16.mxu0 0
    %3909 = vmatpush2.bf16.msra.mxu0 0
    %3910 = vmatprep.subr.bf16.mxu0 0
    %3911 = vmatpush2.bf16.msra.mxu0 0
    %3912 = vmatprep.subr.bf16.mxu0 0
    %3913 = vmatpush2.bf16.msra.mxu0 0
    %3914 = vmatprep.subr.bf16.mxu0 0
    %3915 = vmatpush2.bf16.msra.mxu0 0
    %3916 = vmatprep.mubr.bf16.mxu0 0
    %3917 = vmatmul.mubr.bf16.gmra.mxu0 %v3882
    %v3918 = vpop.f32.mrf.mxu0
    %v3919 = vadd.f32 %v3214, %v3918
    %v3920 = vpop.f32.mrf.mxu0
    %v3921 = vadd.f32 %v3218, %v3920
    %v3922 = vpop.f32.mrf.mxu0
    %v3923 = vpop.f32.mrf.mxu0
    %3924 = vdwg.mxu0
    %v3925 = vmul.f32 %v3919, 0.5
    %v3926 = vmul.f32 %v3921, 0.5
    %v3927 = vtanh.pop %v3925
    %v3928 = vtanh.pop %v3926
    %v3929 = vadd.f32 %v3927, 1.0
    %v3930 = vadd.f32 %v3928, 1.0
    %v3931 = vmul.f32 %v3929, 0.5
    %v3932 = vmul.f32 %v3930, 0.5
    %v3933 = vtanh.pop %v3921
    %v3934 = vmul.f32 %v3931, %v3794
    %3936 = vrot.lane.b32.xlu0 %v3933, 64
    %v3937 = vpop.permute.xlu0 %3936
    %v3939 = vmul.f32 %v3931, %v3937
    %3941 = vrot.lane.b32.xlu0 %v3939, 64
    %v3942 = vpop.permute.xlu0 %3941
    %v3944 = vadd.f32 %v3934, %v3942
    %v3945 = vtanh.pop %v3944
    %3947 = vrot.lane.b32.xlu0 %v3945, 64
    %v3948 = vpop.permute.xlu0 %3947
    %v3950 = vmul.f32 %v3932, %v3948
    %v3951 = vpack.c.bf16 %v3870, %v3870
    %3953 = vrot.lane.b32.xlu0 %v3951, 64
    %v3954 = vpop.permute.xlu0 %3953
    %v3956 = vsel %vm965, %v3954, 0
    %3958 = vmatprep.subr.bf16.mxu0 0
    %3959 = vmatpush1.bf16.msra.mxu0 0
    %3960 = vmatprep.subr.bf16.mxu0 0
    %3961 = vmatpush1.bf16.msra.mxu0 0
    %3962 = vmatprep.subr.bf16.mxu0 0
    %3963 = vmatpush1.bf16.msra.mxu0 0
    %3964 = vmatprep.subr.bf16.mxu0 0
    %3965 = vmatpush1.bf16.msra.mxu0 0
    %3966 = vmatprep.subr.bf16.mxu0 0
    %3967 = vmatpush1.bf16.msra.mxu0 0
    %3968 = vmatprep.subr.bf16.mxu0 0
    %3969 = vmatpush1.bf16.msra.mxu0 0
    %3970 = vmatprep.subr.bf16.mxu0 0
    %3971 = vmatpush1.bf16.msra.mxu0 %v3135
    %3972 = vmatprep.subr.bf16.mxu0 0
    %3973 = vmatpush1.bf16.msra.mxu0 %v3134
    %3974 = vmatprep.subr.bf16.mxu0 0
    %3975 = vmatpush2.bf16.msra.mxu0 0
    %3976 = vmatprep.subr.bf16.mxu0 0
    %3977 = vmatpush2.bf16.msra.mxu0 0
    %3978 = vmatprep.subr.bf16.mxu0 0
    %3979 = vmatpush2.bf16.msra.mxu0 0
    %3980 = vmatprep.subr.bf16.mxu0 0
    %3981 = vmatpush2.bf16.msra.mxu0 0
    %3982 = vmatprep.subr.bf16.mxu0 0
    %3983 = vmatpush2.bf16.msra.mxu0 0
    %3984 = vmatprep.subr.bf16.mxu0 0
    %3985 = vmatpush2.bf16.msra.mxu0 0
    %3986 = vmatprep.subr.bf16.mxu0 0
    %3987 = vmatpush2.bf16.msra.mxu0 0
    %3988 = vmatprep.subr.bf16.mxu0 0
    %3989 = vmatpush2.bf16.msra.mxu0 0
    %3990 = vmatprep.mubr.bf16.mxu0 0
    %3991 = vmatmul.mubr.bf16.gmra.mxu0 %v3956
    %v3992 = vpop.f32.mrf.mxu0
    %v3993 = vadd.f32 0.0, %v3992
    %v3994 = vpop.f32.mrf.mxu0
    %v3995 = vpop.f32.mrf.mxu0
    %v3996 = vpop.f32.mrf.mxu0
    %3997 = vdwg.mxu0
    %v3998 = vadd.f32 %v3115, %v3993
    %v3999 = vmul.f32 %v3998, 0.5
    %v4000 = vtanh.pop %v3999
    %v4001 = vadd.f32 %v4000, 1.0
    %v4002 = vmul.f32 %v4001, 0.5
    %v4003 = vtanh.pop %v3998
    %v4004 = vmul.f32 %v4002, %v3864
    %4006 = vrot.lane.b32.xlu0 %v4003, 32
    %v4007 = vpop.permute.xlu0 %4006
    %v4009 = vmul.f32 %v4002, %v4007
    %4011 = vrot.lane.b32.xlu0 %v4009, 32
    %v4012 = vpop.permute.xlu0 %4011
    %v4014 = vadd.f32 %v4004, %v4012
    %v4015 = vtanh.pop %v4014
    %4017 = vrot.lane.b32.xlu0 %v4015, 32
    %v4018 = vpop.permute.xlu0 %4017
    %v4020 = vmul.f32 %v4002, %v4018
    %4022 = vrot.lane.b32.xlu0 %v4020, 64
    %v4023 = vpop.permute.xlu0 %4022
    %4026 = vrot.lane.b32.xlu0 %v3950, 32
    %v4027 = vpop.permute.xlu0 %4026
    %v4029 = vsel %vm965, %v4023, %v4027
    %v4030 = vpack.c.bf16 %v4029, %v4029
    %v4032 = vsel %vm357, %v4030, 0
    %4034 = vmatprep.subr.bf16.mxu0 0
    %4035 = vmatpush1.bf16.msra.mxu0 0
    %4036 = vmatprep.subr.bf16.mxu0 0
    %4037 = vmatpush1.bf16.msra.mxu0 0
    %4038 = vmatprep.subr.bf16.mxu0 %v3268
    %4039 = vmatpush1.bf16.msra.mxu0 %v3267
    %4040 = vmatprep.subr.bf16.mxu0 %v3266
    %4041 = vmatpush1.bf16.msra.mxu0 %v3265
    %4042 = vmatprep.subr.bf16.mxu0 %v3264
    %4043 = vmatpush1.bf16.msra.mxu0 %v3263
    %4044 = vmatprep.subr.bf16.mxu0 %v3262
    %4045 = vmatpush1.bf16.msra.mxu0 %v3261
    %4046 = vmatprep.subr.bf16.mxu0 %v3260
    %4047 = vmatpush1.bf16.msra.mxu0 %v3259
    %4048 = vmatprep.subr.bf16.mxu0 %v3258
    %4049 = vmatpush1.bf16.msra.mxu0 %v3257
    %4050 = vmatprep.subr.bf16.mxu0 0
    %4051 = vmatpush2.bf16.msra.mxu0 0
    %4052 = vmatprep.subr.bf16.mxu0 0
    %4053 = vmatpush2.bf16.msra.mxu0 0
    %4054 = vmatprep.subr.bf16.mxu0 0
    %4055 = vmatpush2.bf16.msra.mxu0 0
    %4056 = vmatprep.subr.bf16.mxu0 0
    %4057 = vmatpush2.bf16.msra.mxu0 0
    %4058 = vmatprep.subr.bf16.mxu0 0
    %4059 = vmatpush2.bf16.msra.mxu0 0
    %4060 = vmatprep.subr.bf16.mxu0 0
    %4061 = vmatpush2.bf16.msra.mxu0 0
    %4062 = vmatprep.subr.bf16.mxu0 0
    %4063 = vmatpush2.bf16.msra.mxu0 0
    %4064 = vmatprep.subr.bf16.mxu0 0
    %4065 = vmatpush2.bf16.msra.mxu0 0
    %4066 = vmatprep.mubr.bf16.mxu0 0
    %4067 = vmatmul.mubr.bf16.gmra.mxu0 %v4032
    %v4068 = vpop.f32.mrf.mxu0
    %v4069 = vadd.f32 %v3214, %v4068
    %v4070 = vpop.f32.mrf.mxu0
    %v4071 = vadd.f32 %v3218, %v4070
    %v4072 = vpop.f32.mrf.mxu0
    %v4073 = vpop.f32.mrf.mxu0
    %4074 = vdwg.mxu0
    %v4075 = vmul.f32 %v4069, 0.5
    %v4076 = vmul.f32 %v4071, 0.5
    %v4077 = vtanh.pop %v4075
    %v4078 = vtanh.pop %v4076
    %v4079 = vadd.f32 %v4077, 1.0
    %v4080 = vadd.f32 %v4078, 1.0
    %v4081 = vmul.f32 %v4079, 0.5
    %v4082 = vmul.f32 %v4080, 0.5
    %v4083 = vtanh.pop %v4071
    %v4084 = vmul.f32 %v4081, %v3944
    %4086 = vrot.lane.b32.xlu0 %v4083, 64
    %v4087 = vpop.permute.xlu0 %4086
    %v4089 = vmul.f32 %v4081, %v4087
    %4091 = vrot.lane.b32.xlu0 %v4089, 64
    %v4092 = vpop.permute.xlu0 %4091
    %v4094 = vadd.f32 %v4084, %v4092
    %v4095 = vtanh.pop %v4094
    %4097 = vrot.lane.b32.xlu0 %v4095, 64
    %v4098 = vpop.permute.xlu0 %4097
    %v4100 = vmul.f32 %v4082, %v4098
    %v4101 = vpack.c.bf16 %v4020, %v4020
    %4103 = vrot.lane.b32.xlu0 %v4101, 64
    %v4104 = vpop.permute.xlu0 %4103
    %v4106 = vsel %vm965, %v4104, 0
    %4108 = vmatprep.subr.bf16.mxu0 0
    %4109 = vmatpush1.bf16.msra.mxu0 0
    %4110 = vmatprep.subr.bf16.mxu0 0
    %4111 = vmatpush1.bf16.msra.mxu0 0
    %4112 = vmatprep.subr.bf16.mxu0 0
    %4113 = vmatpush1.bf16.msra.mxu0 0
    %4114 = vmatprep.subr.bf16.mxu0 0
    %4115 = vmatpush1.bf16.msra.mxu0 0
    %4116 = vmatprep.subr.bf16.mxu0 0
    %4117 = vmatpush1.bf16.msra.mxu0 0
    %4118 = vmatprep.subr.bf16.mxu0 0
    %4119 = vmatpush1.bf16.msra.mxu0 0
    %4120 = vmatprep.subr.bf16.mxu0 0
    %4121 = vmatpush1.bf16.msra.mxu0 %v3135
    %4122 = vmatprep.subr.bf16.mxu0 0
    %4123 = vmatpush1.bf16.msra.mxu0 %v3134
    %4124 = vmatprep.subr.bf16.mxu0 0
    %4125 = vmatpush2.bf16.msra.mxu0 0
    %4126 = vmatprep.subr.bf16.mxu0 0
    %4127 = vmatpush2.bf16.msra.mxu0 0
    %4128 = vmatprep.subr.bf16.mxu0 0
    %4129 = vmatpush2.bf16.msra.mxu0 0
    %4130 = vmatprep.subr.bf16.mxu0 0
    %4131 = vmatpush2.bf16.msra.mxu0 0
    %4132 = vmatprep.subr.bf16.mxu0 0
    %4133 = vmatpush2.bf16.msra.mxu0 0
    %4134 = vmatprep.subr.bf16.mxu0 0
    %4135 = vmatpush2.bf16.msra.mxu0 0
    %4136 = vmatprep.subr.bf16.mxu0 0
    %4137 = vmatpush2.bf16.msra.mxu0 0
    %4138 = vmatprep.subr.bf16.mxu0 0
    %4139 = vmatpush2.bf16.msra.mxu0 0
    %4140 = vmatprep.mubr.bf16.mxu0 0
    %4141 = vmatmul.mubr.bf16.gmra.mxu0 %v4106
    %v4142 = vpop.f32.mrf.mxu0
    %v4143 = vadd.f32 0.0, %v4142
    %v4144 = vpop.f32.mrf.mxu0
    %v4145 = vpop.f32.mrf.mxu0
    %v4146 = vpop.f32.mrf.mxu0
    %4147 = vdwg.mxu0
    %v4148 = vadd.f32 %v3120, %v4143
    %v4149 = vmul.f32 %v4148, 0.5
    %v4150 = vtanh.pop %v4149
    %v4151 = vadd.f32 %v4150, 1.0
    %v4152 = vmul.f32 %v4151, 0.5
    %v4153 = vtanh.pop %v4148
    %v4154 = vmul.f32 %v4152, %v4014
    %4156 = vrot.lane.b32.xlu0 %v4153, 32
    %v4157 = vpop.permute.xlu0 %4156
    %v4159 = vmul.f32 %v4152, %v4157
    %4161 = vrot.lane.b32.xlu0 %v4159, 32
    %v4162 = vpop.permute.xlu0 %4161
    %v4164 = vadd.f32 %v4154, %v4162
    %v4165 = vtanh.pop %v4164
    %4167 = vrot.lane.b32.xlu0 %v4165, 32
    %v4168 = vpop.permute.xlu0 %4167
    %v4170 = vmul.f32 %v4152, %v4168
    %4172 = vrot.lane.b32.xlu0 %v4170, 64
    %v4173 = vpop.permute.xlu0 %4172
    %4176 = vrot.lane.b32.xlu0 %v4100, 32
    %v4177 = vpop.permute.xlu0 %4176
    %v4179 = vsel %vm965, %v4173, %v4177
    %v4180 = vpack.c.bf16 %v4179, %v4179
    %v4182 = vsel %vm357, %v4180, 0
    %4184 = vmatprep.subr.bf16.mxu0 0
    %4185 = vmatpush1.bf16.msra.mxu0 0
    %4186 = vmatprep.subr.bf16.mxu0 0
    %4187 = vmatpush1.bf16.msra.mxu0 0
    %4188 = vmatprep.subr.bf16.mxu0 %v3268
    %4189 = vmatpush1.bf16.msra.mxu0 %v3267
    %4190 = vmatprep.subr.bf16.mxu0 %v3266
    %4191 = vmatpush1.bf16.msra.mxu0 %v3265
    %4192 = vmatprep.subr.bf16.mxu0 %v3264
    %4193 = vmatpush1.bf16.msra.mxu0 %v3263
    %4194 = vmatprep.subr.bf16.mxu0 %v3262
    %4195 = vmatpush1.bf16.msra.mxu0 %v3261
    %4196 = vmatprep.subr.bf16.mxu0 %v3260
    %4197 = vmatpush1.bf16.msra.mxu0 %v3259
    %4198 = vmatprep.subr.bf16.mxu0 %v3258
    %4199 = vmatpush1.bf16.msra.mxu0 %v3257
    %4200 = vmatprep.subr.bf16.mxu0 0
    %4201 = vmatpush2.bf16.msra.mxu0 0
    %4202 = vmatprep.subr.bf16.mxu0 0
    %4203 = vmatpush2.bf16.msra.mxu0 0
    %4204 = vmatprep.subr.bf16.mxu0 0
    %4205 = vmatpush2.bf16.msra.mxu0 0
    %4206 = vmatprep.subr.bf16.mxu0 0
    %4207 = vmatpush2.bf16.msra.mxu0 0
    %4208 = vmatprep.subr.bf16.mxu0 0
    %4209 = vmatpush2.bf16.msra.mxu0 0
    %4210 = vmatprep.subr.bf16.mxu0 0
    %4211 = vmatpush2.bf16.msra.mxu0 0
    %4212 = vmatprep.subr.bf16.mxu0 0
    %4213 = vmatpush2.bf16.msra.mxu0 0
    %4214 = vmatprep.subr.bf16.mxu0 0
    %4215 = vmatpush2.bf16.msra.mxu0 0
    %4216 = vmatprep.mubr.bf16.mxu0 0
    %4217 = vmatmul.mubr.bf16.gmra.mxu0 %v4182
    %v4218 = vpop.f32.mrf.mxu0
    %v4219 = vadd.f32 %v3214, %v4218
    %v4220 = vpop.f32.mrf.mxu0
    %v4221 = vadd.f32 %v3218, %v4220
    %v4222 = vpop.f32.mrf.mxu0
    %v4223 = vpop.f32.mrf.mxu0
    %4224 = vdwg.mxu0
    %v4225 = vmul.f32 %v4219, 0.5
    %v4226 = vmul.f32 %v4221, 0.5
    %v4227 = vtanh.pop %v4225
    %v4228 = vtanh.pop %v4226
    %v4229 = vadd.f32 %v4227, 1.0
    %v4230 = vadd.f32 %v4228, 1.0
    %v4231 = vmul.f32 %v4229, 0.5
    %v4232 = vmul.f32 %v4230, 0.5
    %v4233 = vtanh.pop %v4221
    %v4234 = vmul.f32 %v4231, %v4094
    %4236 = vrot.lane.b32.xlu0 %v4233, 64
    %v4237 = vpop.permute.xlu0 %4236
    %v4239 = vmul.f32 %v4231, %v4237
    %4241 = vrot.lane.b32.xlu0 %v4239, 64
    %v4242 = vpop.permute.xlu0 %4241
    %v4244 = vadd.f32 %v4234, %v4242
    %v4245 = vtanh.pop %v4244
    %4247 = vrot.lane.b32.xlu0 %v4245, 64
    %v4248 = vpop.permute.xlu0 %4247
    %v4250 = vmul.f32 %v4232, %v4248
    %v4251 = vpack.c.bf16 %v4170, %v4170
    %4253 = vrot.lane.b32.xlu0 %v4251, 64
    %v4254 = vpop.permute.xlu0 %4253
    %v4256 = vsel %vm965, %v4254, 0
    %4258 = vmatprep.subr.bf16.mxu0 0
    %4259 = vmatpush1.bf16.msra.mxu0 0
    %4260 = vmatprep.subr.bf16.mxu0 0
    %4261 = vmatpush1.bf16.msra.mxu0 0
    %4262 = vmatprep.subr.bf16.mxu0 0
    %4263 = vmatpush1.bf16.msra.mxu0 0
    %4264 = vmatprep.subr.bf16.mxu0 0
    %4265 = vmatpush1.bf16.msra.mxu0 0
    %4266 = vmatprep.subr.bf16.mxu0 0
    %4267 = vmatpush1.bf16.msra.mxu0 0
    %4268 = vmatprep.subr.bf16.mxu0 0
    %4269 = vmatpush1.bf16.msra.mxu0 0
    %4270 = vmatprep.subr.bf16.mxu0 0
    %4271 = vmatpush1.bf16.msra.mxu0 %v3135
    %4272 = vmatprep.subr.bf16.mxu0 0
    %4273 = vmatpush1.bf16.msra.mxu0 %v3134
    %4274 = vmatprep.subr.bf16.mxu0 0
    %4275 = vmatpush2.bf16.msra.mxu0 0
    %4276 = vmatprep.subr.bf16.mxu0 0
    %4277 = vmatpush2.bf16.msra.mxu0 0
    %4278 = vmatprep.subr.bf16.mxu0 0
    %4279 = vmatpush2.bf16.msra.mxu0 0
    %4280 = vmatprep.subr.bf16.mxu0 0
    %4281 = vmatpush2.bf16.msra.mxu0 0
    %4282 = vmatprep.subr.bf16.mxu0 0
    %4283 = vmatpush2.bf16.msra.mxu0 0
    %4284 = vmatprep.subr.bf16.mxu0 0
    %4285 = vmatpush2.bf16.msra.mxu0 0
    %4286 = vmatprep.subr.bf16.mxu0 0
    %4287 = vmatpush2.bf16.msra.mxu0 0
    %4288 = vmatprep.subr.bf16.mxu0 0
    %4289 = vmatpush2.bf16.msra.mxu0 0
    %4290 = vmatprep.mubr.bf16.mxu0 0
    %4291 = vmatmul.mubr.bf16.gmra.mxu0 %v4256
    %v4292 = vpop.f32.mrf.mxu0
    %v4293 = vadd.f32 0.0, %v4292
    %v4294 = vpop.f32.mrf.mxu0
    %v4295 = vpop.f32.mrf.mxu0
    %v4296 = vpop.f32.mrf.mxu0
    %4297 = vdwg.mxu0
    %v4298 = vadd.f32 %v3123, %v4293
    %v4299 = vmul.f32 %v4298, 0.5
    %v4300 = vtanh.pop %v4299
    %v4301 = vadd.f32 %v4300, 1.0
    %v4302 = vmul.f32 %v4301, 0.5
    %v4303 = vtanh.pop %v4298
    %v4304 = vmul.f32 %v4302, %v4164
    %4306 = vrot.lane.b32.xlu0 %v4303, 32
    %v4307 = vpop.permute.xlu0 %4306
    %v4309 = vmul.f32 %v4302, %v4307
    %4311 = vrot.lane.b32.xlu0 %v4309, 32
    %v4312 = vpop.permute.xlu0 %4311
    %v4314 = vadd.f32 %v4304, %v4312
    %v4315 = vtanh.pop %v4314
    %4317 = vrot.lane.b32.xlu0 %v4315, 32
    %v4318 = vpop.permute.xlu0 %4317
    %v4320 = vmul.f32 %v4302, %v4318
    %4322 = vrot.lane.b32.xlu0 %v4320, 64
    %v4323 = vpop.permute.xlu0 %4322
    %4326 = vrot.lane.b32.xlu0 %v4250, 32
    %v4327 = vpop.permute.xlu0 %4326
    %v4329 = vsel %vm965, %v4323, %v4327
    %v4330 = vpack.c.bf16 %v4329, %v4329
    %v4332 = vsel %vm357, %v4330, 0
    %4334 = vmatprep.subr.bf16.mxu0 0
    %4335 = vmatpush1.bf16.msra.mxu0 0
    %4336 = vmatprep.subr.bf16.mxu0 0
    %4337 = vmatpush1.bf16.msra.mxu0 0
    %4338 = vmatprep.subr.bf16.mxu0 %v3268
    %4339 = vmatpush1.bf16.msra.mxu0 %v3267
    %4340 = vmatprep.subr.bf16.mxu0 %v3266
    %4341 = vmatpush1.bf16.msra.mxu0 %v3265
    %4342 = vmatprep.subr.bf16.mxu0 %v3264
    %4343 = vmatpush1.bf16.msra.mxu0 %v3263
    %4344 = vmatprep.subr.bf16.mxu0 %v3262
    %4345 = vmatpush1.bf16.msra.mxu0 %v3261
    %4346 = vmatprep.subr.bf16.mxu0 %v3260
    %4347 = vmatpush1.bf16.msra.mxu0 %v3259
    %4348 = vmatprep.subr.bf16.mxu0 %v3258
    %4349 = vmatpush1.bf16.msra.mxu0 %v3257
    %4350 = vmatprep.subr.bf16.mxu0 0
    %4351 = vmatpush2.bf16.msra.mxu0 0
    %4352 = vmatprep.subr.bf16.mxu0 0
    %4353 = vmatpush2.bf16.msra.mxu0 0
    %4354 = vmatprep.subr.bf16.mxu0 0
    %4355 = vmatpush2.bf16.msra.mxu0 0
    %4356 = vmatprep.subr.bf16.mxu0 0
    %4357 = vmatpush2.bf16.msra.mxu0 0
    %4358 = vmatprep.subr.bf16.mxu0 0
    %4359 = vmatpush2.bf16.msra.mxu0 0
    %4360 = vmatprep.subr.bf16.mxu0 0
    %4361 = vmatpush2.bf16.msra.mxu0 0
    %4362 = vmatprep.subr.bf16.mxu0 0
    %4363 = vmatpush2.bf16.msra.mxu0 0
    %4364 = vmatprep.subr.bf16.mxu0 0
    %4365 = vmatpush2.bf16.msra.mxu0 0
    %4366 = vmatprep.mubr.bf16.mxu0 0
    %4367 = vmatmul.mubr.bf16.gmra.mxu0 %v4332
    %v4368 = vpop.f32.mrf.mxu0
    %v4369 = vadd.f32 %v3214, %v4368
    %v4370 = vpop.f32.mrf.mxu0
    %v4371 = vadd.f32 %v3218, %v4370
    %v4372 = vpop.f32.mrf.mxu0
    %v4373 = vpop.f32.mrf.mxu0
    %4374 = vdwg.mxu0
    %v4375 = vmul.f32 %v4369, 0.5
    %v4376 = vmul.f32 %v4371, 0.5
    %v4377 = vtanh.pop %v4375
    %v4378 = vtanh.pop %v4376
    %v4379 = vadd.f32 %v4377, 1.0
    %v4380 = vadd.f32 %v4378, 1.0
    %v4381 = vmul.f32 %v4379, 0.5
    %v4382 = vmul.f32 %v4380, 0.5
    %v4383 = vtanh.pop %v4371
    %v4384 = vmul.f32 %v4381, %v4244
    %4386 = vrot.lane.b32.xlu0 %v4383, 64
    %v4387 = vpop.permute.xlu0 %4386
    %v4389 = vmul.f32 %v4381, %v4387
    %4391 = vrot.lane.b32.xlu0 %v4389, 64
    %v4392 = vpop.permute.xlu0 %4391
    %v4394 = vadd.f32 %v4384, %v4392
    %v4395 = vtanh.pop %v4394
    %4397 = vrot.lane.b32.xlu0 %v4395, 64
    %v4398 = vpop.permute.xlu0 %4397
    %v4400 = vmul.f32 %v4382, %v4398
    %v4401 = vpack.c.bf16 %v4400, %v4400
    %v4402 = vld [vmem:[%s75] sm:$0xf]
    %v4403 = vld [vmem:[%s75 + $0x4] sm:$0xf]
    %v4404 = vld [vmem:[%s75 + $0x8] sm:$0xf]
    %v4405 = vld [vmem:[%s75 + $0xc] sm:$0xf]
    %v4406 = vld [vmem:[%s75 + $0x10] sm:$0xf]
    %v4407 = vld [vmem:[%s75 + $0x14] sm:$0xf]
    %v4408 = vld [vmem:[%s75 + $0x18] sm:$0xf]
    %v4409 = vld [vmem:[%s75 + $0x1c] sm:$0xf]
    %v4410 = vld [vmem:[%s77] sm:$0x1]
    %v4412 = vlaneseq
    %v4413 = vshrl.u32 %v4412, 7
    %v4414 = vsub.s32 0, %v4413
    %v4415 = vrot.slane %v4410, %v4414
    %v4425 = vunpack.c.l.b16 %v4402
    %v4426 = vunpack.c.l.b16 %v4403
    %v4427 = vunpack.c.l.b16 %v4404
    %v4428 = vunpack.c.l.b16 %v4405
    %v4429 = vunpack.c.l.b16 %v4406
    %v4430 = vunpack.c.l.b16 %v4407
    %v4431 = vunpack.c.l.b16 %v4408
    %v4432 = vunpack.c.l.b16 %v4409
    %v4433 = vpack.c.b16 %v4426, %v4425
    %v4434 = vpack.c.b16 %v4428, %v4427
    %v4435 = vpack.c.b16 %v4430, %v4429
    %v4436 = vpack.c.b16 %v4432, %v4431
    %vm4441 = vcmask 523264
    %v4443 = vsel %vm4441, %v4401, 0
    %4445 = vmatprep.subr.bf16.mxu0 0
    %4446 = vmatpush1.bf16.msra.mxu0 0
    %4447 = vmatprep.subr.bf16.mxu0 0
    %4448 = vmatpush1.bf16.msra.mxu0 0
    %4449 = vmatprep.subr.bf16.mxu0 0
    %4450 = vmatpush1.bf16.msra.mxu0 0
    %4451 = vmatprep.subr.bf16.mxu0 0
    %4452 = vmatpush1.bf16.msra.mxu0 0
    %4453 = vmatprep.subr.bf16.mxu0 0
    %4454 = vmatpush1.bf16.msra.mxu0 %v4436
    %4455 = vmatprep.subr.bf16.mxu0 0
    %4456 = vmatpush1.bf16.msra.mxu0 %v4435
    %4457 = vmatprep.subr.bf16.mxu0 0
    %4458 = vmatpush1.bf16.msra.mxu0 %v4434
    %4459 = vmatprep.subr.bf16.mxu0 0
    %4460 = vmatpush1.bf16.msra.mxu0 %v4433
    %4461 = vmatprep.subr.bf16.mxu0 0
    %4462 = vmatpush2.bf16.msra.mxu0 0
    %4463 = vmatprep.subr.bf16.mxu0 0
    %4464 = vmatpush2.bf16.msra.mxu0 0
    %4465 = vmatprep.subr.bf16.mxu0 0
    %4466 = vmatpush2.bf16.msra.mxu0 0
    %4467 = vmatprep.subr.bf16.mxu0 0
    %4468 = vmatpush2.bf16.msra.mxu0 0
    %4469 = vmatprep.subr.bf16.mxu0 0
    %4470 = vmatpush2.bf16.msra.mxu0 0
    %4471 = vmatprep.subr.bf16.mxu0 0
    %4472 = vmatpush2.bf16.msra.mxu0 0
    %4473 = vmatprep.subr.bf16.mxu0 0
    %4474 = vmatpush2.bf16.msra.mxu0 0
    %4475 = vmatprep.subr.bf16.mxu0 0
    %4476 = vmatpush2.bf16.msra.mxu0 0
    %4477 = vmatprep.mubr.bf16.mxu0 0
    %4478 = vmatmul.mubr.bf16.gmra.mxu0 %v4443
    %v4479 = vpop.f32.mrf.mxu0
    %v4480 = vadd.f32 %v4415, %v4479
    %v4481 = vpop.f32.mrf.mxu0
    %v4482 = vpop.f32.mrf.mxu0
    %v4483 = vpop.f32.mrf.mxu0
    %4484 = vdwg.mxu0
    %v4485 = vmul.f32 %v4480, 0.5
    %v4486 = vtanh.pop %v4485
    %v4487 = vadd.f32 %v4486, 1.0
    %v4488 = vmul.f32 %v4487, 0.5
    %4489 = vst [vmem:[#allocation2] sm:$0xff] %v4488
    // Predicated region
    $region158: #{tpu_custom_call.1} parent=1 // pred_check
      _
    $region159: #{tpu_custom_call.1} parent=1 // pred_check_branch
      %4491 = sbr.rel (0) target = $region161
    $region160: #{tpu_custom_call.1} parent=1 // pred_region
      %s4493 = ssub.s32 128, 128
      %4494 = vsyncadd [#allocation3], %s4493
      %s4496 = sshll.u32 [#allocation2], 4
      %s4497 = int_to_ptr.vmem [resolvable:$true] %s4496
      %4499 = dma.vmem_to_hbm [thread:$0]  %s4497, 128, %s79, [#allocation3]
    $region161: #{tpu_custom_call.1} parent=1 // pred_fallthru
      _
    // Predicated region
    $region162: #{tpu_custom_call.1} parent=1 // pred_check
      _
    $region163: #{tpu_custom_call.1} parent=1 // pred_check_branch
      %4501 = sbr.rel (0) target = $region165
    $region164: #{tpu_custom_call.1} parent=1 // pred_region
      %4502 = dma.done [#allocation3], 128
    $region165: #{tpu_custom_call.1} parent=1 // pred_fallthru
      _
    %4503 = vsyncpa [#allocation3], 1

</llo_original>
